<compile_context>
chip_gen: v5e
topology: v5e:2x2
jax: 0.10.0
libtpu: 0.0.40
codegen_flags: <defaults>
</compile_context>

<pallas_src>
import functools
import math

import jax
import jax.numpy as jnp
from jax.experimental import pallas as pl
from jax.experimental.pallas import tpu as pltpu

# ---------------- scaled-down config (xlm-roberta-large analogue) ----------------
HIDDEN = 128          # real model: 1024
NUM_HEADS = 2         # real model: 16
HEAD_DIM = HIDDEN // NUM_HEADS
FFN = 256             # real model: 4096
NUM_LAYERS = 2        # real model: 24
VOCAB = 256
PAD_IDX = 1
SEQ = 16              # actual input sequence length
MAX_SEQ = 64          # real model pads to 512
LN_EPS = 1e-5


# ------------------------------- kernel helpers -----------------------------------
def _ln(x, g, b):
    """LayerNorm over the lane (hidden) axis, f32 math; g/b are (1, H)."""
    mu = jnp.mean(x, axis=-1, keepdims=True)
    var = jnp.mean((x - mu) ** 2, axis=-1, keepdims=True)
    return (x - mu) * jax.lax.rsqrt(var + LN_EPS) * g + b


# ------------------------------- fused Pallas kernel -------------------------------
def fused_encoder_kernel(x_ref, bias_ref,
                         embg_ref, embb_ref,
                         wq_ref, bq_ref, wk_ref, bk_ref, wv_ref, bv_ref,
                         wo_ref, bo_ref, ln1g_ref, ln1b_ref,
                         w1_ref, b1_ref, w2_ref, b2_ref, ln2g_ref, ln2b_ref,
                         hw_ref, hb_ref,
                         out_ref):
    x = x_ref[0]                       # (S, H) f32 raw embeddings for this batch elem
    abias = bias_ref[0]                # (1, S) additive attention mask
    S = x.shape[0]
    scale = 1.0 / math.sqrt(HEAD_DIM)

    # Per-head lane masks (hoisted out of the layer loop).  Masked full-width
    # matmuls replace 64-lane slices / lane concatenation of the old per-head loop.
    lane = jax.lax.broadcasted_iota(jnp.int32, (1, HIDDEN), 1)
    hmask = [((lane >= hd * HEAD_DIM) & (lane < (hd + 1) * HEAD_DIM)).astype(jnp.float32)
             for hd in range(NUM_HEADS)]

    # embedding LayerNorm
    h = _ln(x, embg_ref[...], embb_ref[...])

    for l in range(NUM_LAYERS):        # static unroll; all weights resident in VMEM
        h_bf = h.astype(jnp.bfloat16)
        q = jnp.dot(h_bf, wq_ref[l], preferred_element_type=jnp.float32) + bq_ref[l]
        k = jnp.dot(h_bf, wk_ref[l], preferred_element_type=jnp.float32) + bk_ref[l]
        v = jnp.dot(h_bf, wv_ref[l], preferred_element_type=jnp.float32) + bv_ref[l]

        kt = k.T                                              # (H, S)
        ctx = jnp.zeros((S, HIDDEN), jnp.float32)
        for hd in range(NUM_HEADS):                           # static loop over heads
            qm = q * hmask[hd]                                # zero other head's lanes
            vm = v * hmask[hd]
            s = jnp.dot(qm, kt, preferred_element_type=jnp.float32) * scale + abias
            s = s - jnp.max(s, axis=-1, keepdims=True)
            p = jnp.exp(s)
            p = p * pl.reciprocal(jnp.sum(p, axis=-1, keepdims=True), approx=True)
            # contribution lands only in head hd's lanes (vm is masked) -> implicit concat
            ctx = ctx + jnp.dot(p, vm, preferred_element_type=jnp.float32)

        attn = jnp.dot(ctx.astype(jnp.bfloat16), wo_ref[l],
                       preferred_element_type=jnp.float32) + bo_ref[l]
        h1 = _ln(h + attn, ln1g_ref[l], ln1b_ref[l])

        ff = jnp.dot(h1.astype(jnp.bfloat16), w1_ref[l],
                     preferred_element_type=jnp.float32) + b1_ref[l]
        ff = jax.nn.gelu(ff, approximate=True)
        ff = jnp.dot(ff.astype(jnp.bfloat16), w2_ref[l],
                     preferred_element_type=jnp.float32) + b2_ref[l]
        h = _ln(h1 + ff, ln2g_ref[l], ln2b_ref[l])

    # head: Dropout (identity at inference) -> Linear(H, 1), written lane-dense as (1, S)
    y = jnp.dot(hw_ref[...], h.T, preferred_element_type=jnp.float32)   # (1, S)
    out_ref[0] = (y + hb_ref[...]).astype(out_ref.dtype)


# ------------------------------- Pallas wrapper ------------------------------------
_WKEYS = ('emb_ln_g', 'emb_ln_b',
          'wq', 'bq', 'wk', 'bk', 'wv', 'bv', 'wo', 'bo',
          'ln1_g', 'ln1_b', 'w1', 'b1', 'w2', 'b2', 'ln2_g', 'ln2_b',
          'head_w', 'head_b')


def _const_map(ndim, b):
    return (0,) * ndim


def fused_forward(emb, attn_bias, params):
    """Run embedding-LN + all encoder layers + head in one kernel.  Returns (B, S)."""
    B, S, H = emb.shape
    weights = [params[k] for k in _WKEYS]

    in_specs = [
        pl.BlockSpec((1, S, H), lambda b: (b, 0, 0)),
        pl.BlockSpec((1, 1, S), lambda b: (b, 0, 0)),
    ]
    for w in weights:
        in_specs.append(pl.BlockSpec(w.shape, functools.partial(_const_map, w.ndim)))

    out = pl.pallas_call(
        fused_encoder_kernel,
        grid=(B,),
        in_specs=in_specs,
        out_specs=pl.BlockSpec((1, 1, S), lambda b: (b, 0, 0)),
        out_shape=jax.ShapeDtypeStruct((B, 1, S), jnp.float32),
        compiler_params=pltpu.CompilerParams(dimension_semantics=("parallel",)),
    )(emb, attn_bias, *weights)
    return out[:, 0, :]


# ------------------------------- parameter init ------------------------------------
def init_params(key):
    std = 0.02
    keys = iter(jax.random.split(key, 64))

    def nrm(shape, dtype=jnp.float32):
        return (std * jax.random.normal(next(keys), shape)).astype(dtype)

    L = NUM_LAYERS
    params = {
        'word_emb': nrm((VOCAB, HIDDEN)),
        'pos_emb': nrm((MAX_SEQ + PAD_IDX + 2, HIDDEN)),
        'type_emb': nrm((1, HIDDEN)),
        'emb_ln_g': jnp.ones((1, HIDDEN), jnp.float32),
        'emb_ln_b': jnp.zeros((1, HIDDEN), jnp.float32),
        # head Linear(H, 1) stored as a lane-dense row vector
        'head_w': nrm((1, HIDDEN)),
        'head_b': jnp.zeros((1, 1), jnp.float32),
        # per-layer weights stacked along a leading layer axis; matmul weights in bf16
        'wq': nrm((L, HIDDEN, HIDDEN), jnp.bfloat16),
        'bq': jnp.zeros((L, 1, HIDDEN), jnp.float32),
        'wk': nrm((L, HIDDEN, HIDDEN), jnp.bfloat16),
        'bk': jnp.zeros((L, 1, HIDDEN), jnp.float32),
        'wv': nrm((L, HIDDEN, HIDDEN), jnp.bfloat16),
        'bv': jnp.zeros((L, 1, HIDDEN), jnp.float32),
        'wo': nrm((L, HIDDEN, HIDDEN), jnp.bfloat16),
        'bo': jnp.zeros((L, 1, HIDDEN), jnp.float32),
        'ln1_g': jnp.ones((L, 1, HIDDEN), jnp.float32),
        'ln1_b': jnp.zeros((L, 1, HIDDEN), jnp.float32),
        'w1': nrm((L, HIDDEN, FFN), jnp.bfloat16),
        'b1': jnp.zeros((L, 1, FFN), jnp.float32),
        'w2': nrm((L, FFN, HIDDEN), jnp.bfloat16),
        'b2': jnp.zeros((L, 1, HIDDEN), jnp.float32),
        'ln2_g': jnp.ones((L, 1, HIDDEN), jnp.float32),
        'ln2_b': jnp.zeros((L, 1, HIDDEN), jnp.float32),
    }
    return params


# ---------------------------------- forward -----------------------------------------
@jax.jit
def roberta_denoiser_forward(params, input_ids, attention_mask):
    B, S = input_ids.shape
    mask_f = attention_mask.astype(jnp.float32)

    # embeddings (gathers = glue in plain JAX)
    word = jnp.take(params['word_emb'], input_ids, axis=0)
    pos_mask = (input_ids != PAD_IDX).astype(jnp.int32)
    pos_ids = jnp.cumsum(pos_mask, axis=1) * pos_mask + PAD_IDX
    pos = jnp.take(params['pos_emb'], pos_ids, axis=0)
    tok = jnp.take(params['type_emb'], jnp.zeros_like(input_ids), axis=0)
    emb = (word + pos + tok).astype(jnp.float32)

    attn_bias = ((1.0 - mask_f) * -1e9).reshape(B, 1, S).astype(jnp.float32)

    # single fused Pallas kernel: emb-LN -> NUM_LAYERS encoder layers -> head
    logits_real = fused_forward(emb, attn_bias, params)              # (B, S)

    # output rows S..MAX_SEQ of the padded hidden state are zero -> Linear(0)+b = bias
    pad_rows = jnp.broadcast_to(params['head_b'][0, 0], (B, MAX_SEQ - S))
    return jnp.concatenate([logits_real, pad_rows.astype(jnp.float32)], axis=1)  # (B, MAX_SEQ)


# ------------------------------------ main -------------------------------------------
if __name__ == "__main__":
    key = jax.random.PRNGKey(0)
    k_param, k_ids = jax.random.split(key)

    params = init_params(k_param)

    B = 2
    input_ids = jax.random.randint(k_ids, (B, SEQ), 2, VOCAB, dtype=jnp.int32)
    attention_mask = jnp.ones((B, SEQ), jnp.int32)

    out = roberta_denoiser_forward(params, input_ids, attention_mask)
    out = jax.block_until_ready(out)
    assert out.shape == (B, MAX_SEQ), out.shape
    assert bool(jnp.all(jnp.isfinite(out)))
    print("KERNEL_OK")
</pallas_src>

<mosaic_0001>
module attributes {stable_mosaic.version = 11 : i64} {
  func.func @fused_encoder_kernel(%arg0: i32, %arg1: memref<1x16x128xf32, #tpu.memory_space<vmem>>, %arg2: memref<1x1x16xf32, #tpu.memory_space<vmem>>, %arg3: memref<1x128xf32, #tpu.memory_space<vmem>>, %arg4: memref<1x128xf32, #tpu.memory_space<vmem>>, %arg5: memref<2x128x128xbf16, #tpu.memory_space<vmem>>, %arg6: memref<2x1x128xf32, #tpu.memory_space<vmem>>, %arg7: memref<2x128x128xbf16, #tpu.memory_space<vmem>>, %arg8: memref<2x1x128xf32, #tpu.memory_space<vmem>>, %arg9: memref<2x128x128xbf16, #tpu.memory_space<vmem>>, %arg10: memref<2x1x128xf32, #tpu.memory_space<vmem>>, %arg11: memref<2x128x128xbf16, #tpu.memory_space<vmem>>, %arg12: memref<2x1x128xf32, #tpu.memory_space<vmem>>, %arg13: memref<2x1x128xf32, #tpu.memory_space<vmem>>, %arg14: memref<2x1x128xf32, #tpu.memory_space<vmem>>, %arg15: memref<2x128x256xbf16, #tpu.memory_space<vmem>>, %arg16: memref<2x1x256xf32, #tpu.memory_space<vmem>>, %arg17: memref<2x256x128xbf16, #tpu.memory_space<vmem>>, %arg18: memref<2x1x128xf32, #tpu.memory_space<vmem>>, %arg19: memref<2x1x128xf32, #tpu.memory_space<vmem>>, %arg20: memref<2x1x128xf32, #tpu.memory_space<vmem>>, %arg21: memref<1x128xf32, #tpu.memory_space<vmem>>, %arg22: memref<1x1xf32, #tpu.memory_space<vmem>>, %arg23: memref<1x1x16xf32, #tpu.memory_space<vmem>>) attributes {dimension_semantics = [#tpu.dimension_semantics<parallel>], iteration_bounds = array<i64: 2>, scalar_prefetch = 0 : i64, scratch_operands = 0 : i64, tpu.core_type = #tpu.core_type<tc>, window_params = [{transform_indices = @transform_0, window_bounds = array<i64: 1, 16, 128>}, {transform_indices = @transform_1, window_bounds = array<i64: 1, 1, 16>}, {pipeline_mode = #tpu.pipeline_mode<synchronous>, transform_indices = @transform_2, window_bounds = array<i64: 1, 128>}, {pipeline_mode = #tpu.pipeline_mode<synchronous>, transform_indices = @transform_3, window_bounds = array<i64: 1, 128>}, {pipeline_mode = #tpu.pipeline_mode<synchronous>, transform_indices = @transform_4, window_bounds = array<i64: 2, 128, 128>}, {pipeline_mode = #tpu.pipeline_mode<synchronous>, transform_indices = @transform_5, window_bounds = array<i64: 2, 1, 128>}, {pipeline_mode = #tpu.pipeline_mode<synchronous>, transform_indices = @transform_6, window_bounds = array<i64: 2, 128, 128>}, {pipeline_mode = #tpu.pipeline_mode<synchronous>, transform_indices = @transform_7, window_bounds = array<i64: 2, 1, 128>}, {pipeline_mode = #tpu.pipeline_mode<synchronous>, transform_indices = @transform_8, window_bounds = array<i64: 2, 128, 128>}, {pipeline_mode = #tpu.pipeline_mode<synchronous>, transform_indices = @transform_9, window_bounds = array<i64: 2, 1, 128>}, {pipeline_mode = #tpu.pipeline_mode<synchronous>, transform_indices = @transform_10, window_bounds = array<i64: 2, 128, 128>}, {pipeline_mode = #tpu.pipeline_mode<synchronous>, transform_indices = @transform_11, window_bounds = array<i64: 2, 1, 128>}, {pipeline_mode = #tpu.pipeline_mode<synchronous>, transform_indices = @transform_12, window_bounds = array<i64: 2, 1, 128>}, {pipeline_mode = #tpu.pipeline_mode<synchronous>, transform_indices = @transform_13, window_bounds = array<i64: 2, 1, 128>}, {pipeline_mode = #tpu.pipeline_mode<synchronous>, transform_indices = @transform_14, window_bounds = array<i64: 2, 128, 256>}, {pipeline_mode = #tpu.pipeline_mode<synchronous>, transform_indices = @transform_15, window_bounds = array<i64: 2, 1, 256>}, {pipeline_mode = #tpu.pipeline_mode<synchronous>, transform_indices = @transform_16, window_bounds = array<i64: 2, 256, 128>}, {pipeline_mode = #tpu.pipeline_mode<synchronous>, transform_indices = @transform_17, window_bounds = array<i64: 2, 1, 128>}, {pipeline_mode = #tpu.pipeline_mode<synchronous>, transform_indices = @transform_18, window_bounds = array<i64: 2, 1, 128>}, {pipeline_mode = #tpu.pipeline_mode<synchronous>, transform_indices = @transform_19, window_bounds = array<i64: 2, 1, 128>}, {pipeline_mode = #tpu.pipeline_mode<synchronous>, transform_indices = @transform_20, window_bounds = array<i64: 1, 128>}, {pipeline_mode = #tpu.pipeline_mode<synchronous>, transform_indices = @transform_21, window_bounds = array<i64: 1, 1>}, {transform_indices = @transform_22, window_bounds = array<i64: 1, 1, 16>}]} {
    %c0 = arith.constant 0 : index
    %c0_0 = arith.constant 0 : index
    %c0_1 = arith.constant 0 : index
    %0 = vector.load %arg1[%c0, %c0_0, %c0_1] : memref<1x16x128xf32, #tpu.memory_space<vmem>>, vector<1x16x128xf32>
    %1 = vector.shape_cast %0 : vector<1x16x128xf32> to vector<16x128xf32>
    %c0_2 = arith.constant 0 : index
    %c0_3 = arith.constant 0 : index
    %c0_4 = arith.constant 0 : index
    %2 = vector.load %arg2[%c0_2, %c0_3, %c0_4] : memref<1x1x16xf32, #tpu.memory_space<vmem>>, vector<1x1x16xf32>
    %3 = vector.shape_cast %2 : vector<1x1x16xf32> to vector<1x16xf32>
    %4 = tpu.iota {dimensions = array<i32: 1>} : vector<1x128xi32>
    %c0_i32 = arith.constant 0 : i32
    %5 = vector.broadcast %c0_i32 : i32 to vector<1x128xi32>
    %6 = arith.cmpi sge, %4, %5 : vector<1x128xi32>
    %c64_i32 = arith.constant 64 : i32
    %7 = vector.broadcast %c64_i32 : i32 to vector<1x128xi32>
    %8 = arith.cmpi slt, %4, %7 : vector<1x128xi32>
    %9 = arith.andi %6, %8 : vector<1x128xi1>
    %10 = arith.extui %9 : vector<1x128xi1> to vector<1x128xi32>
    %11 = arith.sitofp %10 : vector<1x128xi32> to vector<1x128xf32>
    %c64_i32_5 = arith.constant 64 : i32
    %12 = vector.broadcast %c64_i32_5 : i32 to vector<1x128xi32>
    %13 = arith.cmpi sge, %4, %12 : vector<1x128xi32>
    %c128_i32 = arith.constant 128 : i32
    %14 = vector.broadcast %c128_i32 : i32 to vector<1x128xi32>
    %15 = arith.cmpi slt, %4, %14 : vector<1x128xi32>
    %16 = arith.andi %13, %15 : vector<1x128xi1>
    %17 = arith.extui %16 : vector<1x128xi1> to vector<1x128xi32>
    %18 = arith.sitofp %17 : vector<1x128xi32> to vector<1x128xf32>
    %c0_6 = arith.constant 0 : index
    %c0_7 = arith.constant 0 : index
    %19 = vector.load %arg3[%c0_6, %c0_7] : memref<1x128xf32, #tpu.memory_space<vmem>>, vector<1x128xf32>
    %c0_8 = arith.constant 0 : index
    %c0_9 = arith.constant 0 : index
    %20 = vector.load %arg4[%c0_8, %c0_9] : memref<1x128xf32, #tpu.memory_space<vmem>>, vector<1x128xf32>
    %cst = arith.constant dense<0.000000e+00> : vector<16xf32>
    %21 = vector.multi_reduction <add>, %1, %cst [1] : vector<16x128xf32> to vector<16xf32>
    %22 = vector.shape_cast %21 : vector<16xf32> to vector<16x1xf32>
    %cst_10 = arith.constant 1.280000e+02 : f32
    %23 = vector.broadcast %cst_10 : f32 to vector<16x1xf32>
    %24 = arith.divf %22, %23 : vector<16x1xf32>
    %25 = vector.broadcast %24 : vector<16x1xf32> to vector<16x128xf32>
    %26 = arith.subf %1, %25 : vector<16x128xf32>
    %27 = arith.mulf %26, %26 : vector<16x128xf32>
    %cst_11 = arith.constant dense<0.000000e+00> : vector<16xf32>
    %28 = vector.multi_reduction <add>, %27, %cst_11 [1] : vector<16x128xf32> to vector<16xf32>
    %29 = vector.shape_cast %28 : vector<16xf32> to vector<16x1xf32>
    %cst_12 = arith.constant 1.280000e+02 : f32
    %30 = vector.broadcast %cst_12 : f32 to vector<16x1xf32>
    %31 = arith.divf %29, %30 : vector<16x1xf32>
    %32 = vector.broadcast %24 : vector<16x1xf32> to vector<16x128xf32>
    %33 = arith.subf %1, %32 : vector<16x128xf32>
    %cst_13 = arith.constant 9.99999974E-6 : f32
    %34 = vector.broadcast %cst_13 : f32 to vector<16x1xf32>
    %35 = arith.addf %31, %34 : vector<16x1xf32>
    %36 = math.rsqrt %35 : vector<16x1xf32>
    %37 = vector.broadcast %36 : vector<16x1xf32> to vector<16x128xf32>
    %38 = arith.mulf %33, %37 : vector<16x128xf32>
    %39 = vector.broadcast %19 : vector<1x128xf32> to vector<16x128xf32>
    %40 = arith.mulf %38, %39 : vector<16x128xf32>
    %41 = vector.broadcast %20 : vector<1x128xf32> to vector<16x128xf32>
    %42 = arith.addf %40, %41 : vector<16x128xf32>
    %43 = arith.truncf %42 : vector<16x128xf32> to vector<16x128xbf16>
    %c0_14 = arith.constant 0 : index
    %c0_15 = arith.constant 0 : index
    %c0_16 = arith.constant 0 : index
    %44 = vector.load %arg5[%c0_14, %c0_15, %c0_16] : memref<2x128x128xbf16, #tpu.memory_space<vmem>>, vector<1x128x128xbf16>
    %45 = vector.shape_cast %44 : vector<1x128x128xbf16> to vector<128x128xbf16>
    %cst_17 = arith.constant dense<0.000000e+00> : vector<16x128xf32>
    %46 = tpu.matmul %43, %45, %cst_17 {dimension_numbers = #tpu.dot_dimension_numbers<[1], [0], [0], [1], [0, 0, 1, 1], [], []>} : vector<16x128xbf16>, vector<128x128xbf16>, vector<16x128xf32> -> vector<16x128xf32>
    %c0_18 = arith.constant 0 : index
    %c0_19 = arith.constant 0 : index
    %c0_20 = arith.constant 0 : index
    %47 = vector.load %arg6[%c0_18, %c0_19, %c0_20] : memref<2x1x128xf32, #tpu.memory_space<vmem>>, vector<1x1x128xf32>
    %48 = vector.shape_cast %47 : vector<1x1x128xf32> to vector<1x128xf32>
    %49 = vector.broadcast %48 : vector<1x128xf32> to vector<16x128xf32>
    %50 = arith.addf %46, %49 : vector<16x128xf32>
    %c0_21 = arith.constant 0 : index
    %c0_22 = arith.constant 0 : index
    %c0_23 = arith.constant 0 : index
    %51 = vector.load %arg7[%c0_21, %c0_22, %c0_23] : memref<2x128x128xbf16, #tpu.memory_space<vmem>>, vector<1x128x128xbf16>
    %52 = vector.shape_cast %51 : vector<1x128x128xbf16> to vector<128x128xbf16>
    %cst_24 = arith.constant dense<0.000000e+00> : vector<16x128xf32>
    %53 = tpu.matmul %43, %52, %cst_24 {dimension_numbers = #tpu.dot_dimension_numbers<[1], [0], [0], [1], [0, 0, 1, 1], [], []>} : vector<16x128xbf16>, vector<128x128xbf16>, vector<16x128xf32> -> vector<16x128xf32>
    %c0_25 = arith.constant 0 : index
    %c0_26 = arith.constant 0 : index
    %c0_27 = arith.constant 0 : index
    %54 = vector.load %arg8[%c0_25, %c0_26, %c0_27] : memref<2x1x128xf32, #tpu.memory_space<vmem>>, vector<1x1x128xf32>
    %55 = vector.shape_cast %54 : vector<1x1x128xf32> to vector<1x128xf32>
    %56 = vector.broadcast %55 : vector<1x128xf32> to vector<16x128xf32>
    %57 = arith.addf %53, %56 : vector<16x128xf32>
    %c0_28 = arith.constant 0 : index
    %c0_29 = arith.constant 0 : index
    %c0_30 = arith.constant 0 : index
    %58 = vector.load %arg9[%c0_28, %c0_29, %c0_30] : memref<2x128x128xbf16, #tpu.memory_space<vmem>>, vector<1x128x128xbf16>
    %59 = vector.shape_cast %58 : vector<1x128x128xbf16> to vector<128x128xbf16>
    %cst_31 = arith.constant dense<0.000000e+00> : vector<16x128xf32>
    %60 = tpu.matmul %43, %59, %cst_31 {dimension_numbers = #tpu.dot_dimension_numbers<[1], [0], [0], [1], [0, 0, 1, 1], [], []>} : vector<16x128xbf16>, vector<128x128xbf16>, vector<16x128xf32> -> vector<16x128xf32>
    %c0_32 = arith.constant 0 : index
    %c0_33 = arith.constant 0 : index
    %c0_34 = arith.constant 0 : index
    %61 = vector.load %arg10[%c0_32, %c0_33, %c0_34] : memref<2x1x128xf32, #tpu.memory_space<vmem>>, vector<1x1x128xf32>
    %62 = vector.shape_cast %61 : vector<1x1x128xf32> to vector<1x128xf32>
    %63 = vector.broadcast %62 : vector<1x128xf32> to vector<16x128xf32>
    %64 = arith.addf %60, %63 : vector<16x128xf32>
    %65 = tpu.transpose %57, [1, 0] : vector<16x128xf32> -> vector<128x16xf32>
    %cst_35 = arith.constant 0.000000e+00 : f32
    %66 = vector.broadcast %cst_35 : f32 to vector<16x128xf32>
    %67 = vector.broadcast %11 : vector<1x128xf32> to vector<16x128xf32>
    %68 = arith.mulf %50, %67 : vector<16x128xf32>
    %69 = vector.broadcast %11 : vector<1x128xf32> to vector<16x128xf32>
    %70 = arith.mulf %64, %69 : vector<16x128xf32>
    %cst_36 = arith.constant dense<0.000000e+00> : vector<16x16xf32>
    %71 = tpu.matmul %68, %65, %cst_36 {dimension_numbers = #tpu.dot_dimension_numbers<[1], [0], [0], [1], [0, 0, 1, 1], [], []>} : vector<16x128xf32>, vector<128x16xf32>, vector<16x16xf32> -> vector<16x16xf32>
    %cst_37 = arith.constant 1.250000e-01 : f32
    %72 = vector.broadcast %cst_37 : f32 to vector<16x16xf32>
    %73 = arith.mulf %71, %72 : vector<16x16xf32>
    %74 = vector.broadcast %3 : vector<1x16xf32> to vector<16x16xf32>
    %75 = arith.addf %73, %74 : vector<16x16xf32>
    %cst_38 = arith.constant dense<0xFF800000> : vector<16xf32>
    %76 = vector.multi_reduction <maximumf>, %75, %cst_38 [1] : vector<16x16xf32> to vector<16xf32>
    %77 = vector.shape_cast %76 : vector<16xf32> to vector<16x1xf32>
    %78 = vector.broadcast %77 : vector<16x1xf32> to vector<16x16xf32>
    %79 = arith.subf %75, %78 : vector<16x16xf32>
    %80 = math.exp %79 : vector<16x16xf32>
    %cst_39 = arith.constant dense<0.000000e+00> : vector<16xf32>
    %81 = vector.multi_reduction <add>, %80, %cst_39 [1] : vector<16x16xf32> to vector<16xf32>
    %82 = vector.shape_cast %81 : vector<16xf32> to vector<16x1xf32>
    %83 = tpu.reciprocal %82 {approx = true} : vector<16x1xf32> -> vector<16x1xf32>
    %84 = vector.broadcast %83 : vector<16x1xf32> to vector<16x16xf32>
    %85 = arith.mulf %80, %84 : vector<16x16xf32>
    %cst_40 = arith.constant dense<0.000000e+00> : vector<16x128xf32>
    %86 = tpu.matmul %85, %70, %cst_40 {dimension_numbers = #tpu.dot_dimension_numbers<[1], [0], [0], [1], [0, 0, 1, 1], [], []>} : vector<16x16xf32>, vector<16x128xf32>, vector<16x128xf32> -> vector<16x128xf32>
    %87 = arith.addf %66, %86 : vector<16x128xf32>
    %88 = vector.broadcast %18 : vector<1x128xf32> to vector<16x128xf32>
    %89 = arith.mulf %50, %88 : vector<16x128xf32>
    %90 = vector.broadcast %18 : vector<1x128xf32> to vector<16x128xf32>
    %91 = arith.mulf %64, %90 : vector<16x128xf32>
    %cst_41 = arith.constant dense<0.000000e+00> : vector<16x16xf32>
    %92 = tpu.matmul %89, %65, %cst_41 {dimension_numbers = #tpu.dot_dimension_numbers<[1], [0], [0], [1], [0, 0, 1, 1], [], []>} : vector<16x128xf32>, vector<128x16xf32>, vector<16x16xf32> -> vector<16x16xf32>
    %cst_42 = arith.constant 1.250000e-01 : f32
    %93 = vector.broadcast %cst_42 : f32 to vector<16x16xf32>
    %94 = arith.mulf %92, %93 : vector<16x16xf32>
    %95 = vector.broadcast %3 : vector<1x16xf32> to vector<16x16xf32>
    %96 = arith.addf %94, %95 : vector<16x16xf32>
    %cst_43 = arith.constant dense<0xFF800000> : vector<16xf32>
    %97 = vector.multi_reduction <maximumf>, %96, %cst_43 [1] : vector<16x16xf32> to vector<16xf32>
    %98 = vector.shape_cast %97 : vector<16xf32> to vector<16x1xf32>
    %99 = vector.broadcast %98 : vector<16x1xf32> to vector<16x16xf32>
    %100 = arith.subf %96, %99 : vector<16x16xf32>
    %101 = math.exp %100 : vector<16x16xf32>
    %cst_44 = arith.constant dense<0.000000e+00> : vector<16xf32>
    %102 = vector.multi_reduction <add>, %101, %cst_44 [1] : vector<16x16xf32> to vector<16xf32>
    %103 = vector.shape_cast %102 : vector<16xf32> to vector<16x1xf32>
    %104 = tpu.reciprocal %103 {approx = true} : vector<16x1xf32> -> vector<16x1xf32>
    %105 = vector.broadcast %104 : vector<16x1xf32> to vector<16x16xf32>
    %106 = arith.mulf %101, %105 : vector<16x16xf32>
    %cst_45 = arith.constant dense<0.000000e+00> : vector<16x128xf32>
    %107 = tpu.matmul %106, %91, %cst_45 {dimension_numbers = #tpu.dot_dimension_numbers<[1], [0], [0], [1], [0, 0, 1, 1], [], []>} : vector<16x16xf32>, vector<16x128xf32>, vector<16x128xf32> -> vector<16x128xf32>
    %108 = arith.addf %87, %107 : vector<16x128xf32>
    %109 = arith.truncf %108 : vector<16x128xf32> to vector<16x128xbf16>
    %c0_46 = arith.constant 0 : index
    %c0_47 = arith.constant 0 : index
    %c0_48 = arith.constant 0 : index
    %110 = vector.load %arg11[%c0_46, %c0_47, %c0_48] : memref<2x128x128xbf16, #tpu.memory_space<vmem>>, vector<1x128x128xbf16>
    %111 = vector.shape_cast %110 : vector<1x128x128xbf16> to vector<128x128xbf16>
    %cst_49 = arith.constant dense<0.000000e+00> : vector<16x128xf32>
    %112 = tpu.matmul %109, %111, %cst_49 {dimension_numbers = #tpu.dot_dimension_numbers<[1], [0], [0], [1], [0, 0, 1, 1], [], []>} : vector<16x128xbf16>, vector<128x128xbf16>, vector<16x128xf32> -> vector<16x128xf32>
    %c0_50 = arith.constant 0 : index
    %c0_51 = arith.constant 0 : index
    %c0_52 = arith.constant 0 : index
    %113 = vector.load %arg12[%c0_50, %c0_51, %c0_52] : memref<2x1x128xf32, #tpu.memory_space<vmem>>, vector<1x1x128xf32>
    %114 = vector.shape_cast %113 : vector<1x1x128xf32> to vector<1x128xf32>
    %115 = vector.broadcast %114 : vector<1x128xf32> to vector<16x128xf32>
    %116 = arith.addf %112, %115 : vector<16x128xf32>
    %117 = arith.addf %42, %116 : vector<16x128xf32>
    %c0_53 = arith.constant 0 : index
    %c0_54 = arith.constant 0 : index
    %c0_55 = arith.constant 0 : index
    %118 = vector.load %arg13[%c0_53, %c0_54, %c0_55] : memref<2x1x128xf32, #tpu.memory_space<vmem>>, vector<1x1x128xf32>
    %119 = vector.shape_cast %118 : vector<1x1x128xf32> to vector<1x128xf32>
    %c0_56 = arith.constant 0 : index
    %c0_57 = arith.constant 0 : index
    %c0_58 = arith.constant 0 : index
    %120 = vector.load %arg14[%c0_56, %c0_57, %c0_58] : memref<2x1x128xf32, #tpu.memory_space<vmem>>, vector<1x1x128xf32>
    %121 = vector.shape_cast %120 : vector<1x1x128xf32> to vector<1x128xf32>
    %cst_59 = arith.constant dense<0.000000e+00> : vector<16xf32>
    %122 = vector.multi_reduction <add>, %117, %cst_59 [1] : vector<16x128xf32> to vector<16xf32>
    %123 = vector.shape_cast %122 : vector<16xf32> to vector<16x1xf32>
    %cst_60 = arith.constant 1.280000e+02 : f32
    %124 = vector.broadcast %cst_60 : f32 to vector<16x1xf32>
    %125 = arith.divf %123, %124 : vector<16x1xf32>
    %126 = vector.broadcast %125 : vector<16x1xf32> to vector<16x128xf32>
    %127 = arith.subf %117, %126 : vector<16x128xf32>
    %128 = arith.mulf %127, %127 : vector<16x128xf32>
    %cst_61 = arith.constant dense<0.000000e+00> : vector<16xf32>
    %129 = vector.multi_reduction <add>, %128, %cst_61 [1] : vector<16x128xf32> to vector<16xf32>
    %130 = vector.shape_cast %129 : vector<16xf32> to vector<16x1xf32>
    %cst_62 = arith.constant 1.280000e+02 : f32
    %131 = vector.broadcast %cst_62 : f32 to vector<16x1xf32>
    %132 = arith.divf %130, %131 : vector<16x1xf32>
    %133 = vector.broadcast %125 : vector<16x1xf32> to vector<16x128xf32>
    %134 = arith.subf %117, %133 : vector<16x128xf32>
    %cst_63 = arith.constant 9.99999974E-6 : f32
    %135 = vector.broadcast %cst_63 : f32 to vector<16x1xf32>
    %136 = arith.addf %132, %135 : vector<16x1xf32>
    %137 = math.rsqrt %136 : vector<16x1xf32>
    %138 = vector.broadcast %137 : vector<16x1xf32> to vector<16x128xf32>
    %139 = arith.mulf %134, %138 : vector<16x128xf32>
    %140 = vector.broadcast %119 : vector<1x128xf32> to vector<16x128xf32>
    %141 = arith.mulf %139, %140 : vector<16x128xf32>
    %142 = vector.broadcast %121 : vector<1x128xf32> to vector<16x128xf32>
    %143 = arith.addf %141, %142 : vector<16x128xf32>
    %144 = arith.truncf %143 : vector<16x128xf32> to vector<16x128xbf16>
    %c0_64 = arith.constant 0 : index
    %c0_65 = arith.constant 0 : index
    %c0_66 = arith.constant 0 : index
    %145 = vector.load %arg15[%c0_64, %c0_65, %c0_66] : memref<2x128x256xbf16, #tpu.memory_space<vmem>>, vector<1x128x256xbf16>
    %146 = vector.shape_cast %145 : vector<1x128x256xbf16> to vector<128x256xbf16>
    %cst_67 = arith.constant dense<0.000000e+00> : vector<16x256xf32>
    %147 = tpu.matmul %144, %146, %cst_67 {dimension_numbers = #tpu.dot_dimension_numbers<[1], [0], [0], [1], [0, 0, 1, 1], [], []>} : vector<16x128xbf16>, vector<128x256xbf16>, vector<16x256xf32> -> vector<16x256xf32>
    %c0_68 = arith.constant 0 : index
    %c0_69 = arith.constant 0 : index
    %c0_70 = arith.constant 0 : index
    %148 = vector.load %arg16[%c0_68, %c0_69, %c0_70] : memref<2x1x256xf32, #tpu.memory_space<vmem>>, vector<1x1x256xf32>
    %149 = vector.shape_cast %148 : vector<1x1x256xf32> to vector<1x256xf32>
    %150 = vector.broadcast %149 : vector<1x256xf32> to vector<16x256xf32>
    %151 = arith.addf %147, %150 : vector<16x256xf32>
    %152 = arith.mulf %151, %151 : vector<16x256xf32>
    %153 = arith.mulf %151, %152 : vector<16x256xf32>
    %cst_71 = arith.constant 4.471500e-02 : f32
    %154 = vector.broadcast %cst_71 : f32 to vector<16x256xf32>
    %155 = arith.mulf %154, %153 : vector<16x256xf32>
    %156 = arith.addf %151, %155 : vector<16x256xf32>
    %cst_72 = arith.constant 0.797884583 : f32
    %157 = vector.broadcast %cst_72 : f32 to vector<16x256xf32>
    %158 = arith.mulf %157, %156 : vector<16x256xf32>
    %159 = math.tanh %158 : vector<16x256xf32>
    %cst_73 = arith.constant 1.000000e+00 : f32
    %160 = vector.broadcast %cst_73 : f32 to vector<16x256xf32>
    %161 = arith.addf %160, %159 : vector<16x256xf32>
    %cst_74 = arith.constant 5.000000e-01 : f32
    %162 = vector.broadcast %cst_74 : f32 to vector<16x256xf32>
    %163 = arith.mulf %162, %161 : vector<16x256xf32>
    %164 = arith.mulf %151, %163 : vector<16x256xf32>
    %165 = arith.truncf %164 : vector<16x256xf32> to vector<16x256xbf16>
    %c0_75 = arith.constant 0 : index
    %c0_76 = arith.constant 0 : index
    %c0_77 = arith.constant 0 : index
    %166 = vector.load %arg17[%c0_75, %c0_76, %c0_77] : memref<2x256x128xbf16, #tpu.memory_space<vmem>>, vector<1x256x128xbf16>
    %167 = vector.shape_cast %166 : vector<1x256x128xbf16> to vector<256x128xbf16>
    %cst_78 = arith.constant dense<0.000000e+00> : vector<16x128xf32>
    %168 = tpu.matmul %165, %167, %cst_78 {dimension_numbers = #tpu.dot_dimension_numbers<[1], [0], [0], [1], [0, 0, 1, 1], [], []>} : vector<16x256xbf16>, vector<256x128xbf16>, vector<16x128xf32> -> vector<16x128xf32>
    %c0_79 = arith.constant 0 : index
    %c0_80 = arith.constant 0 : index
    %c0_81 = arith.constant 0 : index
    %169 = vector.load %arg18[%c0_79, %c0_80, %c0_81] : memref<2x1x128xf32, #tpu.memory_space<vmem>>, vector<1x1x128xf32>
    %170 = vector.shape_cast %169 : vector<1x1x128xf32> to vector<1x128xf32>
    %171 = vector.broadcast %170 : vector<1x128xf32> to vector<16x128xf32>
    %172 = arith.addf %168, %171 : vector<16x128xf32>
    %173 = arith.addf %143, %172 : vector<16x128xf32>
    %c0_82 = arith.constant 0 : index
    %c0_83 = arith.constant 0 : index
    %c0_84 = arith.constant 0 : index
    %174 = vector.load %arg19[%c0_82, %c0_83, %c0_84] : memref<2x1x128xf32, #tpu.memory_space<vmem>>, vector<1x1x128xf32>
    %175 = vector.shape_cast %174 : vector<1x1x128xf32> to vector<1x128xf32>
    %c0_85 = arith.constant 0 : index
    %c0_86 = arith.constant 0 : index
    %c0_87 = arith.constant 0 : index
    %176 = vector.load %arg20[%c0_85, %c0_86, %c0_87] : memref<2x1x128xf32, #tpu.memory_space<vmem>>, vector<1x1x128xf32>
    %177 = vector.shape_cast %176 : vector<1x1x128xf32> to vector<1x128xf32>
    %cst_88 = arith.constant dense<0.000000e+00> : vector<16xf32>
    %178 = vector.multi_reduction <add>, %173, %cst_88 [1] : vector<16x128xf32> to vector<16xf32>
    %179 = vector.shape_cast %178 : vector<16xf32> to vector<16x1xf32>
    %cst_89 = arith.constant 1.280000e+02 : f32
    %180 = vector.broadcast %cst_89 : f32 to vector<16x1xf32>
    %181 = arith.divf %179, %180 : vector<16x1xf32>
    %182 = vector.broadcast %181 : vector<16x1xf32> to vector<16x128xf32>
    %183 = arith.subf %173, %182 : vector<16x128xf32>
    %184 = arith.mulf %183, %183 : vector<16x128xf32>
    %cst_90 = arith.constant dense<0.000000e+00> : vector<16xf32>
    %185 = vector.multi_reduction <add>, %184, %cst_90 [1] : vector<16x128xf32> to vector<16xf32>
    %186 = vector.shape_cast %185 : vector<16xf32> to vector<16x1xf32>
    %cst_91 = arith.constant 1.280000e+02 : f32
    %187 = vector.broadcast %cst_91 : f32 to vector<16x1xf32>
    %188 = arith.divf %186, %187 : vector<16x1xf32>
    %189 = vector.broadcast %181 : vector<16x1xf32> to vector<16x128xf32>
    %190 = arith.subf %173, %189 : vector<16x128xf32>
    %cst_92 = arith.constant 9.99999974E-6 : f32
    %191 = vector.broadcast %cst_92 : f32 to vector<16x1xf32>
    %192 = arith.addf %188, %191 : vector<16x1xf32>
    %193 = math.rsqrt %192 : vector<16x1xf32>
    %194 = vector.broadcast %193 : vector<16x1xf32> to vector<16x128xf32>
    %195 = arith.mulf %190, %194 : vector<16x128xf32>
    %196 = vector.broadcast %175 : vector<1x128xf32> to vector<16x128xf32>
    %197 = arith.mulf %195, %196 : vector<16x128xf32>
    %198 = vector.broadcast %177 : vector<1x128xf32> to vector<16x128xf32>
    %199 = arith.addf %197, %198 : vector<16x128xf32>
    %200 = arith.truncf %199 : vector<16x128xf32> to vector<16x128xbf16>
    %c1 = arith.constant 1 : index
    %c0_93 = arith.constant 0 : index
    %c0_94 = arith.constant 0 : index
    %201 = vector.load %arg5[%c1, %c0_93, %c0_94] : memref<2x128x128xbf16, #tpu.memory_space<vmem>>, vector<1x128x128xbf16>
    %202 = vector.shape_cast %201 : vector<1x128x128xbf16> to vector<128x128xbf16>
    %cst_95 = arith.constant dense<0.000000e+00> : vector<16x128xf32>
    %203 = tpu.matmul %200, %202, %cst_95 {dimension_numbers = #tpu.dot_dimension_numbers<[1], [0], [0], [1], [0, 0, 1, 1], [], []>} : vector<16x128xbf16>, vector<128x128xbf16>, vector<16x128xf32> -> vector<16x128xf32>
    %c1_96 = arith.constant 1 : index
    %c0_97 = arith.constant 0 : index
    %c0_98 = arith.constant 0 : index
    %204 = vector.load %arg6[%c1_96, %c0_97, %c0_98] : memref<2x1x128xf32, #tpu.memory_space<vmem>>, vector<1x1x128xf32>
    %205 = vector.shape_cast %204 : vector<1x1x128xf32> to vector<1x128xf32>
    %206 = vector.broadcast %205 : vector<1x128xf32> to vector<16x128xf32>
    %207 = arith.addf %203, %206 : vector<16x128xf32>
    %c1_99 = arith.constant 1 : index
    %c0_100 = arith.constant 0 : index
    %c0_101 = arith.constant 0 : index
    %208 = vector.load %arg7[%c1_99, %c0_100, %c0_101] : memref<2x128x128xbf16, #tpu.memory_space<vmem>>, vector<1x128x128xbf16>
    %209 = vector.shape_cast %208 : vector<1x128x128xbf16> to vector<128x128xbf16>
    %cst_102 = arith.constant dense<0.000000e+00> : vector<16x128xf32>
    %210 = tpu.matmul %200, %209, %cst_102 {dimension_numbers = #tpu.dot_dimension_numbers<[1], [0], [0], [1], [0, 0, 1, 1], [], []>} : vector<16x128xbf16>, vector<128x128xbf16>, vector<16x128xf32> -> vector<16x128xf32>
    %c1_103 = arith.constant 1 : index
    %c0_104 = arith.constant 0 : index
    %c0_105 = arith.constant 0 : index
    %211 = vector.load %arg8[%c1_103, %c0_104, %c0_105] : memref<2x1x128xf32, #tpu.memory_space<vmem>>, vector<1x1x128xf32>
    %212 = vector.shape_cast %211 : vector<1x1x128xf32> to vector<1x128xf32>
    %213 = vector.broadcast %212 : vector<1x128xf32> to vector<16x128xf32>
    %214 = arith.addf %210, %213 : vector<16x128xf32>
    %c1_106 = arith.constant 1 : index
    %c0_107 = arith.constant 0 : index
    %c0_108 = arith.constant 0 : index
    %215 = vector.load %arg9[%c1_106, %c0_107, %c0_108] : memref<2x128x128xbf16, #tpu.memory_space<vmem>>, vector<1x128x128xbf16>
    %216 = vector.shape_cast %215 : vector<1x128x128xbf16> to vector<128x128xbf16>
    %cst_109 = arith.constant dense<0.000000e+00> : vector<16x128xf32>
    %217 = tpu.matmul %200, %216, %cst_109 {dimension_numbers = #tpu.dot_dimension_numbers<[1], [0], [0], [1], [0, 0, 1, 1], [], []>} : vector<16x128xbf16>, vector<128x128xbf16>, vector<16x128xf32> -> vector<16x128xf32>
    %c1_110 = arith.constant 1 : index
    %c0_111 = arith.constant 0 : index
    %c0_112 = arith.constant 0 : index
    %218 = vector.load %arg10[%c1_110, %c0_111, %c0_112] : memref<2x1x128xf32, #tpu.memory_space<vmem>>, vector<1x1x128xf32>
    %219 = vector.shape_cast %218 : vector<1x1x128xf32> to vector<1x128xf32>
    %220 = vector.broadcast %219 : vector<1x128xf32> to vector<16x128xf32>
    %221 = arith.addf %217, %220 : vector<16x128xf32>
    %222 = tpu.transpose %214, [1, 0] : vector<16x128xf32> -> vector<128x16xf32>
    %cst_113 = arith.constant 0.000000e+00 : f32
    %223 = vector.broadcast %cst_113 : f32 to vector<16x128xf32>
    %224 = vector.broadcast %11 : vector<1x128xf32> to vector<16x128xf32>
    %225 = arith.mulf %207, %224 : vector<16x128xf32>
    %226 = vector.broadcast %11 : vector<1x128xf32> to vector<16x128xf32>
    %227 = arith.mulf %221, %226 : vector<16x128xf32>
    %cst_114 = arith.constant dense<0.000000e+00> : vector<16x16xf32>
    %228 = tpu.matmul %225, %222, %cst_114 {dimension_numbers = #tpu.dot_dimension_numbers<[1], [0], [0], [1], [0, 0, 1, 1], [], []>} : vector<16x128xf32>, vector<128x16xf32>, vector<16x16xf32> -> vector<16x16xf32>
    %cst_115 = arith.constant 1.250000e-01 : f32
    %229 = vector.broadcast %cst_115 : f32 to vector<16x16xf32>
    %230 = arith.mulf %228, %229 : vector<16x16xf32>
    %231 = vector.broadcast %3 : vector<1x16xf32> to vector<16x16xf32>
    %232 = arith.addf %230, %231 : vector<16x16xf32>
    %cst_116 = arith.constant dense<0xFF800000> : vector<16xf32>
    %233 = vector.multi_reduction <maximumf>, %232, %cst_116 [1] : vector<16x16xf32> to vector<16xf32>
    %234 = vector.shape_cast %233 : vector<16xf32> to vector<16x1xf32>
    %235 = vector.broadcast %234 : vector<16x1xf32> to vector<16x16xf32>
    %236 = arith.subf %232, %235 : vector<16x16xf32>
    %237 = math.exp %236 : vector<16x16xf32>
    %cst_117 = arith.constant dense<0.000000e+00> : vector<16xf32>
    %238 = vector.multi_reduction <add>, %237, %cst_117 [1] : vector<16x16xf32> to vector<16xf32>
    %239 = vector.shape_cast %238 : vector<16xf32> to vector<16x1xf32>
    %240 = tpu.reciprocal %239 {approx = true} : vector<16x1xf32> -> vector<16x1xf32>
    %241 = vector.broadcast %240 : vector<16x1xf32> to vector<16x16xf32>
    %242 = arith.mulf %237, %241 : vector<16x16xf32>
    %cst_118 = arith.constant dense<0.000000e+00> : vector<16x128xf32>
    %243 = tpu.matmul %242, %227, %cst_118 {dimension_numbers = #tpu.dot_dimension_numbers<[1], [0], [0], [1], [0, 0, 1, 1], [], []>} : vector<16x16xf32>, vector<16x128xf32>, vector<16x128xf32> -> vector<16x128xf32>
    %244 = arith.addf %223, %243 : vector<16x128xf32>
    %245 = vector.broadcast %18 : vector<1x128xf32> to vector<16x128xf32>
    %246 = arith.mulf %207, %245 : vector<16x128xf32>
    %247 = vector.broadcast %18 : vector<1x128xf32> to vector<16x128xf32>
    %248 = arith.mulf %221, %247 : vector<16x128xf32>
    %cst_119 = arith.constant dense<0.000000e+00> : vector<16x16xf32>
    %249 = tpu.matmul %246, %222, %cst_119 {dimension_numbers = #tpu.dot_dimension_numbers<[1], [0], [0], [1], [0, 0, 1, 1], [], []>} : vector<16x128xf32>, vector<128x16xf32>, vector<16x16xf32> -> vector<16x16xf32>
    %cst_120 = arith.constant 1.250000e-01 : f32
    %250 = vector.broadcast %cst_120 : f32 to vector<16x16xf32>
    %251 = arith.mulf %249, %250 : vector<16x16xf32>
    %252 = vector.broadcast %3 : vector<1x16xf32> to vector<16x16xf32>
    %253 = arith.addf %251, %252 : vector<16x16xf32>
    %cst_121 = arith.constant dense<0xFF800000> : vector<16xf32>
    %254 = vector.multi_reduction <maximumf>, %253, %cst_121 [1] : vector<16x16xf32> to vector<16xf32>
    %255 = vector.shape_cast %254 : vector<16xf32> to vector<16x1xf32>
    %256 = vector.broadcast %255 : vector<16x1xf32> to vector<16x16xf32>
    %257 = arith.subf %253, %256 : vector<16x16xf32>
    %258 = math.exp %257 : vector<16x16xf32>
    %cst_122 = arith.constant dense<0.000000e+00> : vector<16xf32>
    %259 = vector.multi_reduction <add>, %258, %cst_122 [1] : vector<16x16xf32> to vector<16xf32>
    %260 = vector.shape_cast %259 : vector<16xf32> to vector<16x1xf32>
    %261 = tpu.reciprocal %260 {approx = true} : vector<16x1xf32> -> vector<16x1xf32>
    %262 = vector.broadcast %261 : vector<16x1xf32> to vector<16x16xf32>
    %263 = arith.mulf %258, %262 : vector<16x16xf32>
    %cst_123 = arith.constant dense<0.000000e+00> : vector<16x128xf32>
    %264 = tpu.matmul %263, %248, %cst_123 {dimension_numbers = #tpu.dot_dimension_numbers<[1], [0], [0], [1], [0, 0, 1, 1], [], []>} : vector<16x16xf32>, vector<16x128xf32>, vector<16x128xf32> -> vector<16x128xf32>
    %265 = arith.addf %244, %264 : vector<16x128xf32>
    %266 = arith.truncf %265 : vector<16x128xf32> to vector<16x128xbf16>
    %c1_124 = arith.constant 1 : index
    %c0_125 = arith.constant 0 : index
    %c0_126 = arith.constant 0 : index
    %267 = vector.load %arg11[%c1_124, %c0_125, %c0_126] : memref<2x128x128xbf16, #tpu.memory_space<vmem>>, vector<1x128x128xbf16>
    %268 = vector.shape_cast %267 : vector<1x128x128xbf16> to vector<128x128xbf16>
    %cst_127 = arith.constant dense<0.000000e+00> : vector<16x128xf32>
    %269 = tpu.matmul %266, %268, %cst_127 {dimension_numbers = #tpu.dot_dimension_numbers<[1], [0], [0], [1], [0, 0, 1, 1], [], []>} : vector<16x128xbf16>, vector<128x128xbf16>, vector<16x128xf32> -> vector<16x128xf32>
    %c1_128 = arith.constant 1 : index
    %c0_129 = arith.constant 0 : index
    %c0_130 = arith.constant 0 : index
    %270 = vector.load %arg12[%c1_128, %c0_129, %c0_130] : memref<2x1x128xf32, #tpu.memory_space<vmem>>, vector<1x1x128xf32>
    %271 = vector.shape_cast %270 : vector<1x1x128xf32> to vector<1x128xf32>
    %272 = vector.broadcast %271 : vector<1x128xf32> to vector<16x128xf32>
    %273 = arith.addf %269, %272 : vector<16x128xf32>
    %274 = arith.addf %199, %273 : vector<16x128xf32>
    %c1_131 = arith.constant 1 : index
    %c0_132 = arith.constant 0 : index
    %c0_133 = arith.constant 0 : index
    %275 = vector.load %arg13[%c1_131, %c0_132, %c0_133] : memref<2x1x128xf32, #tpu.memory_space<vmem>>, vector<1x1x128xf32>
    %276 = vector.shape_cast %275 : vector<1x1x128xf32> to vector<1x128xf32>
    %c1_134 = arith.constant 1 : index
    %c0_135 = arith.constant 0 : index
    %c0_136 = arith.constant 0 : index
    %277 = vector.load %arg14[%c1_134, %c0_135, %c0_136] : memref<2x1x128xf32, #tpu.memory_space<vmem>>, vector<1x1x128xf32>
    %278 = vector.shape_cast %277 : vector<1x1x128xf32> to vector<1x128xf32>
    %cst_137 = arith.constant dense<0.000000e+00> : vector<16xf32>
    %279 = vector.multi_reduction <add>, %274, %cst_137 [1] : vector<16x128xf32> to vector<16xf32>
    %280 = vector.shape_cast %279 : vector<16xf32> to vector<16x1xf32>
    %cst_138 = arith.constant 1.280000e+02 : f32
    %281 = vector.broadcast %cst_138 : f32 to vector<16x1xf32>
    %282 = arith.divf %280, %281 : vector<16x1xf32>
    %283 = vector.broadcast %282 : vector<16x1xf32> to vector<16x128xf32>
    %284 = arith.subf %274, %283 : vector<16x128xf32>
    %285 = arith.mulf %284, %284 : vector<16x128xf32>
    %cst_139 = arith.constant dense<0.000000e+00> : vector<16xf32>
    %286 = vector.multi_reduction <add>, %285, %cst_139 [1] : vector<16x128xf32> to vector<16xf32>
    %287 = vector.shape_cast %286 : vector<16xf32> to vector<16x1xf32>
    %cst_140 = arith.constant 1.280000e+02 : f32
    %288 = vector.broadcast %cst_140 : f32 to vector<16x1xf32>
    %289 = arith.divf %287, %288 : vector<16x1xf32>
    %290 = vector.broadcast %282 : vector<16x1xf32> to vector<16x128xf32>
    %291 = arith.subf %274, %290 : vector<16x128xf32>
    %cst_141 = arith.constant 9.99999974E-6 : f32
    %292 = vector.broadcast %cst_141 : f32 to vector<16x1xf32>
    %293 = arith.addf %289, %292 : vector<16x1xf32>
    %294 = math.rsqrt %293 : vector<16x1xf32>
    %295 = vector.broadcast %294 : vector<16x1xf32> to vector<16x128xf32>
    %296 = arith.mulf %291, %295 : vector<16x128xf32>
    %297 = vector.broadcast %276 : vector<1x128xf32> to vector<16x128xf32>
    %298 = arith.mulf %296, %297 : vector<16x128xf32>
    %299 = vector.broadcast %278 : vector<1x128xf32> to vector<16x128xf32>
    %300 = arith.addf %298, %299 : vector<16x128xf32>
    %301 = arith.truncf %300 : vector<16x128xf32> to vector<16x128xbf16>
    %c1_142 = arith.constant 1 : index
    %c0_143 = arith.constant 0 : index
    %c0_144 = arith.constant 0 : index
    %302 = vector.load %arg15[%c1_142, %c0_143, %c0_144] : memref<2x128x256xbf16, #tpu.memory_space<vmem>>, vector<1x128x256xbf16>
    %303 = vector.shape_cast %302 : vector<1x128x256xbf16> to vector<128x256xbf16>
    %cst_145 = arith.constant dense<0.000000e+00> : vector<16x256xf32>
    %304 = tpu.matmul %301, %303, %cst_145 {dimension_numbers = #tpu.dot_dimension_numbers<[1], [0], [0], [1], [0, 0, 1, 1], [], []>} : vector<16x128xbf16>, vector<128x256xbf16>, vector<16x256xf32> -> vector<16x256xf32>
    %c1_146 = arith.constant 1 : index
    %c0_147 = arith.constant 0 : index
    %c0_148 = arith.constant 0 : index
    %305 = vector.load %arg16[%c1_146, %c0_147, %c0_148] : memref<2x1x256xf32, #tpu.memory_space<vmem>>, vector<1x1x256xf32>
    %306 = vector.shape_cast %305 : vector<1x1x256xf32> to vector<1x256xf32>
    %307 = vector.broadcast %306 : vector<1x256xf32> to vector<16x256xf32>
    %308 = arith.addf %304, %307 : vector<16x256xf32>
    %309 = arith.mulf %308, %308 : vector<16x256xf32>
    %310 = arith.mulf %308, %309 : vector<16x256xf32>
    %cst_149 = arith.constant 4.471500e-02 : f32
    %311 = vector.broadcast %cst_149 : f32 to vector<16x256xf32>
    %312 = arith.mulf %311, %310 : vector<16x256xf32>
    %313 = arith.addf %308, %312 : vector<16x256xf32>
    %cst_150 = arith.constant 0.797884583 : f32
    %314 = vector.broadcast %cst_150 : f32 to vector<16x256xf32>
    %315 = arith.mulf %314, %313 : vector<16x256xf32>
    %316 = math.tanh %315 : vector<16x256xf32>
    %cst_151 = arith.constant 1.000000e+00 : f32
    %317 = vector.broadcast %cst_151 : f32 to vector<16x256xf32>
    %318 = arith.addf %317, %316 : vector<16x256xf32>
    %cst_152 = arith.constant 5.000000e-01 : f32
    %319 = vector.broadcast %cst_152 : f32 to vector<16x256xf32>
    %320 = arith.mulf %319, %318 : vector<16x256xf32>
    %321 = arith.mulf %308, %320 : vector<16x256xf32>
    %322 = arith.truncf %321 : vector<16x256xf32> to vector<16x256xbf16>
    %c1_153 = arith.constant 1 : index
    %c0_154 = arith.constant 0 : index
    %c0_155 = arith.constant 0 : index
    %323 = vector.load %arg17[%c1_153, %c0_154, %c0_155] : memref<2x256x128xbf16, #tpu.memory_space<vmem>>, vector<1x256x128xbf16>
    %324 = vector.shape_cast %323 : vector<1x256x128xbf16> to vector<256x128xbf16>
    %cst_156 = arith.constant dense<0.000000e+00> : vector<16x128xf32>
    %325 = tpu.matmul %322, %324, %cst_156 {dimension_numbers = #tpu.dot_dimension_numbers<[1], [0], [0], [1], [0, 0, 1, 1], [], []>} : vector<16x256xbf16>, vector<256x128xbf16>, vector<16x128xf32> -> vector<16x128xf32>
    %c1_157 = arith.constant 1 : index
    %c0_158 = arith.constant 0 : index
    %c0_159 = arith.constant 0 : index
    %326 = vector.load %arg18[%c1_157, %c0_158, %c0_159] : memref<2x1x128xf32, #tpu.memory_space<vmem>>, vector<1x1x128xf32>
    %327 = vector.shape_cast %326 : vector<1x1x128xf32> to vector<1x128xf32>
    %328 = vector.broadcast %327 : vector<1x128xf32> to vector<16x128xf32>
    %329 = arith.addf %325, %328 : vector<16x128xf32>
    %330 = arith.addf %300, %329 : vector<16x128xf32>
    %c1_160 = arith.constant 1 : index
    %c0_161 = arith.constant 0 : index
    %c0_162 = arith.constant 0 : index
    %331 = vector.load %arg19[%c1_160, %c0_161, %c0_162] : memref<2x1x128xf32, #tpu.memory_space<vmem>>, vector<1x1x128xf32>
    %332 = vector.shape_cast %331 : vector<1x1x128xf32> to vector<1x128xf32>
    %c1_163 = arith.constant 1 : index
    %c0_164 = arith.constant 0 : index
    %c0_165 = arith.constant 0 : index
    %333 = vector.load %arg20[%c1_163, %c0_164, %c0_165] : memref<2x1x128xf32, #tpu.memory_space<vmem>>, vector<1x1x128xf32>
    %334 = vector.shape_cast %333 : vector<1x1x128xf32> to vector<1x128xf32>
    %cst_166 = arith.constant dense<0.000000e+00> : vector<16xf32>
    %335 = vector.multi_reduction <add>, %330, %cst_166 [1] : vector<16x128xf32> to vector<16xf32>
    %336 = vector.shape_cast %335 : vector<16xf32> to vector<16x1xf32>
    %cst_167 = arith.constant 1.280000e+02 : f32
    %337 = vector.broadcast %cst_167 : f32 to vector<16x1xf32>
    %338 = arith.divf %336, %337 : vector<16x1xf32>
    %339 = vector.broadcast %338 : vector<16x1xf32> to vector<16x128xf32>
    %340 = arith.subf %330, %339 : vector<16x128xf32>
    %341 = arith.mulf %340, %340 : vector<16x128xf32>
    %cst_168 = arith.constant dense<0.000000e+00> : vector<16xf32>
    %342 = vector.multi_reduction <add>, %341, %cst_168 [1] : vector<16x128xf32> to vector<16xf32>
    %343 = vector.shape_cast %342 : vector<16xf32> to vector<16x1xf32>
    %cst_169 = arith.constant 1.280000e+02 : f32
    %344 = vector.broadcast %cst_169 : f32 to vector<16x1xf32>
    %345 = arith.divf %343, %344 : vector<16x1xf32>
    %346 = vector.broadcast %338 : vector<16x1xf32> to vector<16x128xf32>
    %347 = arith.subf %330, %346 : vector<16x128xf32>
    %cst_170 = arith.constant 9.99999974E-6 : f32
    %348 = vector.broadcast %cst_170 : f32 to vector<16x1xf32>
    %349 = arith.addf %345, %348 : vector<16x1xf32>
    %350 = math.rsqrt %349 : vector<16x1xf32>
    %351 = vector.broadcast %350 : vector<16x1xf32> to vector<16x128xf32>
    %352 = arith.mulf %347, %351 : vector<16x128xf32>
    %353 = vector.broadcast %332 : vector<1x128xf32> to vector<16x128xf32>
    %354 = arith.mulf %352, %353 : vector<16x128xf32>
    %355 = vector.broadcast %334 : vector<1x128xf32> to vector<16x128xf32>
    %356 = arith.addf %354, %355 : vector<16x128xf32>
    %c0_171 = arith.constant 0 : index
    %c0_172 = arith.constant 0 : index
    %357 = vector.load %arg21[%c0_171, %c0_172] : memref<1x128xf32, #tpu.memory_space<vmem>>, vector<1x128xf32>
    %358 = tpu.transpose %356, [1, 0] : vector<16x128xf32> -> vector<128x16xf32>
    %cst_173 = arith.constant dense<0.000000e+00> : vector<1x16xf32>
    %359 = tpu.matmul %357, %358, %cst_173 {dimension_numbers = #tpu.dot_dimension_numbers<[1], [0], [0], [1], [0, 0, 1, 1], [], []>} : vector<1x128xf32>, vector<128x16xf32>, vector<1x16xf32> -> vector<1x16xf32>
    %c0_174 = arith.constant 0 : index
    %c0_175 = arith.constant 0 : index
    %360 = vector.load %arg22[%c0_174, %c0_175] : memref<1x1xf32, #tpu.memory_space<vmem>>, vector<1x1xf32>
    %361 = vector.broadcast %360 : vector<1x1xf32> to vector<1x16xf32>
    %362 = arith.addf %359, %361 : vector<1x16xf32>
    %c0_176 = arith.constant 0 : index
    %c0_177 = arith.constant 0 : index
    %c0_178 = arith.constant 0 : index
    %363 = vector.load %arg23[%c0_176, %c0_177, %c0_178] : memref<1x1x16xf32, #tpu.memory_space<vmem>>, vector<1x1x16xf32>
    %364 = vector.shape_cast %363 : vector<1x1x16xf32> to vector<1x16xf32>
    %365 = vector.shape_cast %362 : vector<1x16xf32> to vector<1x1x16xf32>
    tpu.vector_store %arg23[%c0_176, %c0_177, %c0_178], %365 {strides = array<i32>} : memref<1x1x16xf32, #tpu.memory_space<vmem>>, vector<1x1x16xf32>,
    return
  }
  func.func @transform_0(%arg0: i32) -> (i32, i32, i32) {
    %c0_i32 = arith.constant 0 : i32
    %c0_i32_0 = arith.constant 0 : i32
    %c0_i32_1 = arith.constant 0 : i32
    return %arg0, %c0_i32, %c0_i32_0 : i32, i32, i32
  }
  func.func @transform_1(%arg0: i32) -> (i32, i32, i32) {
    %c0_i32 = arith.constant 0 : i32
    %c0_i32_0 = arith.constant 0 : i32
    %c0_i32_1 = arith.constant 0 : i32
    return %arg0, %c0_i32, %c0_i32_0 : i32, i32, i32
  }
  func.func @transform_2(%arg0: i32) -> (i32, i32) {
    %c0_i32 = arith.constant 0 : i32
    %c0_i32_0 = arith.constant 0 : i32
    %c0_i32_1 = arith.constant 0 : i32
    return %c0_i32, %c0_i32_0 : i32, i32
  }
  func.func @transform_3(%arg0: i32) -> (i32, i32) {
    %c0_i32 = arith.constant 0 : i32
    %c0_i32_0 = arith.constant 0 : i32
    %c0_i32_1 = arith.constant 0 : i32
    return %c0_i32, %c0_i32_0 : i32, i32
  }
  func.func @transform_4(%arg0: i32) -> (i32, i32, i32) {
    %c0_i32 = arith.constant 0 : i32
    %c0_i32_0 = arith.constant 0 : i32
    %c0_i32_1 = arith.constant 0 : i32
    %c0_i32_2 = arith.constant 0 : i32
    return %c0_i32, %c0_i32_0, %c0_i32_1 : i32, i32, i32
  }
  func.func @transform_5(%arg0: i32) -> (i32, i32, i32) {
    %c0_i32 = arith.constant 0 : i32
    %c0_i32_0 = arith.constant 0 : i32
    %c0_i32_1 = arith.constant 0 : i32
    %c0_i32_2 = arith.constant 0 : i32
    return %c0_i32, %c0_i32_0, %c0_i32_1 : i32, i32, i32
  }
  func.func @transform_6(%arg0: i32) -> (i32, i32, i32) {
    %c0_i32 = arith.constant 0 : i32
    %c0_i32_0 = arith.constant 0 : i32
    %c0_i32_1 = arith.constant 0 : i32
    %c0_i32_2 = arith.constant 0 : i32
    return %c0_i32, %c0_i32_0, %c0_i32_1 : i32, i32, i32
  }
  func.func @transform_7(%arg0: i32) -> (i32, i32, i32) {
    %c0_i32 = arith.constant 0 : i32
    %c0_i32_0 = arith.constant 0 : i32
    %c0_i32_1 = arith.constant 0 : i32
    %c0_i32_2 = arith.constant 0 : i32
    return %c0_i32, %c0_i32_0, %c0_i32_1 : i32, i32, i32
  }
  func.func @transform_8(%arg0: i32) -> (i32, i32, i32) {
    %c0_i32 = arith.constant 0 : i32
    %c0_i32_0 = arith.constant 0 : i32
    %c0_i32_1 = arith.constant 0 : i32
    %c0_i32_2 = arith.constant 0 : i32
    return %c0_i32, %c0_i32_0, %c0_i32_1 : i32, i32, i32
  }
  func.func @transform_9(%arg0: i32) -> (i32, i32, i32) {
    %c0_i32 = arith.constant 0 : i32
    %c0_i32_0 = arith.constant 0 : i32
    %c0_i32_1 = arith.constant 0 : i32
    %c0_i32_2 = arith.constant 0 : i32
    return %c0_i32, %c0_i32_0, %c0_i32_1 : i32, i32, i32
  }
  func.func @transform_10(%arg0: i32) -> (i32, i32, i32) {
    %c0_i32 = arith.constant 0 : i32
    %c0_i32_0 = arith.constant 0 : i32
    %c0_i32_1 = arith.constant 0 : i32
    %c0_i32_2 = arith.constant 0 : i32
    return %c0_i32, %c0_i32_0, %c0_i32_1 : i32, i32, i32
  }
  func.func @transform_11(%arg0: i32) -> (i32, i32, i32) {
    %c0_i32 = arith.constant 0 : i32
    %c0_i32_0 = arith.constant 0 : i32
    %c0_i32_1 = arith.constant 0 : i32
    %c0_i32_2 = arith.constant 0 : i32
    return %c0_i32, %c0_i32_0, %c0_i32_1 : i32, i32, i32
  }
  func.func @transform_12(%arg0: i32) -> (i32, i32, i32) {
    %c0_i32 = arith.constant 0 : i32
    %c0_i32_0 = arith.constant 0 : i32
    %c0_i32_1 = arith.constant 0 : i32
    %c0_i32_2 = arith.constant 0 : i32
    return %c0_i32, %c0_i32_0, %c0_i32_1 : i32, i32, i32
  }
  func.func @transform_13(%arg0: i32) -> (i32, i32, i32) {
    %c0_i32 = arith.constant 0 : i32
    %c0_i32_0 = arith.constant 0 : i32
    %c0_i32_1 = arith.constant 0 : i32
    %c0_i32_2 = arith.constant 0 : i32
    return %c0_i32, %c0_i32_0, %c0_i32_1 : i32, i32, i32
  }
  func.func @transform_14(%arg0: i32) -> (i32, i32, i32) {
    %c0_i32 = arith.constant 0 : i32
    %c0_i32_0 = arith.constant 0 : i32
    %c0_i32_1 = arith.constant 0 : i32
    %c0_i32_2 = arith.constant 0 : i32
    return %c0_i32, %c0_i32_0, %c0_i32_1 : i32, i32, i32
  }
  func.func @transform_15(%arg0: i32) -> (i32, i32, i32) {
    %c0_i32 = arith.constant 0 : i32
    %c0_i32_0 = arith.constant 0 : i32
    %c0_i32_1 = arith.constant 0 : i32
    %c0_i32_2 = arith.constant 0 : i32
    return %c0_i32, %c0_i32_0, %c0_i32_1 : i32, i32, i32
  }
  func.func @transform_16(%arg0: i32) -> (i32, i32, i32) {
    %c0_i32 = arith.constant 0 : i32
    %c0_i32_0 = arith.constant 0 : i32
    %c0_i32_1 = arith.constant 0 : i32
    %c0_i32_2 = arith.constant 0 : i32
    return %c0_i32, %c0_i32_0, %c0_i32_1 : i32, i32, i32
  }
  func.func @transform_17(%arg0: i32) -> (i32, i32, i32) {
    %c0_i32 = arith.constant 0 : i32
    %c0_i32_0 = arith.constant 0 : i32
    %c0_i32_1 = arith.constant 0 : i32
    %c0_i32_2 = arith.constant 0 : i32
    return %c0_i32, %c0_i32_0, %c0_i32_1 : i32, i32, i32
  }
  func.func @transform_18(%arg0: i32) -> (i32, i32, i32) {
    %c0_i32 = arith.constant 0 : i32
    %c0_i32_0 = arith.constant 0 : i32
    %c0_i32_1 = arith.constant 0 : i32
    %c0_i32_2 = arith.constant 0 : i32
    return %c0_i32, %c0_i32_0, %c0_i32_1 : i32, i32, i32
  }
  func.func @transform_19(%arg0: i32) -> (i32, i32, i32) {
    %c0_i32 = arith.constant 0 : i32
    %c0_i32_0 = arith.constant 0 : i32
    %c0_i32_1 = arith.constant 0 : i32
    %c0_i32_2 = arith.constant 0 : i32
    return %c0_i32, %c0_i32_0, %c0_i32_1 : i32, i32, i32
  }
  func.func @transform_20(%arg0: i32) -> (i32, i32) {
    %c0_i32 = arith.constant 0 : i32
    %c0_i32_0 = arith.constant 0 : i32
    %c0_i32_1 = arith.constant 0 : i32
    return %c0_i32, %c0_i32_0 : i32, i32
  }
  func.func @transform_21(%arg0: i32) -> (i32, i32) {
    %c0_i32 = arith.constant 0 : i32
    %c0_i32_0 = arith.constant 0 : i32
    %c0_i32_1 = arith.constant 0 : i32
    return %c0_i32, %c0_i32_0 : i32, i32
  }
  func.func @transform_22(%arg0: i32) -> (i32, i32, i32) {
    %c0_i32 = arith.constant 0 : i32
    %c0_i32_0 = arith.constant 0 : i32
    %c0_i32_1 = arith.constant 0 : i32
    return %arg0, %c0_i32, %c0_i32_0 : i32, i32, i32
  }
}

</mosaic_0001>

<llo_original>
// kernel: roberta_denoiser_forward.1
$region0: #{roberta_denoiser_forward.1}
  #allocation0 [shape = 'u32[]', space=smem, size = 0x4, offset = 0x4, fixed_abs, tag = 'smem constant byte address 0x4 - core index']
  #allocation1 [shape = 'u32[72,128]{1,0:T(1,128)}', space=vmem, size = 0x9000, scoped, tag = 'internal scratch']
  #allocation2 [shape = 'f32[1,1]{1,0:T(1,128)S(1)}', space=vmem, size = 0x200, scoped, tag = 'scoped memory for roberta_denoiser_forward.1']
  %s0 = inlined_call_operand.vmem [shape: f32[2,16,128], index: 0, kind: input, shape index: {}]
  %s1 = inlined_call_operand.vmem [shape: f32[2,1,16], index: 1, kind: input, shape index: {}]
  %s2 = inlined_call_operand.vmem [shape: f32[1,128], index: 2, kind: input, shape index: {}]
  %s3 = inlined_call_operand.vmem [shape: f32[1,128], index: 3, kind: input, shape index: {}]
  %s4 = inlined_call_operand.hbm [shape: bf16[2,128,128], index: 4, kind: input, shape index: {}]
  %s5 = inlined_call_operand.vmem [shape: f32[2,1,128], index: 5, kind: input, shape index: {}]
  %s6 = inlined_call_operand.hbm [shape: bf16[2,128,128], index: 6, kind: input, shape index: {}]
  %s7 = inlined_call_operand.vmem [shape: f32[2,1,128], index: 7, kind: input, shape index: {}]
  %s8 = inlined_call_operand.hbm [shape: bf16[2,128,128], index: 8, kind: input, shape index: {}]
  %s9 = inlined_call_operand.vmem [shape: f32[2,1,128], index: 9, kind: input, shape index: {}]
  %s10 = inlined_call_operand.hbm [shape: bf16[2,128,128], index: 10, kind: input, shape index: {}]
  %s11 = inlined_call_operand.vmem [shape: f32[2,1,128], index: 11, kind: input, shape index: {}]
  %s12 = inlined_call_operand.vmem [shape: f32[2,1,128], index: 12, kind: input, shape index: {}]
  %s13 = inlined_call_operand.vmem [shape: f32[2,1,128], index: 13, kind: input, shape index: {}]
  %s14 = inlined_call_operand.vmem [shape: bf16[2,128,256], index: 14, kind: input, shape index: {}]
  %s15 = inlined_call_operand.vmem [shape: f32[2,1,256], index: 15, kind: input, shape index: {}]
  %s16 = inlined_call_operand.vmem [shape: bf16[2,256,128], index: 16, kind: input, shape index: {}]
  %s17 = inlined_call_operand.vmem [shape: f32[2,1,128], index: 17, kind: input, shape index: {}]
  %s18 = inlined_call_operand.vmem [shape: f32[2,1,128], index: 18, kind: input, shape index: {}]
  %s19 = inlined_call_operand.vmem [shape: f32[2,1,128], index: 19, kind: input, shape index: {}]
  %s20 = inlined_call_operand.vmem [shape: f32[1,128], index: 20, kind: input, shape index: {}]
  %s21 = inlined_call_operand.<no memory space> [shape: f32[1,1], index: 21, kind: input, shape index: {}]
  %s22 = inlined_call_operand.vmem [shape: f32[2,1,16], index: 22, kind: output, shape index: {}]
  %s23 = sld [smem:[#allocation0]]
  $region137: #{roberta_denoiser_forward.1} parent=0
    _
  %s25 = ssub.s32 1, %s23
  %s26 = scalar_select 0, %s25, %s23
  %v27 = vstv %s21
  %28 = vst [vmem:[#allocation2] sm:$0x1] %v27
  $region1: #{roberta_denoiser_forward.1} parent=0
    #allocation3 [shape = 'u8[65536]{0}', space=vmem, size = 0x10000, scoped, tag = 'input window, operand 4, single buffered']
    #allocation4 [shape = 's32[2]{0}', space=sflag, size = 0x8, scoped, tag = 'scoped memory for roberta_denoiser_forward.1']
    #allocation5 [shape = 'u8[65536]{0}', space=vmem, size = 0x10000, scoped, tag = 'input window, operand 6, single buffered']
    #allocation6 [shape = 's32[1]{0}', space=sflag, size = 0x4, scoped, tag = 'scoped memory for roberta_denoiser_forward.1']
    #allocation7 [shape = 'u8[65536]{0}', space=vmem, size = 0x10000, scoped, tag = 'input window, operand 8, single buffered']
    #allocation8 [shape = 'u8[65536]{0}', space=vmem, size = 0x10000, scoped, tag = 'input window, operand 10, single buffered']
    #allocation9 [shape = 's32[1]{0}', space=sflag, size = 0x4, scoped, tag = 'scoped memory for roberta_denoiser_forward.1']
    %29 = vsyncpa [#allocation4], 0
    %30 = vsyncpa [#allocation6], 0
    %31 = vsyncpa [#allocation9], 0
    loop: start=0, step=1, limit=4
    $region2: #{roberta_denoiser_forward.1} parent=1 // loop_pre_header
      _
    $region3: #{roberta_denoiser_forward.1} parent=1 // loop_header
      %s33 = sphi 0, %s37
      %p34 = scmp.ge.s32.totalorder %s33, 4
      %s43 = sphi 0, %s45
      %s46 = sphi 0, %s43
      %s47 = sphi 0, %s46
      %s63 = sphi 0, %s47
      %s69 = sphi 0, %s71
      %s72 = sphi 0, %s69
      %s73 = sphi 0, %s72
      %s89 = sphi 0, %s73
      %s93 = sphi 0, %s93
      %s95 = sphi 0, %s93
      %s96 = sphi 0, %s95
      %s110 = sphi 0, %s96
      %s114 = sphi 0, %s114
      %s116 = sphi 0, %s114
      %s117 = sphi 0, %s116
      %s131 = sphi 0, %s117
      %s135 = sphi 0, %s135
      %s137 = sphi 0, %s135
      %s138 = sphi 0, %s137
      %s152 = sphi 0, %s138
      %s156 = sphi 0, %s156
      %s158 = sphi 0, %s156
      %s159 = sphi 0, %s158
      %s173 = sphi 0, %s159
      %s177 = sphi 0, %s177
      %s179 = sphi 0, %s177
      %s180 = sphi 0, %s179
      %s194 = sphi 0, %s180
      %s198 = sphi 0, %s198
      %s200 = sphi 0, %s198
      %s201 = sphi 0, %s200
      %s215 = sphi 0, %s201
      %s219 = sphi 0, %s219
      %s221 = sphi 0, %s219
      %s222 = sphi 0, %s221
      %s236 = sphi 0, %s222
      %s240 = sphi 0, %s240
      %s242 = sphi 0, %s240
      %s243 = sphi 0, %s242
      %s257 = sphi 0, %s243
      %s261 = sphi 0, %s261
      %s263 = sphi 0, %s261
      %s264 = sphi 0, %s263
      %s278 = sphi 0, %s264
      %s282 = sphi 0, %s282
      %s284 = sphi 0, %s282
      %s285 = sphi 0, %s284
      %s299 = sphi 0, %s285
      %s303 = sphi 0, %s303
      %s305 = sphi 0, %s303
      %s306 = sphi 0, %s305
      %s320 = sphi 0, %s306
      %s324 = sphi 0, %s324
      %s326 = sphi 0, %s324
      %s327 = sphi 0, %s326
      %s341 = sphi 0, %s327
      %s345 = sphi 0, %s345
      %s347 = sphi 0, %s345
      %s348 = sphi 0, %s347
      %s362 = sphi 0, %s348
      %s366 = sphi 0, %s366
      %s368 = sphi 0, %s366
      %s369 = sphi 0, %s368
      %s383 = sphi 0, %s369
      %s387 = sphi 0, %s387
      %s389 = sphi 0, %s387
      %s390 = sphi 0, %s389
      %s404 = sphi 0, %s390
      %s408 = sphi 0, %s408
      %s410 = sphi 0, %s408
      %s411 = sphi 0, %s410
      %s425 = sphi 0, %s411
      %s429 = sphi 0, %s429
      %s431 = sphi 0, %s429
      %s432 = sphi 0, %s431
      %s446 = sphi 0, %s432
      %s450 = sphi 0, %s450
      %s452 = sphi 0, %s450
      %s453 = sphi 0, %s452
      %s467 = sphi 0, %s453
      %s471 = sphi 0, %s471
      %s473 = sphi 0, %s471
      %s474 = sphi 0, %s473
      %s488 = sphi 0, %s474
      %s492 = sphi 0, %s492
      %s494 = sphi 0, %s492
      %s495 = sphi 0, %s494
      %s509 = sphi 0, %s495
      %s515 = sphi 0, %s517
      %s518 = sphi 0, %s515
      %s519 = sphi 0, %s518
      %s535 = sphi 0, %s519
    $region4: #{roberta_denoiser_forward.1} parent=1 // loop_header_branch
      %36 = sbr.rel (%p34) target = $region8
    $region5: #{roberta_denoiser_forward.1} parent=1 // loop_body
      %s38 = ssub.s32 %s33, 1
      %s39 = ssub.s32 %s33, 2
      %s40 = sadd.s32 %s33, 1
      %s41 = ssub.s32 %s33, %s40
      %p42 = scmp.eq.s32.totalorder %s41, 0
      %s44 = sadd.s32 %s43, 1
      %s45 = scalar_select %p42, %s43, %s44
      %p48 = pneg %p42
      %p49 = scmp.eq.s32.totalorder %s33, 1
      %p50 = por %p48, %p49
      %p51 = scmp.ne.s32.totalorder %s43, %s46
      %p52 = scmp.eq.s32.totalorder %s33, 0
      %p53 = por %p51, %p52
      %p54 = scmp.ne.s32.totalorder %s43, %s46
      %p55 = scmp.eq.s32.totalorder %s38, 1
      %p56 = por %p54, %p55
      %p57 = scmp.ne.s32.totalorder %s46, %s47
      %p58 = scmp.eq.s32.totalorder %s38, 0
      %p59 = por %p57, %p58
      %p60 = scmp.ne.s32.totalorder %s46, %s47
      %p61 = scmp.eq.s32.totalorder %s39, 1
      %p62 = por %p60, %p61
      %p64 = scmp.ne.s32.totalorder %s47, %s63
      %p65 = scmp.eq.s32.totalorder %s39, 0
      %p66 = por %p64, %p65
      %s67 = ssub.s32 %s33, %s40
      %p68 = scmp.eq.s32.totalorder %s67, 0
      %s70 = sadd.s32 %s69, 1
      %s71 = scalar_select %p68, %s69, %s70
      %p74 = pneg %p68
      %p75 = scmp.eq.s32.totalorder %s33, 1
      %p76 = por %p74, %p75
      %p77 = scmp.ne.s32.totalorder %s69, %s72
      %p78 = scmp.eq.s32.totalorder %s33, 0
      %p79 = por %p77, %p78
      %p80 = scmp.ne.s32.totalorder %s69, %s72
      %p81 = scmp.eq.s32.totalorder %s38, 1
      %p82 = por %p80, %p81
      %p83 = scmp.ne.s32.totalorder %s72, %s73
      %p84 = scmp.eq.s32.totalorder %s38, 0
      %p85 = por %p83, %p84
      %p86 = scmp.ne.s32.totalorder %s72, %s73
      %p87 = scmp.eq.s32.totalorder %s39, 1
      %p88 = por %p86, %p87
      %p90 = scmp.ne.s32.totalorder %s73, %s89
      %p91 = scmp.eq.s32.totalorder %s39, 0
      %p92 = por %p90, %p91
      %s94 = sadd.s32 %s93, 1
      %p97 = scmp.eq.s32.totalorder %s33, 1
      %p98 = scmp.ne.s32.totalorder %s93, %s95
      %p99 = scmp.eq.s32.totalorder %s33, 0
      %p100 = por %p98, %p99
      %p101 = scmp.ne.s32.totalorder %s93, %s95
      %p102 = scmp.eq.s32.totalorder %s38, 1
      %p103 = por %p101, %p102
      %p104 = scmp.ne.s32.totalorder %s95, %s96
      %p105 = scmp.eq.s32.totalorder %s38, 0
      %p106 = por %p104, %p105
      %p107 = scmp.ne.s32.totalorder %s95, %s96
      %p108 = scmp.eq.s32.totalorder %s39, 1
      %p109 = por %p107, %p108
      %p111 = scmp.ne.s32.totalorder %s96, %s110
      %p112 = scmp.eq.s32.totalorder %s39, 0
      %p113 = por %p111, %p112
      %s115 = sadd.s32 %s114, 1
      %p118 = scmp.eq.s32.totalorder %s33, 1
      %p119 = scmp.ne.s32.totalorder %s114, %s116
      %p120 = scmp.eq.s32.totalorder %s33, 0
      %p121 = por %p119, %p120
      %p122 = scmp.ne.s32.totalorder %s114, %s116
      %p123 = scmp.eq.s32.totalorder %s38, 1
      %p124 = por %p122, %p123
      %p125 = scmp.ne.s32.totalorder %s116, %s117
      %p126 = scmp.eq.s32.totalorder %s38, 0
      %p127 = por %p125, %p126
      %p128 = scmp.ne.s32.totalorder %s116, %s117
      %p129 = scmp.eq.s32.totalorder %s39, 1
      %p130 = por %p128, %p129
      %p132 = scmp.ne.s32.totalorder %s117, %s131
      %p133 = scmp.eq.s32.totalorder %s39, 0
      %p134 = por %p132, %p133
      %s136 = sadd.s32 %s135, 1
      %p139 = scmp.eq.s32.totalorder %s33, 1
      %p140 = scmp.ne.s32.totalorder %s135, %s137
      %p141 = scmp.eq.s32.totalorder %s33, 0
      %p142 = por %p140, %p141
      %p143 = scmp.ne.s32.totalorder %s135, %s137
      %p144 = scmp.eq.s32.totalorder %s38, 1
      %p145 = por %p143, %p144
      %p146 = scmp.ne.s32.totalorder %s137, %s138
      %p147 = scmp.eq.s32.totalorder %s38, 0
      %p148 = por %p146, %p147
      %p149 = scmp.ne.s32.totalorder %s137, %s138
      %p150 = scmp.eq.s32.totalorder %s39, 1
      %p151 = por %p149, %p150
      %p153 = scmp.ne.s32.totalorder %s138, %s152
      %p154 = scmp.eq.s32.totalorder %s39, 0
      %p155 = por %p153, %p154
      %s157 = sadd.s32 %s156, 1
      %p160 = scmp.eq.s32.totalorder %s33, 1
      %p161 = scmp.ne.s32.totalorder %s156, %s158
      %p162 = scmp.eq.s32.totalorder %s33, 0
      %p163 = por %p161, %p162
      %p164 = scmp.ne.s32.totalorder %s156, %s158
      %p165 = scmp.eq.s32.totalorder %s38, 1
      %p166 = por %p164, %p165
      %p167 = scmp.ne.s32.totalorder %s158, %s159
      %p168 = scmp.eq.s32.totalorder %s38, 0
      %p169 = por %p167, %p168
      %p170 = scmp.ne.s32.totalorder %s158, %s159
      %p171 = scmp.eq.s32.totalorder %s39, 1
      %p172 = por %p170, %p171
      %p174 = scmp.ne.s32.totalorder %s159, %s173
      %p175 = scmp.eq.s32.totalorder %s39, 0
      %p176 = por %p174, %p175
      %s178 = sadd.s32 %s177, 1
      %p181 = scmp.eq.s32.totalorder %s33, 1
      %p182 = scmp.ne.s32.totalorder %s177, %s179
      %p183 = scmp.eq.s32.totalorder %s33, 0
      %p184 = por %p182, %p183
      %p185 = scmp.ne.s32.totalorder %s177, %s179
      %p186 = scmp.eq.s32.totalorder %s38, 1
      %p187 = por %p185, %p186
      %p188 = scmp.ne.s32.totalorder %s179, %s180
      %p189 = scmp.eq.s32.totalorder %s38, 0
      %p190 = por %p188, %p189
      %p191 = scmp.ne.s32.totalorder %s179, %s180
      %p192 = scmp.eq.s32.totalorder %s39, 1
      %p193 = por %p191, %p192
      %p195 = scmp.ne.s32.totalorder %s180, %s194
      %p196 = scmp.eq.s32.totalorder %s39, 0
      %p197 = por %p195, %p196
      %s199 = sadd.s32 %s198, 1
      %p202 = scmp.eq.s32.totalorder %s33, 1
      %p203 = scmp.ne.s32.totalorder %s198, %s200
      %p204 = scmp.eq.s32.totalorder %s33, 0
      %p205 = por %p203, %p204
      %p206 = scmp.ne.s32.totalorder %s198, %s200
      %p207 = scmp.eq.s32.totalorder %s38, 1
      %p208 = por %p206, %p207
      %p209 = scmp.ne.s32.totalorder %s200, %s201
      %p210 = scmp.eq.s32.totalorder %s38, 0
      %p211 = por %p209, %p210
      %p212 = scmp.ne.s32.totalorder %s200, %s201
      %p213 = scmp.eq.s32.totalorder %s39, 1
      %p214 = por %p212, %p213
      %p216 = scmp.ne.s32.totalorder %s201, %s215
      %p217 = scmp.eq.s32.totalorder %s39, 0
      %p218 = por %p216, %p217
      %s220 = sadd.s32 %s219, 1
      %p223 = scmp.eq.s32.totalorder %s33, 1
      %p224 = scmp.ne.s32.totalorder %s219, %s221
      %p225 = scmp.eq.s32.totalorder %s33, 0
      %p226 = por %p224, %p225
      %p227 = scmp.ne.s32.totalorder %s219, %s221
      %p228 = scmp.eq.s32.totalorder %s38, 1
      %p229 = por %p227, %p228
      %p230 = scmp.ne.s32.totalorder %s221, %s222
      %p231 = scmp.eq.s32.totalorder %s38, 0
      %p232 = por %p230, %p231
      %p233 = scmp.ne.s32.totalorder %s221, %s222
      %p234 = scmp.eq.s32.totalorder %s39, 1
      %p235 = por %p233, %p234
      %p237 = scmp.ne.s32.totalorder %s222, %s236
      %p238 = scmp.eq.s32.totalorder %s39, 0
      %p239 = por %p237, %p238
      %s241 = sadd.s32 %s240, 1
      %p244 = scmp.eq.s32.totalorder %s33, 1
      %p245 = scmp.ne.s32.totalorder %s240, %s242
      %p246 = scmp.eq.s32.totalorder %s33, 0
      %p247 = por %p245, %p246
      %p248 = scmp.ne.s32.totalorder %s240, %s242
      %p249 = scmp.eq.s32.totalorder %s38, 1
      %p250 = por %p248, %p249
      %p251 = scmp.ne.s32.totalorder %s242, %s243
      %p252 = scmp.eq.s32.totalorder %s38, 0
      %p253 = por %p251, %p252
      %p254 = scmp.ne.s32.totalorder %s242, %s243
      %p255 = scmp.eq.s32.totalorder %s39, 1
      %p256 = por %p254, %p255
      %p258 = scmp.ne.s32.totalorder %s243, %s257
      %p259 = scmp.eq.s32.totalorder %s39, 0
      %p260 = por %p258, %p259
      %s262 = sadd.s32 %s261, 1
      %p265 = scmp.eq.s32.totalorder %s33, 1
      %p266 = scmp.ne.s32.totalorder %s261, %s263
      %p267 = scmp.eq.s32.totalorder %s33, 0
      %p268 = por %p266, %p267
      %p269 = scmp.ne.s32.totalorder %s261, %s263
      %p270 = scmp.eq.s32.totalorder %s38, 1
      %p271 = por %p269, %p270
      %p272 = scmp.ne.s32.totalorder %s263, %s264
      %p273 = scmp.eq.s32.totalorder %s38, 0
      %p274 = por %p272, %p273
      %p275 = scmp.ne.s32.totalorder %s263, %s264
      %p276 = scmp.eq.s32.totalorder %s39, 1
      %p277 = por %p275, %p276
      %p279 = scmp.ne.s32.totalorder %s264, %s278
      %p280 = scmp.eq.s32.totalorder %s39, 0
      %p281 = por %p279, %p280
      %s283 = sadd.s32 %s282, 1
      %p286 = scmp.eq.s32.totalorder %s33, 1
      %p287 = scmp.ne.s32.totalorder %s282, %s284
      %p288 = scmp.eq.s32.totalorder %s33, 0
      %p289 = por %p287, %p288
      %p290 = scmp.ne.s32.totalorder %s282, %s284
      %p291 = scmp.eq.s32.totalorder %s38, 1
      %p292 = por %p290, %p291
      %p293 = scmp.ne.s32.totalorder %s284, %s285
      %p294 = scmp.eq.s32.totalorder %s38, 0
      %p295 = por %p293, %p294
      %p296 = scmp.ne.s32.totalorder %s284, %s285
      %p297 = scmp.eq.s32.totalorder %s39, 1
      %p298 = por %p296, %p297
      %p300 = scmp.ne.s32.totalorder %s285, %s299
      %p301 = scmp.eq.s32.totalorder %s39, 0
      %p302 = por %p300, %p301
      %s304 = sadd.s32 %s303, 1
      %p307 = scmp.eq.s32.totalorder %s33, 1
      %p308 = scmp.ne.s32.totalorder %s303, %s305
      %p309 = scmp.eq.s32.totalorder %s33, 0
      %p310 = por %p308, %p309
      %p311 = scmp.ne.s32.totalorder %s303, %s305
      %p312 = scmp.eq.s32.totalorder %s38, 1
      %p313 = por %p311, %p312
      %p314 = scmp.ne.s32.totalorder %s305, %s306
      %p315 = scmp.eq.s32.totalorder %s38, 0
      %p316 = por %p314, %p315
      %p317 = scmp.ne.s32.totalorder %s305, %s306
      %p318 = scmp.eq.s32.totalorder %s39, 1
      %p319 = por %p317, %p318
      %p321 = scmp.ne.s32.totalorder %s306, %s320
      %p322 = scmp.eq.s32.totalorder %s39, 0
      %p323 = por %p321, %p322
      %s325 = sadd.s32 %s324, 1
      %p328 = scmp.eq.s32.totalorder %s33, 1
      %p329 = scmp.ne.s32.totalorder %s324, %s326
      %p330 = scmp.eq.s32.totalorder %s33, 0
      %p331 = por %p329, %p330
      %p332 = scmp.ne.s32.totalorder %s324, %s326
      %p333 = scmp.eq.s32.totalorder %s38, 1
      %p334 = por %p332, %p333
      %p335 = scmp.ne.s32.totalorder %s326, %s327
      %p336 = scmp.eq.s32.totalorder %s38, 0
      %p337 = por %p335, %p336
      %p338 = scmp.ne.s32.totalorder %s326, %s327
      %p339 = scmp.eq.s32.totalorder %s39, 1
      %p340 = por %p338, %p339
      %p342 = scmp.ne.s32.totalorder %s327, %s341
      %p343 = scmp.eq.s32.totalorder %s39, 0
      %p344 = por %p342, %p343
      %s346 = sadd.s32 %s345, 1
      %p349 = scmp.eq.s32.totalorder %s33, 1
      %p350 = scmp.ne.s32.totalorder %s345, %s347
      %p351 = scmp.eq.s32.totalorder %s33, 0
      %p352 = por %p350, %p351
      %p353 = scmp.ne.s32.totalorder %s345, %s347
      %p354 = scmp.eq.s32.totalorder %s38, 1
      %p355 = por %p353, %p354
      %p356 = scmp.ne.s32.totalorder %s347, %s348
      %p357 = scmp.eq.s32.totalorder %s38, 0
      %p358 = por %p356, %p357
      %p359 = scmp.ne.s32.totalorder %s347, %s348
      %p360 = scmp.eq.s32.totalorder %s39, 1
      %p361 = por %p359, %p360
      %p363 = scmp.ne.s32.totalorder %s348, %s362
      %p364 = scmp.eq.s32.totalorder %s39, 0
      %p365 = por %p363, %p364
      %s367 = sadd.s32 %s366, 1
      %p370 = scmp.eq.s32.totalorder %s33, 1
      %p371 = scmp.ne.s32.totalorder %s366, %s368
      %p372 = scmp.eq.s32.totalorder %s33, 0
      %p373 = por %p371, %p372
      %p374 = scmp.ne.s32.totalorder %s366, %s368
      %p375 = scmp.eq.s32.totalorder %s38, 1
      %p376 = por %p374, %p375
      %p377 = scmp.ne.s32.totalorder %s368, %s369
      %p378 = scmp.eq.s32.totalorder %s38, 0
      %p379 = por %p377, %p378
      %p380 = scmp.ne.s32.totalorder %s368, %s369
      %p381 = scmp.eq.s32.totalorder %s39, 1
      %p382 = por %p380, %p381
      %p384 = scmp.ne.s32.totalorder %s369, %s383
      %p385 = scmp.eq.s32.totalorder %s39, 0
      %p386 = por %p384, %p385
      %s388 = sadd.s32 %s387, 1
      %p391 = scmp.eq.s32.totalorder %s33, 1
      %p392 = scmp.ne.s32.totalorder %s387, %s389
      %p393 = scmp.eq.s32.totalorder %s33, 0
      %p394 = por %p392, %p393
      %p395 = scmp.ne.s32.totalorder %s387, %s389
      %p396 = scmp.eq.s32.totalorder %s38, 1
      %p397 = por %p395, %p396
      %p398 = scmp.ne.s32.totalorder %s389, %s390
      %p399 = scmp.eq.s32.totalorder %s38, 0
      %p400 = por %p398, %p399
      %p401 = scmp.ne.s32.totalorder %s389, %s390
      %p402 = scmp.eq.s32.totalorder %s39, 1
      %p403 = por %p401, %p402
      %p405 = scmp.ne.s32.totalorder %s390, %s404
      %p406 = scmp.eq.s32.totalorder %s39, 0
      %p407 = por %p405, %p406
      %s409 = sadd.s32 %s408, 1
      %p412 = scmp.eq.s32.totalorder %s33, 1
      %p413 = scmp.ne.s32.totalorder %s408, %s410
      %p414 = scmp.eq.s32.totalorder %s33, 0
      %p415 = por %p413, %p414
      %p416 = scmp.ne.s32.totalorder %s408, %s410
      %p417 = scmp.eq.s32.totalorder %s38, 1
      %p418 = por %p416, %p417
      %p419 = scmp.ne.s32.totalorder %s410, %s411
      %p420 = scmp.eq.s32.totalorder %s38, 0
      %p421 = por %p419, %p420
      %p422 = scmp.ne.s32.totalorder %s410, %s411
      %p423 = scmp.eq.s32.totalorder %s39, 1
      %p424 = por %p422, %p423
      %p426 = scmp.ne.s32.totalorder %s411, %s425
      %p427 = scmp.eq.s32.totalorder %s39, 0
      %p428 = por %p426, %p427
      %s430 = sadd.s32 %s429, 1
      %p433 = scmp.eq.s32.totalorder %s33, 1
      %p434 = scmp.ne.s32.totalorder %s429, %s431
      %p435 = scmp.eq.s32.totalorder %s33, 0
      %p436 = por %p434, %p435
      %p437 = scmp.ne.s32.totalorder %s429, %s431
      %p438 = scmp.eq.s32.totalorder %s38, 1
      %p439 = por %p437, %p438
      %p440 = scmp.ne.s32.totalorder %s431, %s432
      %p441 = scmp.eq.s32.totalorder %s38, 0
      %p442 = por %p440, %p441
      %p443 = scmp.ne.s32.totalorder %s431, %s432
      %p444 = scmp.eq.s32.totalorder %s39, 1
      %p445 = por %p443, %p444
      %p447 = scmp.ne.s32.totalorder %s432, %s446
      %p448 = scmp.eq.s32.totalorder %s39, 0
      %p449 = por %p447, %p448
      %s451 = sadd.s32 %s450, 1
      %p454 = scmp.eq.s32.totalorder %s33, 1
      %p455 = scmp.ne.s32.totalorder %s450, %s452
      %p456 = scmp.eq.s32.totalorder %s33, 0
      %p457 = por %p455, %p456
      %p458 = scmp.ne.s32.totalorder %s450, %s452
      %p459 = scmp.eq.s32.totalorder %s38, 1
      %p460 = por %p458, %p459
      %p461 = scmp.ne.s32.totalorder %s452, %s453
      %p462 = scmp.eq.s32.totalorder %s38, 0
      %p463 = por %p461, %p462
      %p464 = scmp.ne.s32.totalorder %s452, %s453
      %p465 = scmp.eq.s32.totalorder %s39, 1
      %p466 = por %p464, %p465
      %p468 = scmp.ne.s32.totalorder %s453, %s467
      %p469 = scmp.eq.s32.totalorder %s39, 0
      %p470 = por %p468, %p469
      %s472 = sadd.s32 %s471, 1
      %p475 = scmp.eq.s32.totalorder %s33, 1
      %p476 = scmp.ne.s32.totalorder %s471, %s473
      %p477 = scmp.eq.s32.totalorder %s33, 0
      %p478 = por %p476, %p477
      %p479 = scmp.ne.s32.totalorder %s471, %s473
      %p480 = scmp.eq.s32.totalorder %s38, 1
      %p481 = por %p479, %p480
      %p482 = scmp.ne.s32.totalorder %s473, %s474
      %p483 = scmp.eq.s32.totalorder %s38, 0
      %p484 = por %p482, %p483
      %p485 = scmp.ne.s32.totalorder %s473, %s474
      %p486 = scmp.eq.s32.totalorder %s39, 1
      %p487 = por %p485, %p486
      %p489 = scmp.ne.s32.totalorder %s474, %s488
      %p490 = scmp.eq.s32.totalorder %s39, 0
      %p491 = por %p489, %p490
      %s493 = sadd.s32 %s492, 1
      %p496 = scmp.eq.s32.totalorder %s33, 1
      %p497 = scmp.ne.s32.totalorder %s492, %s494
      %p498 = scmp.eq.s32.totalorder %s33, 0
      %p499 = por %p497, %p498
      %p500 = scmp.ne.s32.totalorder %s492, %s494
      %p501 = scmp.eq.s32.totalorder %s38, 1
      %p502 = por %p500, %p501
      %p503 = scmp.ne.s32.totalorder %s494, %s495
      %p504 = scmp.eq.s32.totalorder %s38, 0
      %p505 = por %p503, %p504
      %p506 = scmp.ne.s32.totalorder %s494, %s495
      %p507 = scmp.eq.s32.totalorder %s39, 1
      %p508 = por %p506, %p507
      %p510 = scmp.ne.s32.totalorder %s495, %s509
      %p511 = scmp.eq.s32.totalorder %s39, 0
      %p512 = por %p510, %p511
      %s513 = ssub.s32 %s33, %s40
      %p514 = scmp.eq.s32.totalorder %s513, 0
      %s516 = sadd.s32 %s515, 1
      %s517 = scalar_select %p514, %s515, %s516
      %p520 = pneg %p514
      %p521 = scmp.eq.s32.totalorder %s33, 1
      %p522 = por %p520, %p521
      %p523 = scmp.ne.s32.totalorder %s515, %s518
      %p524 = scmp.eq.s32.totalorder %s33, 0
      %p525 = por %p523, %p524
      %p526 = scmp.ne.s32.totalorder %s515, %s518
      %p527 = scmp.eq.s32.totalorder %s38, 1
      %p528 = por %p526, %p527
      %p529 = scmp.ne.s32.totalorder %s518, %s519
      %p530 = scmp.eq.s32.totalorder %s38, 0
      %p531 = por %p529, %p530
      %p532 = scmp.ne.s32.totalorder %s518, %s519
      %p533 = scmp.eq.s32.totalorder %s39, 1
      %p534 = por %p532, %p533
      %p536 = scmp.ne.s32.totalorder %s519, %s535
      %p537 = scmp.eq.s32.totalorder %s39, 0
      %p538 = por %p536, %p537
      %p539 = scmp.le.s32.totalorder 1, %s33
      %p540 = scmp.lt.s32.totalorder %s33, 3
      %p541 = pnand %p539, %p540
      %p542 = pneg %p541
      // Predicated region
      $region9: #{roberta_denoiser_forward.1} parent=5 // pred_check
        _
      $region10: #{roberta_denoiser_forward.1} parent=5 // pred_check_branch
        %544 = sbr.rel (%p541) target = $region12
      $region11: #{roberta_denoiser_forward.1} parent=5 // pred_region
        %s545 = ssub.s32 %s33, 1
        // Predicated region
        $region13: #{roberta_denoiser_forward.1} parent=11 // pred_check
          %p546 = pneg %p106
        $region14: #{roberta_denoiser_forward.1} parent=11 // pred_check_branch
          %548 = sbr.rel (%p546) target = $region16
        $region15: #{roberta_denoiser_forward.1} parent=11 // pred_region
          _
        $region16: #{roberta_denoiser_forward.1} parent=11 // pred_fallthru
          _
        // Predicated region
        $region17: #{roberta_denoiser_forward.1} parent=11 // pred_check
          %p549 = pneg %p127
        $region18: #{roberta_denoiser_forward.1} parent=11 // pred_check_branch
          %551 = sbr.rel (%p549) target = $region20
        $region19: #{roberta_denoiser_forward.1} parent=11 // pred_region
          _
        $region20: #{roberta_denoiser_forward.1} parent=11 // pred_fallthru
          _
        // Predicated region
        $region21: #{roberta_denoiser_forward.1} parent=11 // pred_check
          %p552 = pneg %p148
        $region22: #{roberta_denoiser_forward.1} parent=11 // pred_check_branch
          %554 = sbr.rel (%p552) target = $region24
        $region23: #{roberta_denoiser_forward.1} parent=11 // pred_region
          %556 = vsyncadd [#allocation4], 0
          %s557 = sshll.u32 %s4, 4
          %s558 = int_to_ptr.hbm [resolvable:$true] %s557
          %s559 = sshll.u32 [#allocation3], 4
          %s560 = int_to_ptr.vmem [resolvable:$true] %s559
          %565 = dma.hbm_to_vmem [thread:$0]  %s558, 2048, %s560, [#allocation4], 64, 64, 4
        $region24: #{roberta_denoiser_forward.1} parent=11 // pred_fallthru
          _
        // Predicated region
        $region25: #{roberta_denoiser_forward.1} parent=11 // pred_check
          %p566 = pneg %p169
        $region26: #{roberta_denoiser_forward.1} parent=11 // pred_check_branch
          %568 = sbr.rel (%p566) target = $region28
        $region27: #{roberta_denoiser_forward.1} parent=11 // pred_region
          _
        $region28: #{roberta_denoiser_forward.1} parent=11 // pred_fallthru
          _
        // Predicated region
        $region29: #{roberta_denoiser_forward.1} parent=11 // pred_check
          %p569 = pneg %p190
        $region30: #{roberta_denoiser_forward.1} parent=11 // pred_check_branch
          %571 = sbr.rel (%p569) target = $region32
        $region31: #{roberta_denoiser_forward.1} parent=11 // pred_region
          %573 = vsyncadd [#allocation6], 0
          %s574 = sshll.u32 %s6, 4
          %s575 = int_to_ptr.hbm [resolvable:$true] %s574
          %s576 = sshll.u32 [#allocation5], 4
          %s577 = int_to_ptr.vmem [resolvable:$true] %s576
          %582 = dma.hbm_to_vmem [thread:$0]  %s575, 2048, %s577, [#allocation6], 64, 64, 4
        $region32: #{roberta_denoiser_forward.1} parent=11 // pred_fallthru
          _
        // Predicated region
        $region33: #{roberta_denoiser_forward.1} parent=11 // pred_check
          %p583 = pneg %p211
        $region34: #{roberta_denoiser_forward.1} parent=11 // pred_check_branch
          %585 = sbr.rel (%p583) target = $region36
        $region35: #{roberta_denoiser_forward.1} parent=11 // pred_region
          _
        $region36: #{roberta_denoiser_forward.1} parent=11 // pred_fallthru
          _
        // Predicated region
        $region37: #{roberta_denoiser_forward.1} parent=11 // pred_check
          %p586 = pneg %p232
        $region38: #{roberta_denoiser_forward.1} parent=11 // pred_check_branch
          %588 = sbr.rel (%p586) target = $region40
        $region39: #{roberta_denoiser_forward.1} parent=11 // pred_region
          %590 = vsyncadd [#allocation6], 0
          %s591 = sshll.u32 %s8, 4
          %s592 = int_to_ptr.hbm [resolvable:$true] %s591
          %s593 = sshll.u32 [#allocation7], 4
          %s594 = int_to_ptr.vmem [resolvable:$true] %s593
          %599 = dma.hbm_to_vmem [thread:$0]  %s592, 2048, %s594, [#allocation6], 64, 64, 4
        $region40: #{roberta_denoiser_forward.1} parent=11 // pred_fallthru
          _
        // Predicated region
        $region41: #{roberta_denoiser_forward.1} parent=11 // pred_check
          %p600 = pneg %p253
        $region42: #{roberta_denoiser_forward.1} parent=11 // pred_check_branch
          %602 = sbr.rel (%p600) target = $region44
        $region43: #{roberta_denoiser_forward.1} parent=11 // pred_region
          _
        $region44: #{roberta_denoiser_forward.1} parent=11 // pred_fallthru
          _
        // Predicated region
        $region45: #{roberta_denoiser_forward.1} parent=11 // pred_check
          %p603 = pneg %p274
        $region46: #{roberta_denoiser_forward.1} parent=11 // pred_check_branch
          %605 = sbr.rel (%p603) target = $region48
        $region47: #{roberta_denoiser_forward.1} parent=11 // pred_region
          %607 = vsyncadd [#allocation9], 0
          %s608 = sshll.u32 %s10, 4
          %s609 = int_to_ptr.hbm [resolvable:$true] %s608
          %s610 = sshll.u32 [#allocation8], 4
          %s611 = int_to_ptr.vmem [resolvable:$true] %s610
          %616 = dma.hbm_to_vmem [thread:$0]  %s609, 2048, %s611, [#allocation9], 64, 64, 4
        $region48: #{roberta_denoiser_forward.1} parent=11 // pred_fallthru
          _
        // Predicated region
        $region49: #{roberta_denoiser_forward.1} parent=11 // pred_check
          %p617 = pneg %p295
        $region50: #{roberta_denoiser_forward.1} parent=11 // pred_check_branch
          %619 = sbr.rel (%p617) target = $region52
        $region51: #{roberta_denoiser_forward.1} parent=11 // pred_region
          _
        $region52: #{roberta_denoiser_forward.1} parent=11 // pred_fallthru
          _
        // Predicated region
        $region53: #{roberta_denoiser_forward.1} parent=11 // pred_check
          %p620 = pneg %p316
        $region54: #{roberta_denoiser_forward.1} parent=11 // pred_check_branch
          %622 = sbr.rel (%p620) target = $region56
        $region55: #{roberta_denoiser_forward.1} parent=11 // pred_region
          _
        $region56: #{roberta_denoiser_forward.1} parent=11 // pred_fallthru
          _
        // Predicated region
        $region57: #{roberta_denoiser_forward.1} parent=11 // pred_check
          %p623 = pneg %p337
        $region58: #{roberta_denoiser_forward.1} parent=11 // pred_check_branch
          %625 = sbr.rel (%p623) target = $region60
        $region59: #{roberta_denoiser_forward.1} parent=11 // pred_region
          _
        $region60: #{roberta_denoiser_forward.1} parent=11 // pred_fallthru
          _
        // Predicated region
        $region61: #{roberta_denoiser_forward.1} parent=11 // pred_check
          %p626 = pneg %p358
        $region62: #{roberta_denoiser_forward.1} parent=11 // pred_check_branch
          %628 = sbr.rel (%p626) target = $region64
        $region63: #{roberta_denoiser_forward.1} parent=11 // pred_region
          _
        $region64: #{roberta_denoiser_forward.1} parent=11 // pred_fallthru
          _
        // Predicated region
        $region65: #{roberta_denoiser_forward.1} parent=11 // pred_check
          %p629 = pneg %p379
        $region66: #{roberta_denoiser_forward.1} parent=11 // pred_check_branch
          %631 = sbr.rel (%p629) target = $region68
        $region67: #{roberta_denoiser_forward.1} parent=11 // pred_region
          _
        $region68: #{roberta_denoiser_forward.1} parent=11 // pred_fallthru
          _
        // Predicated region
        $region69: #{roberta_denoiser_forward.1} parent=11 // pred_check
          %p632 = pneg %p400
        $region70: #{roberta_denoiser_forward.1} parent=11 // pred_check_branch
          %634 = sbr.rel (%p632) target = $region72
        $region71: #{roberta_denoiser_forward.1} parent=11 // pred_region
          _
        $region72: #{roberta_denoiser_forward.1} parent=11 // pred_fallthru
          _
        // Predicated region
        $region73: #{roberta_denoiser_forward.1} parent=11 // pred_check
          %p635 = pneg %p421
        $region74: #{roberta_denoiser_forward.1} parent=11 // pred_check_branch
          %637 = sbr.rel (%p635) target = $region76
        $region75: #{roberta_denoiser_forward.1} parent=11 // pred_region
          _
        $region76: #{roberta_denoiser_forward.1} parent=11 // pred_fallthru
          _
        // Predicated region
        $region77: #{roberta_denoiser_forward.1} parent=11 // pred_check
          %p638 = pneg %p442
        $region78: #{roberta_denoiser_forward.1} parent=11 // pred_check_branch
          %640 = sbr.rel (%p638) target = $region80
        $region79: #{roberta_denoiser_forward.1} parent=11 // pred_region
          _
        $region80: #{roberta_denoiser_forward.1} parent=11 // pred_fallthru
          _
        // Predicated region
        $region81: #{roberta_denoiser_forward.1} parent=11 // pred_check
          %p641 = pneg %p463
        $region82: #{roberta_denoiser_forward.1} parent=11 // pred_check_branch
          %643 = sbr.rel (%p641) target = $region84
        $region83: #{roberta_denoiser_forward.1} parent=11 // pred_region
          _
        $region84: #{roberta_denoiser_forward.1} parent=11 // pred_fallthru
          _
        // Predicated region
        $region85: #{roberta_denoiser_forward.1} parent=11 // pred_check
          %p644 = pneg %p484
        $region86: #{roberta_denoiser_forward.1} parent=11 // pred_check_branch
          %646 = sbr.rel (%p644) target = $region88
        $region87: #{roberta_denoiser_forward.1} parent=11 // pred_region
          _
        $region88: #{roberta_denoiser_forward.1} parent=11 // pred_fallthru
          _
        // Predicated region
        $region89: #{roberta_denoiser_forward.1} parent=11 // pred_check
          %p647 = pneg %p505
        $region90: #{roberta_denoiser_forward.1} parent=11 // pred_check_branch
          %649 = sbr.rel (%p647) target = $region92
        $region91: #{roberta_denoiser_forward.1} parent=11 // pred_region
          _
        $region92: #{roberta_denoiser_forward.1} parent=11 // pred_fallthru
          _
      $region12: #{roberta_denoiser_forward.1} parent=5 // pred_fallthru
        _
      %p650 = scmp.lt.s32.totalorder %s33, 2
      // Predicated region
      $region93: #{roberta_denoiser_forward.1} parent=5 // pred_check
        %p651 = pneg %p650
      $region94: #{roberta_denoiser_forward.1} parent=5 // pred_check_branch
        %653 = sbr.rel (%p651) target = $region96
      $region95: #{roberta_denoiser_forward.1} parent=5 // pred_region
        // Predicated region
        $region97: #{roberta_denoiser_forward.1} parent=95 // pred_check
          %p654 = pneg %p53
        $region98: #{roberta_denoiser_forward.1} parent=95 // pred_check_branch
          %656 = sbr.rel (%p654) target = $region100
        $region99: #{roberta_denoiser_forward.1} parent=95 // pred_region
          %p657 = scmp.lt.s32.totalorder %s33, 1
          %s658 = scalar_select %p657, %s33, 1
          %s659 = smul.addr %s658, 2
          %s660 = smul.addr %s659, 8
          %s661 = scalar_lea.vmem %s0, %s660
        $region100: #{roberta_denoiser_forward.1} parent=95 // pred_fallthru
          _
        // Predicated region
        $region101: #{roberta_denoiser_forward.1} parent=95 // pred_check
          %p662 = pneg %p79
        $region102: #{roberta_denoiser_forward.1} parent=95 // pred_check_branch
          %664 = sbr.rel (%p662) target = $region104
        $region103: #{roberta_denoiser_forward.1} parent=95 // pred_region
          %p665 = scmp.lt.s32.totalorder %s33, 1
          %s666 = scalar_select %p665, %s33, 1
          %s667 = scalar_lea.vmem %s1, %s666
        $region104: #{roberta_denoiser_forward.1} parent=95 // pred_fallthru
          _
      $region96: #{roberta_denoiser_forward.1} parent=5 // pred_fallthru
        _
      %p668 = scmp.le.s32.totalorder 1, %s33
      %p669 = scmp.lt.s32.totalorder %s33, 3
      %p670 = pnand %p668, %p669
      %p671 = pneg %p670
      // Predicated region
      $region105: #{roberta_denoiser_forward.1} parent=5 // pred_check
        _
      $region106: #{roberta_denoiser_forward.1} parent=5 // pred_check_branch
        %673 = sbr.rel (%p670) target = $region108
      $region107: #{roberta_denoiser_forward.1} parent=5 // pred_region
        %s674 = ssub.s32 %s33, 1
        // Predicated region
        $region109: #{roberta_denoiser_forward.1} parent=107 // pred_check
          %p675 = pneg %p148
        $region110: #{roberta_denoiser_forward.1} parent=107 // pred_check_branch
          %677 = sbr.rel (%p675) target = $region112
        $region111: #{roberta_denoiser_forward.1} parent=107 // pred_region
          %679 = dma.done [#allocation4], 2048
        $region112: #{roberta_denoiser_forward.1} parent=107 // pred_fallthru
          _
        // Predicated region
        $region113: #{roberta_denoiser_forward.1} parent=107 // pred_check
          %p680 = pneg %p190
        $region114: #{roberta_denoiser_forward.1} parent=107 // pred_check_branch
          %682 = sbr.rel (%p680) target = $region116
        $region115: #{roberta_denoiser_forward.1} parent=107 // pred_region
          %684 = dma.done [#allocation6], 2048
        $region116: #{roberta_denoiser_forward.1} parent=107 // pred_fallthru
          _
        // Predicated region
        $region117: #{roberta_denoiser_forward.1} parent=107 // pred_check
          %p685 = pneg %p232
        $region118: #{roberta_denoiser_forward.1} parent=107 // pred_check_branch
          %687 = sbr.rel (%p685) target = $region120
        $region119: #{roberta_denoiser_forward.1} parent=107 // pred_region
          %689 = dma.done [#allocation6], 2048
        $region120: #{roberta_denoiser_forward.1} parent=107 // pred_fallthru
          _
        // Predicated region
        $region121: #{roberta_denoiser_forward.1} parent=107 // pred_check
          %p690 = pneg %p274
        $region122: #{roberta_denoiser_forward.1} parent=107 // pred_check_branch
          %692 = sbr.rel (%p690) target = $region124
        $region123: #{roberta_denoiser_forward.1} parent=107 // pred_region
          %694 = dma.done [#allocation9], 2048
        $region124: #{roberta_denoiser_forward.1} parent=107 // pred_fallthru
          _
        %p695 = scmp.lt.s32.totalorder %s38, 1
        %s696 = scalar_select %p695, %s38, 1
        %s697 = smul.addr %s696, 2
        %s698 = smul.addr %s697, 8
        %s699 = scalar_lea.vmem %s0, %s698
        %p700 = pneg %p59
        %p701 = pneg %p56
        %p702 = scmp.lt.s32.totalorder %s38, 1
        %s703 = scalar_select %p702, %s38, 1
        %s704 = scalar_lea.vmem %s1, %s703
        %p705 = pneg %p85
        %p706 = pneg %p82
        %p707 = pneg %p106
        %p708 = pneg %p103
        %p709 = pneg %p127
        %p710 = pneg %p124
        %p711 = pneg %p148
        %p712 = pneg %p145
        %p713 = pneg %p169
        %p714 = pneg %p166
        %p715 = pneg %p190
        %p716 = pneg %p187
        %p717 = pneg %p211
        %p718 = pneg %p208
        %p719 = pneg %p232
        %p720 = pneg %p229
        %p721 = pneg %p253
        %p722 = pneg %p250
        %p723 = pneg %p274
        %p724 = pneg %p271
        %p725 = pneg %p295
        %p726 = pneg %p292
        %p727 = pneg %p316
        %p728 = pneg %p313
        %p729 = pneg %p337
        %p730 = pneg %p334
        %p731 = pneg %p358
        %p732 = pneg %p355
        %p733 = pneg %p379
        %p734 = pneg %p376
        %p735 = pneg %p400
        %p736 = pneg %p397
        %p737 = pneg %p421
        %p738 = pneg %p418
        %p739 = pneg %p442
        %p740 = pneg %p439
        %p741 = pneg %p463
        %p742 = pneg %p460
        %p743 = pneg %p484
        %p744 = pneg %p481
        %p745 = pneg %p505
        %p746 = pneg %p502
        %p747 = pneg %p531
        %p748 = pneg %p528
        %p749 = scmp.lt.s32.totalorder %s38, 1
        %s750 = scalar_select %p749, %s38, 1
        %s751 = scalar_lea.vmem %s22, %s750
        %p752 = scmp.lt.s32.totalorder %s38, 1
        %s753 = scalar_select %p752, %s38, 1
        %s754 = smul.addr %s753, 2
        %s755 = smul.addr %s754, 8
        %s756 = scalar_lea.vmem %s0, %s755
        %p757 = scmp.lt.s32.totalorder %s38, 1
        %s758 = scalar_select %p757, %s38, 1
        %s759 = scalar_lea.vmem %s1, %s758
        %p760 = scmp.lt.s32.totalorder %s38, 1
        %s761 = scalar_select %p760, %s38, 1
        %s762 = scalar_lea.vmem %s22, %s761
        %v763 = vld [vmem:[%s756] sm:$0xff]
        %v764 = vld [vmem:[%s756 + $0x8] sm:$0xff]
        %v765 = vld [vmem:[%s759] sm:$0x1]
        %v766 = vlaneseq
        %v767 = vand.u32 %v766, 127
        %vm768 = vcmp.ge.s32.totalorder %v767, 0
        %vm769 = vcmp.lt.s32.totalorder %v767, 64
        %vm770 = vmand %vm768, %vm769
        %v771 = vsel %vm770, 1, 0
        %v772 = vcvt.s32.f32 %v771
        %vm773 = vcmp.ge.s32.totalorder %v767, 64
        %vm774 = vcmp.lt.s32.totalorder %v767, 128
        %vm775 = vmand %vm773, %vm774
        %v776 = vsel %vm775, 1, 0
        %v777 = vcvt.s32.f32 %v776
        %v778 = vld [vmem:[%s2] sm:$0x1]
        %v779 = vld [vmem:[%s3] sm:$0x1]
        %780 = vadd.xlane.f32.xlu0 %v763
        %v781 = vpop.xlane.xlu0 %780
        %782 = vadd.xlane.f32.xlu0 %v764
        %v783 = vpop.xlane.xlu0 %782
        %v784 = vrcp.pop 128.0
        %v785 = vmul.f32 128.0, %v784
        %v786 = vsub.f32 1.0, %v785
        %v787 = vmul.f32 %v784, %v786
        %v788 = vadd.f32 %v784, %v787
        %vm789 = vweird.f32 %v784
        %v790 = vsel %vm789, %v784, %v788
        %v791 = vmul.f32 %v781, %v790
        %v792 = vmul.f32 %v783, %v790
        %v793 = vsub.f32 %v763, %v791
        %v794 = vsub.f32 %v764, %v792
        %v795 = vmul.f32 %v793, %v793
        %v796 = vmul.f32 %v794, %v794
        %797 = vadd.xlane.f32.xlu0 %v795
        %v798 = vpop.xlane.xlu0 %797
        %799 = vadd.xlane.f32.xlu0 %v796
        %v800 = vpop.xlane.xlu0 %799
        %v801 = vmul.f32 %v798, %v790
        %v802 = vmul.f32 %v800, %v790
        %v803 = vadd.f32 %v801, 1e-05
        %v804 = vadd.f32 %v802, 1e-05
        %v805 = vrsqrt.pop %v803
        %v806 = vmul.f32 %v805, %v803
        %v807 = vmul.f32 %v806, %v805
        %v808 = vmul.f32 0.5, %v807
        %v809 = vsub.f32 1.5, %v808
        %v810 = vmul.f32 %v805, %v809
        %vm811 = vweird.f32 %v803
        %vm812 = vweird.f32 %v805
        %vm813 = vmor %vm811, %vm812
        %v814 = vsel %vm813, %v805, %v810
        %v815 = vrsqrt.pop %v804
        %v816 = vmul.f32 %v815, %v804
        %v817 = vmul.f32 %v816, %v815
        %v818 = vmul.f32 0.5, %v817
        %v819 = vsub.f32 1.5, %v818
        %v820 = vmul.f32 %v815, %v819
        %vm821 = vweird.f32 %v804
        %vm822 = vweird.f32 %v815
        %vm823 = vmor %vm821, %vm822
        %v824 = vsel %vm823, %v815, %v820
        %v825 = vmul.f32 %v793, %v814
        %v826 = vmul.f32 %v794, %v824
        %v828 = vperm.slane %v778, 0
        %v830 = vmul.f32 %v825, %v828
        %v831 = vmul.f32 %v826, %v828
        %v833 = vperm.slane %v779, 0
        %v835 = vadd.f32 %v830, %v833
        %v836 = vadd.f32 %v831, %v833
        %v837 = vpack.c.bf16 %v836, %v835
        %v838 = vld [vmem:[#allocation3] sm:$0xf]
        %v839 = vld [vmem:[#allocation3 + $0x4] sm:$0xf]
        %v840 = vld [vmem:[#allocation3 + $0x8] sm:$0xf]
        %v841 = vld [vmem:[#allocation3 + $0xc] sm:$0xf]
        %v842 = vld [vmem:[#allocation3 + $0x10] sm:$0xf]
        %v843 = vld [vmem:[#allocation3 + $0x14] sm:$0xf]
        %v844 = vld [vmem:[#allocation3 + $0x18] sm:$0xf]
        %v845 = vld [vmem:[#allocation3 + $0x1c] sm:$0xf]
        %v846 = vld [vmem:[#allocation3 + $0x20] sm:$0xf]
        %v847 = vld [vmem:[#allocation3 + $0x24] sm:$0xf]
        %v848 = vld [vmem:[#allocation3 + $0x28] sm:$0xf]
        %v849 = vld [vmem:[#allocation3 + $0x2c] sm:$0xf]
        %v850 = vld [vmem:[#allocation3 + $0x30] sm:$0xf]
        %v851 = vld [vmem:[#allocation3 + $0x34] sm:$0xf]
        %v852 = vld [vmem:[#allocation3 + $0x38] sm:$0xf]
        %v853 = vld [vmem:[#allocation3 + $0x3c] sm:$0xf]
        %v854 = vld [vmem:[%s5] sm:$0x1]
        %v856 = vperm.slane %v854, 0
        %v874 = vunpack.c.l.b16 %v838
        %v875 = vunpack.c.l.b16 %v839
        %v876 = vunpack.c.l.b16 %v840
        %v877 = vunpack.c.l.b16 %v841
        %v878 = vunpack.c.l.b16 %v842
        %v879 = vunpack.c.l.b16 %v843
        %v880 = vunpack.c.l.b16 %v844
        %v881 = vunpack.c.l.b16 %v845
        %v882 = vunpack.c.l.b16 %v846
        %v883 = vunpack.c.l.b16 %v847
        %v884 = vunpack.c.l.b16 %v848
        %v885 = vunpack.c.l.b16 %v849
        %v886 = vunpack.c.l.b16 %v850
        %v887 = vunpack.c.l.b16 %v851
        %v888 = vunpack.c.l.b16 %v852
        %v889 = vunpack.c.l.b16 %v853
        %v890 = vpack.c.b16 %v875, %v874
        %v891 = vpack.c.b16 %v877, %v876
        %v892 = vpack.c.b16 %v879, %v878
        %v893 = vpack.c.b16 %v881, %v880
        %v894 = vpack.c.b16 %v883, %v882
        %v895 = vpack.c.b16 %v885, %v884
        %v896 = vpack.c.b16 %v887, %v886
        %v897 = vpack.c.b16 %v889, %v888
        %906 = vmatpush.bf16.msra.mxu0 %v897
        %907 = vmatpush.bf16.msra.mxu0 %v896
        %908 = vmatpush.bf16.msra.mxu0 %v895
        %909 = vmatpush.bf16.msra.mxu0 %v894
        %910 = vmatpush.bf16.msra.mxu0 %v893
        %911 = vmatpush.bf16.msra.mxu0 %v892
        %912 = vmatpush.bf16.msra.mxu0 %v891
        %913 = vmatpush.bf16.msra.mxu0 %v890
        %914 = vmatmul.bf16.gmra.mxu0 %v837
        %v915 = vpop.f32.mrf.mxu0
        %v916 = vadd.f32 %v856, %v915
        %v917 = vpop.f32.mrf.mxu0
        %v918 = vadd.f32 %v856, %v917
        %919 = vdwg.mxu0
        %v920 = vld [vmem:[#allocation5] sm:$0xf]
        %v921 = vld [vmem:[#allocation5 + $0x4] sm:$0xf]
        %v922 = vld [vmem:[#allocation5 + $0x8] sm:$0xf]
        %v923 = vld [vmem:[#allocation5 + $0xc] sm:$0xf]
        %v924 = vld [vmem:[#allocation5 + $0x10] sm:$0xf]
        %v925 = vld [vmem:[#allocation5 + $0x14] sm:$0xf]
        %v926 = vld [vmem:[#allocation5 + $0x18] sm:$0xf]
        %v927 = vld [vmem:[#allocation5 + $0x1c] sm:$0xf]
        %v928 = vld [vmem:[#allocation5 + $0x20] sm:$0xf]
        %v929 = vld [vmem:[#allocation5 + $0x24] sm:$0xf]
        %v930 = vld [vmem:[#allocation5 + $0x28] sm:$0xf]
        %v931 = vld [vmem:[#allocation5 + $0x2c] sm:$0xf]
        %v932 = vld [vmem:[#allocation5 + $0x30] sm:$0xf]
        %v933 = vld [vmem:[#allocation5 + $0x34] sm:$0xf]
        %v934 = vld [vmem:[#allocation5 + $0x38] sm:$0xf]
        %v935 = vld [vmem:[#allocation5 + $0x3c] sm:$0xf]
        %v936 = vld [vmem:[%s7] sm:$0x1]
        %v938 = vperm.slane %v936, 0
        %v956 = vunpack.c.l.b16 %v920
        %v957 = vunpack.c.l.b16 %v921
        %v958 = vunpack.c.l.b16 %v922
        %v959 = vunpack.c.l.b16 %v923
        %v960 = vunpack.c.l.b16 %v924
        %v961 = vunpack.c.l.b16 %v925
        %v962 = vunpack.c.l.b16 %v926
        %v963 = vunpack.c.l.b16 %v927
        %v964 = vunpack.c.l.b16 %v928
        %v965 = vunpack.c.l.b16 %v929
        %v966 = vunpack.c.l.b16 %v930
        %v967 = vunpack.c.l.b16 %v931
        %v968 = vunpack.c.l.b16 %v932
        %v969 = vunpack.c.l.b16 %v933
        %v970 = vunpack.c.l.b16 %v934
        %v971 = vunpack.c.l.b16 %v935
        %v972 = vpack.c.b16 %v957, %v956
        %v973 = vpack.c.b16 %v959, %v958
        %v974 = vpack.c.b16 %v961, %v960
        %v975 = vpack.c.b16 %v963, %v962
        %v976 = vpack.c.b16 %v965, %v964
        %v977 = vpack.c.b16 %v967, %v966
        %v978 = vpack.c.b16 %v969, %v968
        %v979 = vpack.c.b16 %v971, %v970
        %988 = vmatpush.bf16.msra.mxu0 %v979
        %989 = vmatpush.bf16.msra.mxu0 %v978
        %990 = vmatpush.bf16.msra.mxu0 %v977
        %991 = vmatpush.bf16.msra.mxu0 %v976
        %992 = vmatpush.bf16.msra.mxu0 %v975
        %993 = vmatpush.bf16.msra.mxu0 %v974
        %994 = vmatpush.bf16.msra.mxu0 %v973
        %995 = vmatpush.bf16.msra.mxu0 %v972
        %996 = vmatmul.bf16.gmra.mxu0 %v837
        %v997 = vpop.f32.mrf.mxu0
        %v998 = vadd.f32 %v938, %v997
        %v999 = vpop.f32.mrf.mxu0
        %v1000 = vadd.f32 %v938, %v999
        %1001 = vdwg.mxu0
        %v1002 = vld [vmem:[#allocation7] sm:$0xf]
        %v1003 = vld [vmem:[#allocation7 + $0x4] sm:$0xf]
        %v1004 = vld [vmem:[#allocation7 + $0x8] sm:$0xf]
        %v1005 = vld [vmem:[#allocation7 + $0xc] sm:$0xf]
        %v1006 = vld [vmem:[#allocation7 + $0x10] sm:$0xf]
        %v1007 = vld [vmem:[#allocation7 + $0x14] sm:$0xf]
        %v1008 = vld [vmem:[#allocation7 + $0x18] sm:$0xf]
        %v1009 = vld [vmem:[#allocation7 + $0x1c] sm:$0xf]
        %v1010 = vld [vmem:[#allocation7 + $0x20] sm:$0xf]
        %v1011 = vld [vmem:[#allocation7 + $0x24] sm:$0xf]
        %v1012 = vld [vmem:[#allocation7 + $0x28] sm:$0xf]
        %v1013 = vld [vmem:[#allocation7 + $0x2c] sm:$0xf]
        %v1014 = vld [vmem:[#allocation7 + $0x30] sm:$0xf]
        %v1015 = vld [vmem:[#allocation7 + $0x34] sm:$0xf]
        %v1016 = vld [vmem:[#allocation7 + $0x38] sm:$0xf]
        %v1017 = vld [vmem:[#allocation7 + $0x3c] sm:$0xf]
        %v1018 = vld [vmem:[%s9] sm:$0x1]
        %v1020 = vperm.slane %v1018, 0
        %v1038 = vunpack.c.l.b16 %v1002
        %v1039 = vunpack.c.l.b16 %v1003
        %v1040 = vunpack.c.l.b16 %v1004
        %v1041 = vunpack.c.l.b16 %v1005
        %v1042 = vunpack.c.l.b16 %v1006
        %v1043 = vunpack.c.l.b16 %v1007
        %v1044 = vunpack.c.l.b16 %v1008
        %v1045 = vunpack.c.l.b16 %v1009
        %v1046 = vunpack.c.l.b16 %v1010
        %v1047 = vunpack.c.l.b16 %v1011
        %v1048 = vunpack.c.l.b16 %v1012
        %v1049 = vunpack.c.l.b16 %v1013
        %v1050 = vunpack.c.l.b16 %v1014
        %v1051 = vunpack.c.l.b16 %v1015
        %v1052 = vunpack.c.l.b16 %v1016
        %v1053 = vunpack.c.l.b16 %v1017
        %v1054 = vpack.c.b16 %v1039, %v1038
        %v1055 = vpack.c.b16 %v1041, %v1040
        %v1056 = vpack.c.b16 %v1043, %v1042
        %v1057 = vpack.c.b16 %v1045, %v1044
        %v1058 = vpack.c.b16 %v1047, %v1046
        %v1059 = vpack.c.b16 %v1049, %v1048
        %v1060 = vpack.c.b16 %v1051, %v1050
        %v1061 = vpack.c.b16 %v1053, %v1052
        %1070 = vmatpush.bf16.msra.mxu0 %v1061
        %1071 = vmatpush.bf16.msra.mxu0 %v1060
        %1072 = vmatpush.bf16.msra.mxu0 %v1059
        %1073 = vmatpush.bf16.msra.mxu0 %v1058
        %1074 = vmatpush.bf16.msra.mxu0 %v1057
        %1075 = vmatpush.bf16.msra.mxu0 %v1056
        %1076 = vmatpush.bf16.msra.mxu0 %v1055
        %1077 = vmatpush.bf16.msra.mxu0 %v1054
        %1078 = vmatmul.bf16.gmra.mxu0 %v837
        %v1079 = vpop.f32.mrf.mxu0
        %v1080 = vadd.f32 %v1020, %v1079
        %v1081 = vpop.f32.mrf.mxu0
        %v1082 = vadd.f32 %v1020, %v1081
        %1083 = vdwg.mxu0
        %v1084 = vmul.f32 %v916, %v772
        %v1085 = vmul.f32 %v918, %v772
        %v1086 = vmul.f32 %v1080, %v772
        %v1087 = vmul.f32 %v1082, %v772
        %1088 = vmatpush.xpose.msra.mxu0 0.0
        %1089 = vmatpush.xpose.msra.mxu0 0.0
        %1090 = vmatpush.xpose.msra.mxu0 0.0
        %1091 = vmatpush.xpose.msra.mxu0 0.0
        %1092 = vmatpush.xpose.msra.mxu0 0.0
        %1093 = vmatpush.xpose.msra.mxu0 0.0
        %1094 = vmatpush.xpose.msra.mxu0 0.0
        %1095 = vmatpush.xpose.msra.mxu0 0.0
        %1096 = vmatpush.xpose.msra.mxu0 0.0
        %1097 = vmatpush.xpose.msra.mxu0 0.0
        %1098 = vmatpush.xpose.msra.mxu0 0.0
        %1099 = vmatpush.xpose.msra.mxu0 0.0
        %1100 = vmatpush.xpose.msra.mxu0 0.0
        %1101 = vmatpush.xpose.msra.mxu0 0.0
        %1102 = vmatpush.xpose.msra.mxu0 %v1000
        %1103 = vmatpush.xpose.msra.mxu0 %v998
        %1104 = vmatmul.f32.gmra.mxu0 %v1084
        %v1105 = vpop.f32.mrf.mxu0
        %v1106 = vadd.f32 0.0, %v1105
        %1107 = vmatmul.f32.gmra.mxu0 %v1085
        %v1108 = vpop.f32.mrf.mxu0
        %v1109 = vadd.f32 0.0, %v1108
        %1110 = vdwg.mxu0
        %v1111 = vmul.f32 %v1106, 0.125
        %v1112 = vmul.f32 %v1109, 0.125
        %v1114 = vperm.slane %v765, 0
        %v1116 = vadd.f32 %v1111, %v1114
        %v1117 = vadd.f32 %v1112, %v1114
        %vm1118 = vcmask 130048
        %v1119 = vsel %vm1118, %v1116, -inf
        %1120 = vmax.xlane.f32.xlu0 %v1119
        %v1121 = vpop.xlane.xlu0 %1120
        %v1122 = vsel %vm1118, %v1117, -inf
        %1123 = vmax.xlane.f32.xlu0 %v1122
        %v1124 = vpop.xlane.xlu0 %1123
        %v1125 = vsub.f32 %v1116, %v1121
        %v1126 = vsub.f32 %v1117, %v1124
        %v1127 = vmul.f32 %v1125, 1.442695
        %v1128 = vpow.pop %v1127
        %v1129 = vmul.f32 %v1126, 1.442695
        %v1130 = vpow.pop %v1129
        %v1131 = vsel %vm1118, %v1128, 0.0
        %1132 = vadd.xlane.f32.xlu0 %v1131
        %v1133 = vpop.xlane.xlu0 %1132
        %v1134 = vsel %vm1118, %v1130, 0.0
        %1135 = vadd.xlane.f32.xlu0 %v1134
        %v1136 = vpop.xlane.xlu0 %1135
        %v1137 = vrcp.pop %v1133
        %v1138 = vrcp.pop %v1136
        %v1139 = vmul.f32 %v1128, %v1137
        %v1140 = vmul.f32 %v1130, %v1138
        %v1141 = vmul.f32 %v916, %v777
        %v1142 = vmul.f32 %v918, %v777
        %v1143 = vmul.f32 %v1080, %v777
        %v1144 = vmul.f32 %v1082, %v777
        %1145 = vmatpush.xpose.msra.mxu0 0.0
        %1146 = vmatpush.xpose.msra.mxu0 0.0
        %1147 = vmatpush.xpose.msra.mxu0 0.0
        %1148 = vmatpush.xpose.msra.mxu0 0.0
        %1149 = vmatpush.xpose.msra.mxu0 0.0
        %1150 = vmatpush.xpose.msra.mxu0 0.0
        %1151 = vmatpush.xpose.msra.mxu0 0.0
        %1152 = vmatpush.xpose.msra.mxu0 0.0
        %1153 = vmatpush.xpose.msra.mxu0 0.0
        %1154 = vmatpush.xpose.msra.mxu0 0.0
        %1155 = vmatpush.xpose.msra.mxu0 0.0
        %1156 = vmatpush.xpose.msra.mxu0 0.0
        %1157 = vmatpush.xpose.msra.mxu0 0.0
        %1158 = vmatpush.xpose.msra.mxu0 0.0
        %1159 = vmatpush.xpose.msra.mxu0 %v1000
        %1160 = vmatpush.xpose.msra.mxu0 %v998
        %1161 = vmatmul.f32.gmra.mxu0 %v1141
        %v1162 = vpop.f32.mrf.mxu0
        %v1163 = vadd.f32 0.0, %v1162
        %1164 = vmatmul.f32.gmra.mxu0 %v1142
        %v1165 = vpop.f32.mrf.mxu0
        %v1166 = vadd.f32 0.0, %v1165
        %1167 = vdwg.mxu0
        %v1168 = vmul.f32 %v1163, 0.125
        %v1169 = vmul.f32 %v1166, 0.125
        %v1170 = vadd.f32 %v1168, %v1114
        %v1171 = vadd.f32 %v1169, %v1114
        %v1172 = vsel %vm1118, %v1170, -inf
        %1173 = vmax.xlane.f32.xlu0 %v1172
        %v1174 = vpop.xlane.xlu0 %1173
        %v1175 = vsel %vm1118, %v1171, -inf
        %1176 = vmax.xlane.f32.xlu0 %v1175
        %v1177 = vpop.xlane.xlu0 %1176
        %v1178 = vsub.f32 %v1170, %v1174
        %v1179 = vsub.f32 %v1171, %v1177
        %v1180 = vmul.f32 %v1178, 1.442695
        %v1181 = vpow.pop %v1180
        %v1182 = vmul.f32 %v1179, 1.442695
        %v1183 = vpow.pop %v1182
        %v1184 = vsel %vm1118, %v1181, 0.0
        %1185 = vadd.xlane.f32.xlu0 %v1184
        %v1186 = vpop.xlane.xlu0 %1185
        %v1187 = vsel %vm1118, %v1183, 0.0
        %1188 = vadd.xlane.f32.xlu0 %v1187
        %v1189 = vpop.xlane.xlu0 %1188
        %v1190 = vrcp.pop %v1186
        %v1191 = vrcp.pop %v1189
        %v1192 = vmul.f32 %v1181, %v1190
        %v1193 = vmul.f32 %v1183, %v1191
        %v1195 = vsel %vm1118, %v1192, 0
        %v1198 = vsel %vm1118, %v1193, 0
        %1200 = vmatpush.msra.mxu0 0.0
        %1201 = vmatpush.msra.mxu0 0.0
        %1202 = vmatpush.msra.mxu0 0.0
        %1203 = vmatpush.msra.mxu0 0.0
        %1204 = vmatpush.msra.mxu0 0.0
        %1205 = vmatpush.msra.mxu0 0.0
        %1206 = vmatpush.msra.mxu0 0.0
        %1207 = vmatpush.msra.mxu0 0.0
        %1208 = vmatpush.msra.mxu0 0.0
        %1209 = vmatpush.msra.mxu0 0.0
        %1210 = vmatpush.msra.mxu0 0.0
        %1211 = vmatpush.msra.mxu0 0.0
        %1212 = vmatpush.msra.mxu0 0.0
        %1213 = vmatpush.msra.mxu0 0.0
        %1214 = vmatpush.msra.mxu0 %v1144
        %1215 = vmatpush.msra.mxu0 %v1143
        %1216 = vmatmul.f32.gmra.mxu0 %v1195
        %v1217 = vpop.f32.mrf.mxu0
        %v1218 = vadd.f32 0.0, %v1217
        %1219 = vmatmul.f32.gmra.mxu0 %v1198
        %v1220 = vpop.f32.mrf.mxu0
        %v1221 = vadd.f32 0.0, %v1220
        %1222 = vdwg.mxu0
        %v1224 = vsel %vm1118, %v1139, 0
        %v1227 = vsel %vm1118, %v1140, 0
        %1229 = vmatpush.msra.mxu0 0.0
        %1230 = vmatpush.msra.mxu0 0.0
        %1231 = vmatpush.msra.mxu0 0.0
        %1232 = vmatpush.msra.mxu0 0.0
        %1233 = vmatpush.msra.mxu0 0.0
        %1234 = vmatpush.msra.mxu0 0.0
        %1235 = vmatpush.msra.mxu0 0.0
        %1236 = vmatpush.msra.mxu0 0.0
        %1237 = vmatpush.msra.mxu0 0.0
        %1238 = vmatpush.msra.mxu0 0.0
        %1239 = vmatpush.msra.mxu0 0.0
        %1240 = vmatpush.msra.mxu0 0.0
        %1241 = vmatpush.msra.mxu0 0.0
        %1242 = vmatpush.msra.mxu0 0.0
        %1243 = vmatpush.msra.mxu0 %v1087
        %1244 = vmatpush.msra.mxu0 %v1086
        %1245 = vmatmul.f32.gmra.mxu0 %v1224
        %v1246 = vpop.f32.mrf.mxu0
        %v1247 = vadd.f32 %v1218, %v1246
        %1248 = vmatmul.f32.gmra.mxu0 %v1227
        %v1249 = vpop.f32.mrf.mxu0
        %v1250 = vadd.f32 %v1221, %v1249
        %1251 = vdwg.mxu0
        %v1252 = vpack.c.bf16 %v1250, %v1247
        %v1253 = vld [vmem:[#allocation8] sm:$0xf]
        %v1254 = vld [vmem:[#allocation8 + $0x4] sm:$0xf]
        %v1255 = vld [vmem:[#allocation8 + $0x8] sm:$0xf]
        %v1256 = vld [vmem:[#allocation8 + $0xc] sm:$0xf]
        %v1257 = vld [vmem:[#allocation8 + $0x10] sm:$0xf]
        %v1258 = vld [vmem:[#allocation8 + $0x14] sm:$0xf]
        %v1259 = vld [vmem:[#allocation8 + $0x18] sm:$0xf]
        %v1260 = vld [vmem:[#allocation8 + $0x1c] sm:$0xf]
        %v1261 = vld [vmem:[#allocation8 + $0x20] sm:$0xf]
        %v1262 = vld [vmem:[#allocation8 + $0x24] sm:$0xf]
        %v1263 = vld [vmem:[#allocation8 + $0x28] sm:$0xf]
        %v1264 = vld [vmem:[#allocation8 + $0x2c] sm:$0xf]
        %v1265 = vld [vmem:[#allocation8 + $0x30] sm:$0xf]
        %v1266 = vld [vmem:[#allocation8 + $0x34] sm:$0xf]
        %v1267 = vld [vmem:[#allocation8 + $0x38] sm:$0xf]
        %v1268 = vld [vmem:[#allocation8 + $0x3c] sm:$0xf]
        %v1269 = vld [vmem:[%s11] sm:$0x1]
        %v1271 = vperm.slane %v1269, 0
        %v1289 = vunpack.c.l.b16 %v1253
        %v1290 = vunpack.c.l.b16 %v1254
        %v1291 = vunpack.c.l.b16 %v1255
        %v1292 = vunpack.c.l.b16 %v1256
        %v1293 = vunpack.c.l.b16 %v1257
        %v1294 = vunpack.c.l.b16 %v1258
        %v1295 = vunpack.c.l.b16 %v1259
        %v1296 = vunpack.c.l.b16 %v1260
        %v1297 = vunpack.c.l.b16 %v1261
        %v1298 = vunpack.c.l.b16 %v1262
        %v1299 = vunpack.c.l.b16 %v1263
        %v1300 = vunpack.c.l.b16 %v1264
        %v1301 = vunpack.c.l.b16 %v1265
        %v1302 = vunpack.c.l.b16 %v1266
        %v1303 = vunpack.c.l.b16 %v1267
        %v1304 = vunpack.c.l.b16 %v1268
        %v1305 = vpack.c.b16 %v1290, %v1289
        %v1306 = vpack.c.b16 %v1292, %v1291
        %v1307 = vpack.c.b16 %v1294, %v1293
        %v1308 = vpack.c.b16 %v1296, %v1295
        %v1309 = vpack.c.b16 %v1298, %v1297
        %v1310 = vpack.c.b16 %v1300, %v1299
        %v1311 = vpack.c.b16 %v1302, %v1301
        %v1312 = vpack.c.b16 %v1304, %v1303
        %1321 = vmatpush.bf16.msra.mxu0 %v1312
        %1322 = vmatpush.bf16.msra.mxu0 %v1311
        %1323 = vmatpush.bf16.msra.mxu0 %v1310
        %1324 = vmatpush.bf16.msra.mxu0 %v1309
        %1325 = vmatpush.bf16.msra.mxu0 %v1308
        %1326 = vmatpush.bf16.msra.mxu0 %v1307
        %1327 = vmatpush.bf16.msra.mxu0 %v1306
        %1328 = vmatpush.bf16.msra.mxu0 %v1305
        %1329 = vmatmul.bf16.gmra.mxu0 %v1252
        %v1330 = vpop.f32.mrf.mxu0
        %v1331 = vadd.f32 %v1271, %v1330
        %v1332 = vpop.f32.mrf.mxu0
        %v1333 = vadd.f32 %v1271, %v1332
        %1334 = vdwg.mxu0
        %v1335 = vadd.f32 %v835, %v1331
        %v1336 = vadd.f32 %v836, %v1333
        %v1337 = vld [vmem:[%s12] sm:$0x1]
        %v1338 = vld [vmem:[%s13] sm:$0x1]
        %1339 = vadd.xlane.f32.xlu0 %v1335
        %v1340 = vpop.xlane.xlu0 %1339
        %1341 = vadd.xlane.f32.xlu0 %v1336
        %v1342 = vpop.xlane.xlu0 %1341
        %v1343 = vmul.f32 %v1340, %v790
        %v1344 = vmul.f32 %v1342, %v790
        %v1345 = vsub.f32 %v1335, %v1343
        %v1346 = vsub.f32 %v1336, %v1344
        %v1347 = vmul.f32 %v1345, %v1345
        %v1348 = vmul.f32 %v1346, %v1346
        %1349 = vadd.xlane.f32.xlu0 %v1347
        %v1350 = vpop.xlane.xlu0 %1349
        %1351 = vadd.xlane.f32.xlu0 %v1348
        %v1352 = vpop.xlane.xlu0 %1351
        %v1353 = vmul.f32 %v1350, %v790
        %v1354 = vmul.f32 %v1352, %v790
        %v1355 = vadd.f32 %v1353, 1e-05
        %v1356 = vadd.f32 %v1354, 1e-05
        %v1357 = vrsqrt.pop %v1355
        %v1358 = vmul.f32 %v1357, %v1355
        %v1359 = vmul.f32 %v1358, %v1357
        %v1360 = vmul.f32 0.5, %v1359
        %v1361 = vsub.f32 1.5, %v1360
        %v1362 = vmul.f32 %v1357, %v1361
        %vm1363 = vweird.f32 %v1355
        %vm1364 = vweird.f32 %v1357
        %vm1365 = vmor %vm1363, %vm1364
        %v1366 = vsel %vm1365, %v1357, %v1362
        %v1367 = vrsqrt.pop %v1356
        %v1368 = vmul.f32 %v1367, %v1356
        %v1369 = vmul.f32 %v1368, %v1367
        %v1370 = vmul.f32 0.5, %v1369
        %v1371 = vsub.f32 1.5, %v1370
        %v1372 = vmul.f32 %v1367, %v1371
        %vm1373 = vweird.f32 %v1356
        %vm1374 = vweird.f32 %v1367
        %vm1375 = vmor %vm1373, %vm1374
        %v1376 = vsel %vm1375, %v1367, %v1372
        %v1377 = vmul.f32 %v1345, %v1366
        %v1378 = vmul.f32 %v1346, %v1376
        %v1380 = vperm.slane %v1337, 0
        %v1382 = vmul.f32 %v1377, %v1380
        %v1383 = vmul.f32 %v1378, %v1380
        %v1385 = vperm.slane %v1338, 0
        %v1387 = vadd.f32 %v1382, %v1385
        %v1388 = vadd.f32 %v1383, %v1385
        %v1389 = vpack.c.bf16 %v1388, %v1387
        %v1390 = vld [vmem:[%s14] sm:$0xff]
        %v1391 = vld [vmem:[%s14 + $0x8] sm:$0xff]
        %v1392 = vld [vmem:[%s14 + $0x10] sm:$0xff]
        %v1393 = vld [vmem:[%s14 + $0x18] sm:$0xff]
        %v1394 = vld [vmem:[%s14 + $0x20] sm:$0xff]
        %v1395 = vld [vmem:[%s14 + $0x28] sm:$0xff]
        %v1396 = vld [vmem:[%s14 + $0x30] sm:$0xff]
        %v1397 = vld [vmem:[%s14 + $0x38] sm:$0xff]
        %v1398 = vld [vmem:[%s14 + $0x40] sm:$0xff]
        %v1399 = vld [vmem:[%s14 + $0x48] sm:$0xff]
        %v1400 = vld [vmem:[%s14 + $0x50] sm:$0xff]
        %v1401 = vld [vmem:[%s14 + $0x58] sm:$0xff]
        %v1402 = vld [vmem:[%s14 + $0x60] sm:$0xff]
        %v1403 = vld [vmem:[%s14 + $0x68] sm:$0xff]
        %v1404 = vld [vmem:[%s14 + $0x70] sm:$0xff]
        %v1405 = vld [vmem:[%s14 + $0x78] sm:$0xff]
        %v1406 = vld [vmem:[%s15] sm:$0x3]
        %v1408 = vperm.slane %v1406, 0
        %v1409 = vperm.slane %v1406, 1
        %v1428 = vunpack.c.l.b16 %v1390
        %v1429 = vunpack.c.h.b16 %v1390
        %v1430 = vunpack.c.l.b16 %v1391
        %v1431 = vunpack.c.h.b16 %v1391
        %v1432 = vunpack.c.l.b16 %v1392
        %v1433 = vunpack.c.h.b16 %v1392
        %v1434 = vunpack.c.l.b16 %v1393
        %v1435 = vunpack.c.h.b16 %v1393
        %v1436 = vunpack.c.l.b16 %v1394
        %v1437 = vunpack.c.h.b16 %v1394
        %v1438 = vunpack.c.l.b16 %v1395
        %v1439 = vunpack.c.h.b16 %v1395
        %v1440 = vunpack.c.l.b16 %v1396
        %v1441 = vunpack.c.h.b16 %v1396
        %v1442 = vunpack.c.l.b16 %v1397
        %v1443 = vunpack.c.h.b16 %v1397
        %v1444 = vunpack.c.l.b16 %v1398
        %v1445 = vunpack.c.h.b16 %v1398
        %v1446 = vunpack.c.l.b16 %v1399
        %v1447 = vunpack.c.h.b16 %v1399
        %v1448 = vunpack.c.l.b16 %v1400
        %v1449 = vunpack.c.h.b16 %v1400
        %v1450 = vunpack.c.l.b16 %v1401
        %v1451 = vunpack.c.h.b16 %v1401
        %v1452 = vunpack.c.l.b16 %v1402
        %v1453 = vunpack.c.h.b16 %v1402
        %v1454 = vunpack.c.l.b16 %v1403
        %v1455 = vunpack.c.h.b16 %v1403
        %v1456 = vunpack.c.l.b16 %v1404
        %v1457 = vunpack.c.h.b16 %v1404
        %v1458 = vunpack.c.l.b16 %v1405
        %v1459 = vunpack.c.h.b16 %v1405
        %v1460 = vpack.c.b16 %v1430, %v1428
        %v1461 = vpack.c.b16 %v1431, %v1429
        %v1462 = vpack.c.b16 %v1434, %v1432
        %v1463 = vpack.c.b16 %v1435, %v1433
        %v1464 = vpack.c.b16 %v1438, %v1436
        %v1465 = vpack.c.b16 %v1439, %v1437
        %v1466 = vpack.c.b16 %v1442, %v1440
        %v1467 = vpack.c.b16 %v1443, %v1441
        %v1468 = vpack.c.b16 %v1446, %v1444
        %v1469 = vpack.c.b16 %v1447, %v1445
        %v1470 = vpack.c.b16 %v1450, %v1448
        %v1471 = vpack.c.b16 %v1451, %v1449
        %v1472 = vpack.c.b16 %v1454, %v1452
        %v1473 = vpack.c.b16 %v1455, %v1453
        %v1474 = vpack.c.b16 %v1458, %v1456
        %v1475 = vpack.c.b16 %v1459, %v1457
        %1492 = vmatpush.bf16.msra.mxu0 %v1474
        %1493 = vmatpush.bf16.msra.mxu0 %v1472
        %1494 = vmatpush.bf16.msra.mxu0 %v1470
        %1495 = vmatpush.bf16.msra.mxu0 %v1468
        %1496 = vmatpush.bf16.msra.mxu0 %v1466
        %1497 = vmatpush.bf16.msra.mxu0 %v1464
        %1498 = vmatpush.bf16.msra.mxu0 %v1462
        %1499 = vmatpush.bf16.msra.mxu0 %v1460
        %1500 = vmatmul.bf16.gmra.mxu0 %v1389
        %v1501 = vpop.f32.mrf.mxu0
        %v1502 = vadd.f32 %v1408, %v1501
        %v1503 = vpop.f32.mrf.mxu0
        %v1504 = vadd.f32 %v1408, %v1503
        %1505 = vdwg.mxu0
        %1506 = vmatpush.bf16.msra.mxu0 %v1475
        %1507 = vmatpush.bf16.msra.mxu0 %v1473
        %1508 = vmatpush.bf16.msra.mxu0 %v1471
        %1509 = vmatpush.bf16.msra.mxu0 %v1469
        %1510 = vmatpush.bf16.msra.mxu0 %v1467
        %1511 = vmatpush.bf16.msra.mxu0 %v1465
        %1512 = vmatpush.bf16.msra.mxu0 %v1463
        %1513 = vmatpush.bf16.msra.mxu0 %v1461
        %1514 = vmatmul.bf16.gmra.mxu0 %v1389
        %v1515 = vpop.f32.mrf.mxu0
        %v1516 = vadd.f32 %v1409, %v1515
        %v1517 = vpop.f32.mrf.mxu0
        %v1518 = vadd.f32 %v1409, %v1517
        %1519 = vdwg.mxu0
        %v1520 = vmul.f32 %v1502, %v1502
        %v1521 = vmul.f32 %v1516, %v1516
        %v1522 = vmul.f32 %v1504, %v1504
        %v1523 = vmul.f32 %v1518, %v1518
        %v1524 = vmul.f32 %v1502, %v1520
        %v1525 = vmul.f32 %v1516, %v1521
        %v1526 = vmul.f32 %v1504, %v1522
        %v1527 = vmul.f32 %v1518, %v1523
        %v1528 = vmul.f32 %v1524, 0.044715
        %v1529 = vmul.f32 %v1525, 0.044715
        %v1530 = vmul.f32 %v1526, 0.044715
        %v1531 = vmul.f32 %v1527, 0.044715
        %v1532 = vadd.f32 %v1502, %v1528
        %v1533 = vadd.f32 %v1516, %v1529
        %v1534 = vadd.f32 %v1504, %v1530
        %v1535 = vadd.f32 %v1518, %v1531
        %v1536 = vmul.f32 %v1532, 0.7978846
        %v1537 = vmul.f32 %v1533, 0.7978846
        %v1538 = vmul.f32 %v1534, 0.7978846
        %v1539 = vmul.f32 %v1535, 0.7978846
        %v1540 = vtanh.pop %v1536
        %v1541 = vtanh.pop %v1537
        %v1542 = vtanh.pop %v1538
        %v1543 = vtanh.pop %v1539
        %v1544 = vadd.f32 %v1540, 1.0
        %v1545 = vadd.f32 %v1541, 1.0
        %v1546 = vadd.f32 %v1542, 1.0
        %v1547 = vadd.f32 %v1543, 1.0
        %v1548 = vmul.f32 %v1544, 0.5
        %v1549 = vmul.f32 %v1545, 0.5
        %v1550 = vmul.f32 %v1546, 0.5
        %v1551 = vmul.f32 %v1547, 0.5
        %v1552 = vmul.f32 %v1502, %v1548
        %v1553 = vmul.f32 %v1516, %v1549
        %v1554 = vmul.f32 %v1504, %v1550
        %v1555 = vmul.f32 %v1518, %v1551
        %v1556 = vpack.c.bf16 %v1554, %v1552
        %v1557 = vpack.c.bf16 %v1555, %v1553
        %v1558 = vld [vmem:[%s16] sm:$0xf]
        %v1559 = vld [vmem:[%s16 + $0x4] sm:$0xf]
        %v1560 = vld [vmem:[%s16 + $0x8] sm:$0xf]
        %v1561 = vld [vmem:[%s16 + $0xc] sm:$0xf]
        %v1562 = vld [vmem:[%s16 + $0x10] sm:$0xf]
        %v1563 = vld [vmem:[%s16 + $0x14] sm:$0xf]
        %v1564 = vld [vmem:[%s16 + $0x18] sm:$0xf]
        %v1565 = vld [vmem:[%s16 + $0x1c] sm:$0xf]
        %v1566 = vld [vmem:[%s16 + $0x20] sm:$0xf]
        %v1567 = vld [vmem:[%s16 + $0x24] sm:$0xf]
        %v1568 = vld [vmem:[%s16 + $0x28] sm:$0xf]
        %v1569 = vld [vmem:[%s16 + $0x2c] sm:$0xf]
        %v1570 = vld [vmem:[%s16 + $0x30] sm:$0xf]
        %v1571 = vld [vmem:[%s16 + $0x34] sm:$0xf]
        %v1572 = vld [vmem:[%s16 + $0x38] sm:$0xf]
        %v1573 = vld [vmem:[%s16 + $0x3c] sm:$0xf]
        %v1574 = vld [vmem:[%s16 + $0x40] sm:$0xf]
        %v1575 = vld [vmem:[%s16 + $0x44] sm:$0xf]
        %v1576 = vld [vmem:[%s16 + $0x48] sm:$0xf]
        %v1577 = vld [vmem:[%s16 + $0x4c] sm:$0xf]
        %v1578 = vld [vmem:[%s16 + $0x50] sm:$0xf]
        %v1579 = vld [vmem:[%s16 + $0x54] sm:$0xf]
        %v1580 = vld [vmem:[%s16 + $0x58] sm:$0xf]
        %v1581 = vld [vmem:[%s16 + $0x5c] sm:$0xf]
        %v1582 = vld [vmem:[%s16 + $0x60] sm:$0xf]
        %v1583 = vld [vmem:[%s16 + $0x64] sm:$0xf]
        %v1584 = vld [vmem:[%s16 + $0x68] sm:$0xf]
        %v1585 = vld [vmem:[%s16 + $0x6c] sm:$0xf]
        %v1586 = vld [vmem:[%s16 + $0x70] sm:$0xf]
        %v1587 = vld [vmem:[%s16 + $0x74] sm:$0xf]
        %v1588 = vld [vmem:[%s16 + $0x78] sm:$0xf]
        %v1589 = vld [vmem:[%s16 + $0x7c] sm:$0xf]
        %v1590 = vld [vmem:[%s17] sm:$0x1]
        %v1592 = vperm.slane %v1590, 0
        %v1626 = vunpack.c.l.b16 %v1558
        %v1627 = vunpack.c.l.b16 %v1559
        %v1628 = vunpack.c.l.b16 %v1560
        %v1629 = vunpack.c.l.b16 %v1561
        %v1630 = vunpack.c.l.b16 %v1562
        %v1631 = vunpack.c.l.b16 %v1563
        %v1632 = vunpack.c.l.b16 %v1564
        %v1633 = vunpack.c.l.b16 %v1565
        %v1634 = vunpack.c.l.b16 %v1566
        %v1635 = vunpack.c.l.b16 %v1567
        %v1636 = vunpack.c.l.b16 %v1568
        %v1637 = vunpack.c.l.b16 %v1569
        %v1638 = vunpack.c.l.b16 %v1570
        %v1639 = vunpack.c.l.b16 %v1571
        %v1640 = vunpack.c.l.b16 %v1572
        %v1641 = vunpack.c.l.b16 %v1573
        %v1642 = vunpack.c.l.b16 %v1574
        %v1643 = vunpack.c.l.b16 %v1575
        %v1644 = vunpack.c.l.b16 %v1576
        %v1645 = vunpack.c.l.b16 %v1577
        %v1646 = vunpack.c.l.b16 %v1578
        %v1647 = vunpack.c.l.b16 %v1579
        %v1648 = vunpack.c.l.b16 %v1580
        %v1649 = vunpack.c.l.b16 %v1581
        %v1650 = vunpack.c.l.b16 %v1582
        %v1651 = vunpack.c.l.b16 %v1583
        %v1652 = vunpack.c.l.b16 %v1584
        %v1653 = vunpack.c.l.b16 %v1585
        %v1654 = vunpack.c.l.b16 %v1586
        %v1655 = vunpack.c.l.b16 %v1587
        %v1656 = vunpack.c.l.b16 %v1588
        %v1657 = vunpack.c.l.b16 %v1589
        %v1658 = vpack.c.b16 %v1627, %v1626
        %v1659 = vpack.c.b16 %v1629, %v1628
        %v1660 = vpack.c.b16 %v1631, %v1630
        %v1661 = vpack.c.b16 %v1633, %v1632
        %v1662 = vpack.c.b16 %v1635, %v1634
        %v1663 = vpack.c.b16 %v1637, %v1636
        %v1664 = vpack.c.b16 %v1639, %v1638
        %v1665 = vpack.c.b16 %v1641, %v1640
        %v1666 = vpack.c.b16 %v1643, %v1642
        %v1667 = vpack.c.b16 %v1645, %v1644
        %v1668 = vpack.c.b16 %v1647, %v1646
        %v1669 = vpack.c.b16 %v1649, %v1648
        %v1670 = vpack.c.b16 %v1651, %v1650
        %v1671 = vpack.c.b16 %v1653, %v1652
        %v1672 = vpack.c.b16 %v1655, %v1654
        %v1673 = vpack.c.b16 %v1657, %v1656
        %1690 = vmatpush.bf16.msra.mxu0 %v1665
        %1691 = vmatpush.bf16.msra.mxu0 %v1664
        %1692 = vmatpush.bf16.msra.mxu0 %v1663
        %1693 = vmatpush.bf16.msra.mxu0 %v1662
        %1694 = vmatpush.bf16.msra.mxu0 %v1661
        %1695 = vmatpush.bf16.msra.mxu0 %v1660
        %1696 = vmatpush.bf16.msra.mxu0 %v1659
        %1697 = vmatpush.bf16.msra.mxu0 %v1658
        %1698 = vmatmul.bf16.gmra.mxu0 %v1556
        %v1699 = vpop.f32.mrf.mxu0
        %v1700 = vadd.f32 %v1592, %v1699
        %v1701 = vpop.f32.mrf.mxu0
        %v1702 = vadd.f32 %v1592, %v1701
        %1703 = vdwg.mxu0
        %1704 = vmatpush.bf16.msra.mxu0 %v1673
        %1705 = vmatpush.bf16.msra.mxu0 %v1672
        %1706 = vmatpush.bf16.msra.mxu0 %v1671
        %1707 = vmatpush.bf16.msra.mxu0 %v1670
        %1708 = vmatpush.bf16.msra.mxu0 %v1669
        %1709 = vmatpush.bf16.msra.mxu0 %v1668
        %1710 = vmatpush.bf16.msra.mxu0 %v1667
        %1711 = vmatpush.bf16.msra.mxu0 %v1666
        %1712 = vmatmul.bf16.gmra.mxu0 %v1557
        %v1713 = vpop.f32.mrf.mxu0
        %v1714 = vadd.f32 %v1700, %v1713
        %v1715 = vpop.f32.mrf.mxu0
        %v1716 = vadd.f32 %v1702, %v1715
        %1717 = vdwg.mxu0
        %v1718 = vadd.f32 %v1387, %v1714
        %v1719 = vadd.f32 %v1388, %v1716
        %v1720 = vld [vmem:[%s18] sm:$0x1]
        %v1721 = vld [vmem:[%s19] sm:$0x1]
        %1722 = vadd.xlane.f32.xlu0 %v1718
        %v1723 = vpop.xlane.xlu0 %1722
        %1724 = vadd.xlane.f32.xlu0 %v1719
        %v1725 = vpop.xlane.xlu0 %1724
        %v1726 = vmul.f32 %v1723, %v790
        %v1727 = vmul.f32 %v1725, %v790
        %v1728 = vsub.f32 %v1718, %v1726
        %v1729 = vsub.f32 %v1719, %v1727
        %v1730 = vmul.f32 %v1728, %v1728
        %v1731 = vmul.f32 %v1729, %v1729
        %1732 = vadd.xlane.f32.xlu0 %v1730
        %v1733 = vpop.xlane.xlu0 %1732
        %1734 = vadd.xlane.f32.xlu0 %v1731
        %v1735 = vpop.xlane.xlu0 %1734
        %v1736 = vmul.f32 %v1733, %v790
        %v1737 = vmul.f32 %v1735, %v790
        %v1738 = vadd.f32 %v1736, 1e-05
        %v1739 = vadd.f32 %v1737, 1e-05
        %v1740 = vrsqrt.pop %v1738
        %v1741 = vmul.f32 %v1740, %v1738
        %v1742 = vmul.f32 %v1741, %v1740
        %v1743 = vmul.f32 0.5, %v1742
        %v1744 = vsub.f32 1.5, %v1743
        %v1745 = vmul.f32 %v1740, %v1744
        %vm1746 = vweird.f32 %v1738
        %vm1747 = vweird.f32 %v1740
        %vm1748 = vmor %vm1746, %vm1747
        %v1749 = vsel %vm1748, %v1740, %v1745
        %v1750 = vrsqrt.pop %v1739
        %v1751 = vmul.f32 %v1750, %v1739
        %v1752 = vmul.f32 %v1751, %v1750
        %v1753 = vmul.f32 0.5, %v1752
        %v1754 = vsub.f32 1.5, %v1753
        %v1755 = vmul.f32 %v1750, %v1754
        %vm1756 = vweird.f32 %v1739
        %vm1757 = vweird.f32 %v1750
        %vm1758 = vmor %vm1756, %vm1757
        %v1759 = vsel %vm1758, %v1750, %v1755
        %v1760 = vmul.f32 %v1728, %v1749
        %v1761 = vmul.f32 %v1729, %v1759
        %v1763 = vperm.slane %v1720, 0
        %v1765 = vmul.f32 %v1760, %v1763
        %v1766 = vmul.f32 %v1761, %v1763
        %v1768 = vperm.slane %v1721, 0
        %v1770 = vadd.f32 %v1765, %v1768
        %v1771 = vadd.f32 %v1766, %v1768
        %v1772 = vpack.c.bf16 %v1771, %v1770
        %s1773 = scalar_lea.vmem [#allocation3], 64
        %v1774 = vld [vmem:[%s1773] sm:$0xf]
        %v1775 = vld [vmem:[%s1773 + $0x4] sm:$0xf]
        %v1776 = vld [vmem:[%s1773 + $0x8] sm:$0xf]
        %v1777 = vld [vmem:[%s1773 + $0xc] sm:$0xf]
        %v1778 = vld [vmem:[%s1773 + $0x10] sm:$0xf]
        %v1779 = vld [vmem:[%s1773 + $0x14] sm:$0xf]
        %v1780 = vld [vmem:[%s1773 + $0x18] sm:$0xf]
        %v1781 = vld [vmem:[%s1773 + $0x1c] sm:$0xf]
        %v1782 = vld [vmem:[%s1773 + $0x20] sm:$0xf]
        %v1783 = vld [vmem:[%s1773 + $0x24] sm:$0xf]
        %v1784 = vld [vmem:[%s1773 + $0x28] sm:$0xf]
        %v1785 = vld [vmem:[%s1773 + $0x2c] sm:$0xf]
        %v1786 = vld [vmem:[%s1773 + $0x30] sm:$0xf]
        %v1787 = vld [vmem:[%s1773 + $0x34] sm:$0xf]
        %v1788 = vld [vmem:[%s1773 + $0x38] sm:$0xf]
        %v1789 = vld [vmem:[%s1773 + $0x3c] sm:$0xf]
        %s1790 = scalar_lea.vmem %s5, 1
        %v1791 = vld [vmem:[%s1790] sm:$0x1]
        %v1793 = vperm.slane %v1791, 0
        %v1811 = vunpack.c.l.b16 %v1774
        %v1812 = vunpack.c.l.b16 %v1775
        %v1813 = vunpack.c.l.b16 %v1776
        %v1814 = vunpack.c.l.b16 %v1777
        %v1815 = vunpack.c.l.b16 %v1778
        %v1816 = vunpack.c.l.b16 %v1779
        %v1817 = vunpack.c.l.b16 %v1780
        %v1818 = vunpack.c.l.b16 %v1781
        %v1819 = vunpack.c.l.b16 %v1782
        %v1820 = vunpack.c.l.b16 %v1783
        %v1821 = vunpack.c.l.b16 %v1784
        %v1822 = vunpack.c.l.b16 %v1785
        %v1823 = vunpack.c.l.b16 %v1786
        %v1824 = vunpack.c.l.b16 %v1787
        %v1825 = vunpack.c.l.b16 %v1788
        %v1826 = vunpack.c.l.b16 %v1789
        %v1827 = vpack.c.b16 %v1812, %v1811
        %v1828 = vpack.c.b16 %v1814, %v1813
        %v1829 = vpack.c.b16 %v1816, %v1815
        %v1830 = vpack.c.b16 %v1818, %v1817
        %v1831 = vpack.c.b16 %v1820, %v1819
        %v1832 = vpack.c.b16 %v1822, %v1821
        %v1833 = vpack.c.b16 %v1824, %v1823
        %v1834 = vpack.c.b16 %v1826, %v1825
        %1843 = vmatpush.bf16.msra.mxu0 %v1834
        %1844 = vmatpush.bf16.msra.mxu0 %v1833
        %1845 = vmatpush.bf16.msra.mxu0 %v1832
        %1846 = vmatpush.bf16.msra.mxu0 %v1831
        %1847 = vmatpush.bf16.msra.mxu0 %v1830
        %1848 = vmatpush.bf16.msra.mxu0 %v1829
        %1849 = vmatpush.bf16.msra.mxu0 %v1828
        %1850 = vmatpush.bf16.msra.mxu0 %v1827
        %1851 = vmatmul.bf16.gmra.mxu0 %v1772
        %v1852 = vpop.f32.mrf.mxu0
        %v1853 = vadd.f32 %v1793, %v1852
        %v1854 = vpop.f32.mrf.mxu0
        %v1855 = vadd.f32 %v1793, %v1854
        %1856 = vdwg.mxu0
        %s1857 = scalar_lea.vmem [#allocation5], 64
        %v1858 = vld [vmem:[%s1857] sm:$0xf]
        %v1859 = vld [vmem:[%s1857 + $0x4] sm:$0xf]
        %v1860 = vld [vmem:[%s1857 + $0x8] sm:$0xf]
        %v1861 = vld [vmem:[%s1857 + $0xc] sm:$0xf]
        %v1862 = vld [vmem:[%s1857 + $0x10] sm:$0xf]
        %v1863 = vld [vmem:[%s1857 + $0x14] sm:$0xf]
        %v1864 = vld [vmem:[%s1857 + $0x18] sm:$0xf]
        %v1865 = vld [vmem:[%s1857 + $0x1c] sm:$0xf]
        %v1866 = vld [vmem:[%s1857 + $0x20] sm:$0xf]
        %v1867 = vld [vmem:[%s1857 + $0x24] sm:$0xf]
        %v1868 = vld [vmem:[%s1857 + $0x28] sm:$0xf]
        %v1869 = vld [vmem:[%s1857 + $0x2c] sm:$0xf]
        %v1870 = vld [vmem:[%s1857 + $0x30] sm:$0xf]
        %v1871 = vld [vmem:[%s1857 + $0x34] sm:$0xf]
        %v1872 = vld [vmem:[%s1857 + $0x38] sm:$0xf]
        %v1873 = vld [vmem:[%s1857 + $0x3c] sm:$0xf]
        %s1874 = scalar_lea.vmem %s7, 1
        %v1875 = vld [vmem:[%s1874] sm:$0x1]
        %v1877 = vperm.slane %v1875, 0
        %v1895 = vunpack.c.l.b16 %v1858
        %v1896 = vunpack.c.l.b16 %v1859
        %v1897 = vunpack.c.l.b16 %v1860
        %v1898 = vunpack.c.l.b16 %v1861
        %v1899 = vunpack.c.l.b16 %v1862
        %v1900 = vunpack.c.l.b16 %v1863
        %v1901 = vunpack.c.l.b16 %v1864
        %v1902 = vunpack.c.l.b16 %v1865
        %v1903 = vunpack.c.l.b16 %v1866
        %v1904 = vunpack.c.l.b16 %v1867
        %v1905 = vunpack.c.l.b16 %v1868
        %v1906 = vunpack.c.l.b16 %v1869
        %v1907 = vunpack.c.l.b16 %v1870
        %v1908 = vunpack.c.l.b16 %v1871
        %v1909 = vunpack.c.l.b16 %v1872
        %v1910 = vunpack.c.l.b16 %v1873
        %v1911 = vpack.c.b16 %v1896, %v1895
        %v1912 = vpack.c.b16 %v1898, %v1897
        %v1913 = vpack.c.b16 %v1900, %v1899
        %v1914 = vpack.c.b16 %v1902, %v1901
        %v1915 = vpack.c.b16 %v1904, %v1903
        %v1916 = vpack.c.b16 %v1906, %v1905
        %v1917 = vpack.c.b16 %v1908, %v1907
        %v1918 = vpack.c.b16 %v1910, %v1909
        %1927 = vmatpush.bf16.msra.mxu0 %v1918
        %1928 = vmatpush.bf16.msra.mxu0 %v1917
        %1929 = vmatpush.bf16.msra.mxu0 %v1916
        %1930 = vmatpush.bf16.msra.mxu0 %v1915
        %1931 = vmatpush.bf16.msra.mxu0 %v1914
        %1932 = vmatpush.bf16.msra.mxu0 %v1913
        %1933 = vmatpush.bf16.msra.mxu0 %v1912
        %1934 = vmatpush.bf16.msra.mxu0 %v1911
        %1935 = vmatmul.bf16.gmra.mxu0 %v1772
        %v1936 = vpop.f32.mrf.mxu0
        %v1937 = vadd.f32 %v1877, %v1936
        %v1938 = vpop.f32.mrf.mxu0
        %v1939 = vadd.f32 %v1877, %v1938
        %1940 = vdwg.mxu0
        %s1941 = scalar_lea.vmem [#allocation7], 64
        %v1942 = vld [vmem:[%s1941] sm:$0xf]
        %v1943 = vld [vmem:[%s1941 + $0x4] sm:$0xf]
        %v1944 = vld [vmem:[%s1941 + $0x8] sm:$0xf]
        %v1945 = vld [vmem:[%s1941 + $0xc] sm:$0xf]
        %v1946 = vld [vmem:[%s1941 + $0x10] sm:$0xf]
        %v1947 = vld [vmem:[%s1941 + $0x14] sm:$0xf]
        %v1948 = vld [vmem:[%s1941 + $0x18] sm:$0xf]
        %v1949 = vld [vmem:[%s1941 + $0x1c] sm:$0xf]
        %v1950 = vld [vmem:[%s1941 + $0x20] sm:$0xf]
        %v1951 = vld [vmem:[%s1941 + $0x24] sm:$0xf]
        %v1952 = vld [vmem:[%s1941 + $0x28] sm:$0xf]
        %v1953 = vld [vmem:[%s1941 + $0x2c] sm:$0xf]
        %v1954 = vld [vmem:[%s1941 + $0x30] sm:$0xf]
        %v1955 = vld [vmem:[%s1941 + $0x34] sm:$0xf]
        %v1956 = vld [vmem:[%s1941 + $0x38] sm:$0xf]
        %v1957 = vld [vmem:[%s1941 + $0x3c] sm:$0xf]
        %s1958 = scalar_lea.vmem %s9, 1
        %v1959 = vld [vmem:[%s1958] sm:$0x1]
        %v1961 = vperm.slane %v1959, 0
        %v1979 = vunpack.c.l.b16 %v1942
        %v1980 = vunpack.c.l.b16 %v1943
        %v1981 = vunpack.c.l.b16 %v1944
        %v1982 = vunpack.c.l.b16 %v1945
        %v1983 = vunpack.c.l.b16 %v1946
        %v1984 = vunpack.c.l.b16 %v1947
        %v1985 = vunpack.c.l.b16 %v1948
        %v1986 = vunpack.c.l.b16 %v1949
        %v1987 = vunpack.c.l.b16 %v1950
        %v1988 = vunpack.c.l.b16 %v1951
        %v1989 = vunpack.c.l.b16 %v1952
        %v1990 = vunpack.c.l.b16 %v1953
        %v1991 = vunpack.c.l.b16 %v1954
        %v1992 = vunpack.c.l.b16 %v1955
        %v1993 = vunpack.c.l.b16 %v1956
        %v1994 = vunpack.c.l.b16 %v1957
        %v1995 = vpack.c.b16 %v1980, %v1979
        %v1996 = vpack.c.b16 %v1982, %v1981
        %v1997 = vpack.c.b16 %v1984, %v1983
        %v1998 = vpack.c.b16 %v1986, %v1985
        %v1999 = vpack.c.b16 %v1988, %v1987
        %v2000 = vpack.c.b16 %v1990, %v1989
        %v2001 = vpack.c.b16 %v1992, %v1991
        %v2002 = vpack.c.b16 %v1994, %v1993
        %2011 = vmatpush.bf16.msra.mxu0 %v2002
        %2012 = vmatpush.bf16.msra.mxu0 %v2001
        %2013 = vmatpush.bf16.msra.mxu0 %v2000
        %2014 = vmatpush.bf16.msra.mxu0 %v1999
        %2015 = vmatpush.bf16.msra.mxu0 %v1998
        %2016 = vmatpush.bf16.msra.mxu0 %v1997
        %2017 = vmatpush.bf16.msra.mxu0 %v1996
        %2018 = vmatpush.bf16.msra.mxu0 %v1995
        %2019 = vmatmul.bf16.gmra.mxu0 %v1772
        %v2020 = vpop.f32.mrf.mxu0
        %v2021 = vadd.f32 %v1961, %v2020
        %v2022 = vpop.f32.mrf.mxu0
        %v2023 = vadd.f32 %v1961, %v2022
        %2024 = vdwg.mxu0
        %v2025 = vmul.f32 %v1853, %v772
        %v2026 = vmul.f32 %v1855, %v772
        %v2027 = vmul.f32 %v2021, %v772
        %v2028 = vmul.f32 %v2023, %v772
        %2029 = vmatpush.xpose.msra.mxu0 0.0
        %2030 = vmatpush.xpose.msra.mxu0 0.0
        %2031 = vmatpush.xpose.msra.mxu0 0.0
        %2032 = vmatpush.xpose.msra.mxu0 0.0
        %2033 = vmatpush.xpose.msra.mxu0 0.0
        %2034 = vmatpush.xpose.msra.mxu0 0.0
        %2035 = vmatpush.xpose.msra.mxu0 0.0
        %2036 = vmatpush.xpose.msra.mxu0 0.0
        %2037 = vmatpush.xpose.msra.mxu0 0.0
        %2038 = vmatpush.xpose.msra.mxu0 0.0
        %2039 = vmatpush.xpose.msra.mxu0 0.0
        %2040 = vmatpush.xpose.msra.mxu0 0.0
        %2041 = vmatpush.xpose.msra.mxu0 0.0
        %2042 = vmatpush.xpose.msra.mxu0 0.0
        %2043 = vmatpush.xpose.msra.mxu0 %v1939
        %2044 = vmatpush.xpose.msra.mxu0 %v1937
        %2045 = vmatmul.f32.gmra.mxu0 %v2025
        %v2046 = vpop.f32.mrf.mxu0
        %v2047 = vadd.f32 0.0, %v2046
        %2048 = vmatmul.f32.gmra.mxu0 %v2026
        %v2049 = vpop.f32.mrf.mxu0
        %v2050 = vadd.f32 0.0, %v2049
        %2051 = vdwg.mxu0
        %v2052 = vmul.f32 %v2047, 0.125
        %v2053 = vmul.f32 %v2050, 0.125
        %v2054 = vadd.f32 %v2052, %v1114
        %v2055 = vadd.f32 %v2053, %v1114
        %v2056 = vsel %vm1118, %v2054, -inf
        %2057 = vmax.xlane.f32.xlu0 %v2056
        %v2058 = vpop.xlane.xlu0 %2057
        %v2059 = vsel %vm1118, %v2055, -inf
        %2060 = vmax.xlane.f32.xlu0 %v2059
        %v2061 = vpop.xlane.xlu0 %2060
        %v2062 = vsub.f32 %v2054, %v2058
        %v2063 = vsub.f32 %v2055, %v2061
        %v2064 = vmul.f32 %v2062, 1.442695
        %v2065 = vpow.pop %v2064
        %v2066 = vmul.f32 %v2063, 1.442695
        %v2067 = vpow.pop %v2066
        %v2068 = vsel %vm1118, %v2065, 0.0
        %2069 = vadd.xlane.f32.xlu0 %v2068
        %v2070 = vpop.xlane.xlu0 %2069
        %v2071 = vsel %vm1118, %v2067, 0.0
        %2072 = vadd.xlane.f32.xlu0 %v2071
        %v2073 = vpop.xlane.xlu0 %2072
        %v2074 = vrcp.pop %v2070
        %v2075 = vrcp.pop %v2073
        %v2076 = vmul.f32 %v2065, %v2074
        %v2077 = vmul.f32 %v2067, %v2075
        %v2078 = vmul.f32 %v1853, %v777
        %v2079 = vmul.f32 %v1855, %v777
        %v2080 = vmul.f32 %v2021, %v777
        %v2081 = vmul.f32 %v2023, %v777
        %2082 = vmatpush.xpose.msra.mxu0 0.0
        %2083 = vmatpush.xpose.msra.mxu0 0.0
        %2084 = vmatpush.xpose.msra.mxu0 0.0
        %2085 = vmatpush.xpose.msra.mxu0 0.0
        %2086 = vmatpush.xpose.msra.mxu0 0.0
        %2087 = vmatpush.xpose.msra.mxu0 0.0
        %2088 = vmatpush.xpose.msra.mxu0 0.0
        %2089 = vmatpush.xpose.msra.mxu0 0.0
        %2090 = vmatpush.xpose.msra.mxu0 0.0
        %2091 = vmatpush.xpose.msra.mxu0 0.0
        %2092 = vmatpush.xpose.msra.mxu0 0.0
        %2093 = vmatpush.xpose.msra.mxu0 0.0
        %2094 = vmatpush.xpose.msra.mxu0 0.0
        %2095 = vmatpush.xpose.msra.mxu0 0.0
        %2096 = vmatpush.xpose.msra.mxu0 %v1939
        %2097 = vmatpush.xpose.msra.mxu0 %v1937
        %2098 = vmatmul.f32.gmra.mxu0 %v2078
        %v2099 = vpop.f32.mrf.mxu0
        %v2100 = vadd.f32 0.0, %v2099
        %2101 = vmatmul.f32.gmra.mxu0 %v2079
        %v2102 = vpop.f32.mrf.mxu0
        %v2103 = vadd.f32 0.0, %v2102
        %2104 = vdwg.mxu0
        %v2105 = vmul.f32 %v2100, 0.125
        %v2106 = vmul.f32 %v2103, 0.125
        %v2107 = vadd.f32 %v2105, %v1114
        %v2108 = vadd.f32 %v2106, %v1114
        %v2109 = vsel %vm1118, %v2107, -inf
        %2110 = vmax.xlane.f32.xlu0 %v2109
        %v2111 = vpop.xlane.xlu0 %2110
        %v2112 = vsel %vm1118, %v2108, -inf
        %2113 = vmax.xlane.f32.xlu0 %v2112
        %v2114 = vpop.xlane.xlu0 %2113
        %v2115 = vsub.f32 %v2107, %v2111
        %v2116 = vsub.f32 %v2108, %v2114
        %v2117 = vmul.f32 %v2115, 1.442695
        %v2118 = vpow.pop %v2117
        %v2119 = vmul.f32 %v2116, 1.442695
        %v2120 = vpow.pop %v2119
        %v2121 = vsel %vm1118, %v2118, 0.0
        %2122 = vadd.xlane.f32.xlu0 %v2121
        %v2123 = vpop.xlane.xlu0 %2122
        %v2124 = vsel %vm1118, %v2120, 0.0
        %2125 = vadd.xlane.f32.xlu0 %v2124
        %v2126 = vpop.xlane.xlu0 %2125
        %v2127 = vrcp.pop %v2123
        %v2128 = vrcp.pop %v2126
        %v2129 = vmul.f32 %v2118, %v2127
        %v2130 = vmul.f32 %v2120, %v2128
        %v2132 = vsel %vm1118, %v2129, 0
        %v2135 = vsel %vm1118, %v2130, 0
        %2137 = vmatpush.msra.mxu0 0.0
        %2138 = vmatpush.msra.mxu0 0.0
        %2139 = vmatpush.msra.mxu0 0.0
        %2140 = vmatpush.msra.mxu0 0.0
        %2141 = vmatpush.msra.mxu0 0.0
        %2142 = vmatpush.msra.mxu0 0.0
        %2143 = vmatpush.msra.mxu0 0.0
        %2144 = vmatpush.msra.mxu0 0.0
        %2145 = vmatpush.msra.mxu0 0.0
        %2146 = vmatpush.msra.mxu0 0.0
        %2147 = vmatpush.msra.mxu0 0.0
        %2148 = vmatpush.msra.mxu0 0.0
        %2149 = vmatpush.msra.mxu0 0.0
        %2150 = vmatpush.msra.mxu0 0.0
        %2151 = vmatpush.msra.mxu0 %v2081
        %2152 = vmatpush.msra.mxu0 %v2080
        %2153 = vmatmul.f32.gmra.mxu0 %v2132
        %v2154 = vpop.f32.mrf.mxu0
        %v2155 = vadd.f32 0.0, %v2154
        %2156 = vmatmul.f32.gmra.mxu0 %v2135
        %v2157 = vpop.f32.mrf.mxu0
        %v2158 = vadd.f32 0.0, %v2157
        %2159 = vdwg.mxu0
        %v2161 = vsel %vm1118, %v2076, 0
        %v2164 = vsel %vm1118, %v2077, 0
        %2166 = vmatpush.msra.mxu0 0.0
        %2167 = vmatpush.msra.mxu0 0.0
        %2168 = vmatpush.msra.mxu0 0.0
        %2169 = vmatpush.msra.mxu0 0.0
        %2170 = vmatpush.msra.mxu0 0.0
        %2171 = vmatpush.msra.mxu0 0.0
        %2172 = vmatpush.msra.mxu0 0.0
        %2173 = vmatpush.msra.mxu0 0.0
        %2174 = vmatpush.msra.mxu0 0.0
        %2175 = vmatpush.msra.mxu0 0.0
        %2176 = vmatpush.msra.mxu0 0.0
        %2177 = vmatpush.msra.mxu0 0.0
        %2178 = vmatpush.msra.mxu0 0.0
        %2179 = vmatpush.msra.mxu0 0.0
        %2180 = vmatpush.msra.mxu0 %v2028
        %2181 = vmatpush.msra.mxu0 %v2027
        %2182 = vmatmul.f32.gmra.mxu0 %v2161
        %v2183 = vpop.f32.mrf.mxu0
        %v2184 = vadd.f32 %v2155, %v2183
        %2185 = vmatmul.f32.gmra.mxu0 %v2164
        %v2186 = vpop.f32.mrf.mxu0
        %v2187 = vadd.f32 %v2158, %v2186
        %2188 = vdwg.mxu0
        %v2189 = vpack.c.bf16 %v2187, %v2184
        %s2190 = scalar_lea.vmem [#allocation8], 64
        %v2191 = vld [vmem:[%s2190] sm:$0xf]
        %v2192 = vld [vmem:[%s2190 + $0x4] sm:$0xf]
        %v2193 = vld [vmem:[%s2190 + $0x8] sm:$0xf]
        %v2194 = vld [vmem:[%s2190 + $0xc] sm:$0xf]
        %v2195 = vld [vmem:[%s2190 + $0x10] sm:$0xf]
        %v2196 = vld [vmem:[%s2190 + $0x14] sm:$0xf]
        %v2197 = vld [vmem:[%s2190 + $0x18] sm:$0xf]
        %v2198 = vld [vmem:[%s2190 + $0x1c] sm:$0xf]
        %v2199 = vld [vmem:[%s2190 + $0x20] sm:$0xf]
        %v2200 = vld [vmem:[%s2190 + $0x24] sm:$0xf]
        %v2201 = vld [vmem:[%s2190 + $0x28] sm:$0xf]
        %v2202 = vld [vmem:[%s2190 + $0x2c] sm:$0xf]
        %v2203 = vld [vmem:[%s2190 + $0x30] sm:$0xf]
        %v2204 = vld [vmem:[%s2190 + $0x34] sm:$0xf]
        %v2205 = vld [vmem:[%s2190 + $0x38] sm:$0xf]
        %v2206 = vld [vmem:[%s2190 + $0x3c] sm:$0xf]
        %s2207 = scalar_lea.vmem %s11, 1
        %v2208 = vld [vmem:[%s2207] sm:$0x1]
        %v2210 = vperm.slane %v2208, 0
        %v2228 = vunpack.c.l.b16 %v2191
        %v2229 = vunpack.c.l.b16 %v2192
        %v2230 = vunpack.c.l.b16 %v2193
        %v2231 = vunpack.c.l.b16 %v2194
        %v2232 = vunpack.c.l.b16 %v2195
        %v2233 = vunpack.c.l.b16 %v2196
        %v2234 = vunpack.c.l.b16 %v2197
        %v2235 = vunpack.c.l.b16 %v2198
        %v2236 = vunpack.c.l.b16 %v2199
        %v2237 = vunpack.c.l.b16 %v2200
        %v2238 = vunpack.c.l.b16 %v2201
        %v2239 = vunpack.c.l.b16 %v2202
        %v2240 = vunpack.c.l.b16 %v2203
        %v2241 = vunpack.c.l.b16 %v2204
        %v2242 = vunpack.c.l.b16 %v2205
        %v2243 = vunpack.c.l.b16 %v2206
        %v2244 = vpack.c.b16 %v2229, %v2228
        %v2245 = vpack.c.b16 %v2231, %v2230
        %v2246 = vpack.c.b16 %v2233, %v2232
        %v2247 = vpack.c.b16 %v2235, %v2234
        %v2248 = vpack.c.b16 %v2237, %v2236
        %v2249 = vpack.c.b16 %v2239, %v2238
        %v2250 = vpack.c.b16 %v2241, %v2240
        %v2251 = vpack.c.b16 %v2243, %v2242
        %2260 = vmatpush.bf16.msra.mxu0 %v2251
        %2261 = vmatpush.bf16.msra.mxu0 %v2250
        %2262 = vmatpush.bf16.msra.mxu0 %v2249
        %2263 = vmatpush.bf16.msra.mxu0 %v2248
        %2264 = vmatpush.bf16.msra.mxu0 %v2247
        %2265 = vmatpush.bf16.msra.mxu0 %v2246
        %2266 = vmatpush.bf16.msra.mxu0 %v2245
        %2267 = vmatpush.bf16.msra.mxu0 %v2244
        %2268 = vmatmul.bf16.gmra.mxu0 %v2189
        %v2269 = vpop.f32.mrf.mxu0
        %v2270 = vadd.f32 %v2210, %v2269
        %v2271 = vpop.f32.mrf.mxu0
        %v2272 = vadd.f32 %v2210, %v2271
        %2273 = vdwg.mxu0
        %v2274 = vadd.f32 %v1770, %v2270
        %v2275 = vadd.f32 %v1771, %v2272
        %s2276 = scalar_lea.vmem %s12, 1
        %v2277 = vld [vmem:[%s2276] sm:$0x1]
        %s2278 = scalar_lea.vmem %s13, 1
        %v2279 = vld [vmem:[%s2278] sm:$0x1]
        %2280 = vadd.xlane.f32.xlu0 %v2274
        %v2281 = vpop.xlane.xlu0 %2280
        %2282 = vadd.xlane.f32.xlu0 %v2275
        %v2283 = vpop.xlane.xlu0 %2282
        %v2284 = vmul.f32 %v2281, %v790
        %v2285 = vmul.f32 %v2283, %v790
        %v2286 = vsub.f32 %v2274, %v2284
        %v2287 = vsub.f32 %v2275, %v2285
        %v2288 = vmul.f32 %v2286, %v2286
        %v2289 = vmul.f32 %v2287, %v2287
        %2290 = vadd.xlane.f32.xlu0 %v2288
        %v2291 = vpop.xlane.xlu0 %2290
        %2292 = vadd.xlane.f32.xlu0 %v2289
        %v2293 = vpop.xlane.xlu0 %2292
        %v2294 = vmul.f32 %v2291, %v790
        %v2295 = vmul.f32 %v2293, %v790
        %v2296 = vadd.f32 %v2294, 1e-05
        %v2297 = vadd.f32 %v2295, 1e-05
        %v2298 = vrsqrt.pop %v2296
        %v2299 = vmul.f32 %v2298, %v2296
        %v2300 = vmul.f32 %v2299, %v2298
        %v2301 = vmul.f32 0.5, %v2300
        %v2302 = vsub.f32 1.5, %v2301
        %v2303 = vmul.f32 %v2298, %v2302
        %vm2304 = vweird.f32 %v2296
        %vm2305 = vweird.f32 %v2298
        %vm2306 = vmor %vm2304, %vm2305
        %v2307 = vsel %vm2306, %v2298, %v2303
        %v2308 = vrsqrt.pop %v2297
        %v2309 = vmul.f32 %v2308, %v2297
        %v2310 = vmul.f32 %v2309, %v2308
        %v2311 = vmul.f32 0.5, %v2310
        %v2312 = vsub.f32 1.5, %v2311
        %v2313 = vmul.f32 %v2308, %v2312
        %vm2314 = vweird.f32 %v2297
        %vm2315 = vweird.f32 %v2308
        %vm2316 = vmor %vm2314, %vm2315
        %v2317 = vsel %vm2316, %v2308, %v2313
        %v2318 = vmul.f32 %v2286, %v2307
        %v2319 = vmul.f32 %v2287, %v2317
        %v2321 = vperm.slane %v2277, 0
        %v2323 = vmul.f32 %v2318, %v2321
        %v2324 = vmul.f32 %v2319, %v2321
        %v2326 = vperm.slane %v2279, 0
        %v2328 = vadd.f32 %v2323, %v2326
        %v2329 = vadd.f32 %v2324, %v2326
        %v2330 = vpack.c.bf16 %v2329, %v2328
        %s2331 = scalar_lea.vmem %s14, 128
        %v2332 = vld [vmem:[%s2331] sm:$0xff]
        %v2333 = vld [vmem:[%s2331 + $0x8] sm:$0xff]
        %v2334 = vld [vmem:[%s2331 + $0x10] sm:$0xff]
        %v2335 = vld [vmem:[%s2331 + $0x18] sm:$0xff]
        %v2336 = vld [vmem:[%s2331 + $0x20] sm:$0xff]
        %v2337 = vld [vmem:[%s2331 + $0x28] sm:$0xff]
        %v2338 = vld [vmem:[%s2331 + $0x30] sm:$0xff]
        %v2339 = vld [vmem:[%s2331 + $0x38] sm:$0xff]
        %v2340 = vld [vmem:[%s2331 + $0x40] sm:$0xff]
        %v2341 = vld [vmem:[%s2331 + $0x48] sm:$0xff]
        %v2342 = vld [vmem:[%s2331 + $0x50] sm:$0xff]
        %v2343 = vld [vmem:[%s2331 + $0x58] sm:$0xff]
        %v2344 = vld [vmem:[%s2331 + $0x60] sm:$0xff]
        %v2345 = vld [vmem:[%s2331 + $0x68] sm:$0xff]
        %v2346 = vld [vmem:[%s2331 + $0x70] sm:$0xff]
        %v2347 = vld [vmem:[%s2331 + $0x78] sm:$0xff]
        %s2348 = scalar_lea.vmem %s15, 2
        %v2349 = vld [vmem:[%s2348] sm:$0x3]
        %v2351 = vperm.slane %v2349, 0
        %v2352 = vperm.slane %v2349, 1
        %v2371 = vunpack.c.l.b16 %v2332
        %v2372 = vunpack.c.h.b16 %v2332
        %v2373 = vunpack.c.l.b16 %v2333
        %v2374 = vunpack.c.h.b16 %v2333
        %v2375 = vunpack.c.l.b16 %v2334
        %v2376 = vunpack.c.h.b16 %v2334
        %v2377 = vunpack.c.l.b16 %v2335
        %v2378 = vunpack.c.h.b16 %v2335
        %v2379 = vunpack.c.l.b16 %v2336
        %v2380 = vunpack.c.h.b16 %v2336
        %v2381 = vunpack.c.l.b16 %v2337
        %v2382 = vunpack.c.h.b16 %v2337
        %v2383 = vunpack.c.l.b16 %v2338
        %v2384 = vunpack.c.h.b16 %v2338
        %v2385 = vunpack.c.l.b16 %v2339
        %v2386 = vunpack.c.h.b16 %v2339
        %v2387 = vunpack.c.l.b16 %v2340
        %v2388 = vunpack.c.h.b16 %v2340
        %v2389 = vunpack.c.l.b16 %v2341
        %v2390 = vunpack.c.h.b16 %v2341
        %v2391 = vunpack.c.l.b16 %v2342
        %v2392 = vunpack.c.h.b16 %v2342
        %v2393 = vunpack.c.l.b16 %v2343
        %v2394 = vunpack.c.h.b16 %v2343
        %v2395 = vunpack.c.l.b16 %v2344
        %v2396 = vunpack.c.h.b16 %v2344
        %v2397 = vunpack.c.l.b16 %v2345
        %v2398 = vunpack.c.h.b16 %v2345
        %v2399 = vunpack.c.l.b16 %v2346
        %v2400 = vunpack.c.h.b16 %v2346
        %v2401 = vunpack.c.l.b16 %v2347
        %v2402 = vunpack.c.h.b16 %v2347
        %v2403 = vpack.c.b16 %v2373, %v2371
        %v2404 = vpack.c.b16 %v2374, %v2372
        %v2405 = vpack.c.b16 %v2377, %v2375
        %v2406 = vpack.c.b16 %v2378, %v2376
        %v2407 = vpack.c.b16 %v2381, %v2379
        %v2408 = vpack.c.b16 %v2382, %v2380
        %v2409 = vpack.c.b16 %v2385, %v2383
        %v2410 = vpack.c.b16 %v2386, %v2384
        %v2411 = vpack.c.b16 %v2389, %v2387
        %v2412 = vpack.c.b16 %v2390, %v2388
        %v2413 = vpack.c.b16 %v2393, %v2391
        %v2414 = vpack.c.b16 %v2394, %v2392
        %v2415 = vpack.c.b16 %v2397, %v2395
        %v2416 = vpack.c.b16 %v2398, %v2396
        %v2417 = vpack.c.b16 %v2401, %v2399
        %v2418 = vpack.c.b16 %v2402, %v2400
        %2435 = vmatpush.bf16.msra.mxu0 %v2417
        %2436 = vmatpush.bf16.msra.mxu0 %v2415
        %2437 = vmatpush.bf16.msra.mxu0 %v2413
        %2438 = vmatpush.bf16.msra.mxu0 %v2411
        %2439 = vmatpush.bf16.msra.mxu0 %v2409
        %2440 = vmatpush.bf16.msra.mxu0 %v2407
        %2441 = vmatpush.bf16.msra.mxu0 %v2405
        %2442 = vmatpush.bf16.msra.mxu0 %v2403
        %2443 = vmatmul.bf16.gmra.mxu0 %v2330
        %v2444 = vpop.f32.mrf.mxu0
        %v2445 = vadd.f32 %v2351, %v2444
        %v2446 = vpop.f32.mrf.mxu0
        %v2447 = vadd.f32 %v2351, %v2446
        %2448 = vdwg.mxu0
        %2449 = vmatpush.bf16.msra.mxu0 %v2418
        %2450 = vmatpush.bf16.msra.mxu0 %v2416
        %2451 = vmatpush.bf16.msra.mxu0 %v2414
        %2452 = vmatpush.bf16.msra.mxu0 %v2412
        %2453 = vmatpush.bf16.msra.mxu0 %v2410
        %2454 = vmatpush.bf16.msra.mxu0 %v2408
        %2455 = vmatpush.bf16.msra.mxu0 %v2406
        %2456 = vmatpush.bf16.msra.mxu0 %v2404
        %2457 = vmatmul.bf16.gmra.mxu0 %v2330
        %v2458 = vpop.f32.mrf.mxu0
        %v2459 = vadd.f32 %v2352, %v2458
        %v2460 = vpop.f32.mrf.mxu0
        %v2461 = vadd.f32 %v2352, %v2460
        %2462 = vdwg.mxu0
        %v2463 = vmul.f32 %v2445, %v2445
        %v2464 = vmul.f32 %v2459, %v2459
        %v2465 = vmul.f32 %v2447, %v2447
        %v2466 = vmul.f32 %v2461, %v2461
        %v2467 = vmul.f32 %v2445, %v2463
        %v2468 = vmul.f32 %v2459, %v2464
        %v2469 = vmul.f32 %v2447, %v2465
        %v2470 = vmul.f32 %v2461, %v2466
        %v2471 = vmul.f32 %v2467, 0.044715
        %v2472 = vmul.f32 %v2468, 0.044715
        %v2473 = vmul.f32 %v2469, 0.044715
        %v2474 = vmul.f32 %v2470, 0.044715
        %v2475 = vadd.f32 %v2445, %v2471
        %v2476 = vadd.f32 %v2459, %v2472
        %v2477 = vadd.f32 %v2447, %v2473
        %v2478 = vadd.f32 %v2461, %v2474
        %v2479 = vmul.f32 %v2475, 0.7978846
        %v2480 = vmul.f32 %v2476, 0.7978846
        %v2481 = vmul.f32 %v2477, 0.7978846
        %v2482 = vmul.f32 %v2478, 0.7978846
        %v2483 = vtanh.pop %v2479
        %v2484 = vtanh.pop %v2480
        %v2485 = vtanh.pop %v2481
        %v2486 = vtanh.pop %v2482
        %v2487 = vadd.f32 %v2483, 1.0
        %v2488 = vadd.f32 %v2484, 1.0
        %v2489 = vadd.f32 %v2485, 1.0
        %v2490 = vadd.f32 %v2486, 1.0
        %v2491 = vmul.f32 %v2487, 0.5
        %v2492 = vmul.f32 %v2488, 0.5
        %v2493 = vmul.f32 %v2489, 0.5
        %v2494 = vmul.f32 %v2490, 0.5
        %v2495 = vmul.f32 %v2445, %v2491
        %v2496 = vmul.f32 %v2459, %v2492
        %v2497 = vmul.f32 %v2447, %v2493
        %v2498 = vmul.f32 %v2461, %v2494
        %v2499 = vpack.c.bf16 %v2497, %v2495
        %v2500 = vpack.c.bf16 %v2498, %v2496
        %s2501 = scalar_lea.vmem %s16, 128
        %v2502 = vld [vmem:[%s2501] sm:$0xf]
        %v2503 = vld [vmem:[%s2501 + $0x4] sm:$0xf]
        %v2504 = vld [vmem:[%s2501 + $0x8] sm:$0xf]
        %v2505 = vld [vmem:[%s2501 + $0xc] sm:$0xf]
        %v2506 = vld [vmem:[%s2501 + $0x10] sm:$0xf]
        %v2507 = vld [vmem:[%s2501 + $0x14] sm:$0xf]
        %v2508 = vld [vmem:[%s2501 + $0x18] sm:$0xf]
        %v2509 = vld [vmem:[%s2501 + $0x1c] sm:$0xf]
        %v2510 = vld [vmem:[%s2501 + $0x20] sm:$0xf]
        %v2511 = vld [vmem:[%s2501 + $0x24] sm:$0xf]
        %v2512 = vld [vmem:[%s2501 + $0x28] sm:$0xf]
        %v2513 = vld [vmem:[%s2501 + $0x2c] sm:$0xf]
        %v2514 = vld [vmem:[%s2501 + $0x30] sm:$0xf]
        %v2515 = vld [vmem:[%s2501 + $0x34] sm:$0xf]
        %v2516 = vld [vmem:[%s2501 + $0x38] sm:$0xf]
        %v2517 = vld [vmem:[%s2501 + $0x3c] sm:$0xf]
        %v2518 = vld [vmem:[%s2501 + $0x40] sm:$0xf]
        %v2519 = vld [vmem:[%s2501 + $0x44] sm:$0xf]
        %v2520 = vld [vmem:[%s2501 + $0x48] sm:$0xf]
        %v2521 = vld [vmem:[%s2501 + $0x4c] sm:$0xf]
        %v2522 = vld [vmem:[%s2501 + $0x50] sm:$0xf]
        %v2523 = vld [vmem:[%s2501 + $0x54] sm:$0xf]
        %v2524 = vld [vmem:[%s2501 + $0x58] sm:$0xf]
        %v2525 = vld [vmem:[%s2501 + $0x5c] sm:$0xf]
        %v2526 = vld [vmem:[%s2501 + $0x60] sm:$0xf]
        %v2527 = vld [vmem:[%s2501 + $0x64] sm:$0xf]
        %v2528 = vld [vmem:[%s2501 + $0x68] sm:$0xf]
        %v2529 = vld [vmem:[%s2501 + $0x6c] sm:$0xf]
        %v2530 = vld [vmem:[%s2501 + $0x70] sm:$0xf]
        %v2531 = vld [vmem:[%s2501 + $0x74] sm:$0xf]
        %v2532 = vld [vmem:[%s2501 + $0x78] sm:$0xf]
        %v2533 = vld [vmem:[%s2501 + $0x7c] sm:$0xf]
        %s2534 = scalar_lea.vmem %s17, 1
        %v2535 = vld [vmem:[%s2534] sm:$0x1]
        %v2537 = vperm.slane %v2535, 0
        %v2571 = vunpack.c.l.b16 %v2502
        %v2572 = vunpack.c.l.b16 %v2503
        %v2573 = vunpack.c.l.b16 %v2504
        %v2574 = vunpack.c.l.b16 %v2505
        %v2575 = vunpack.c.l.b16 %v2506
        %v2576 = vunpack.c.l.b16 %v2507
        %v2577 = vunpack.c.l.b16 %v2508
        %v2578 = vunpack.c.l.b16 %v2509
        %v2579 = vunpack.c.l.b16 %v2510
        %v2580 = vunpack.c.l.b16 %v2511
        %v2581 = vunpack.c.l.b16 %v2512
        %v2582 = vunpack.c.l.b16 %v2513
        %v2583 = vunpack.c.l.b16 %v2514
        %v2584 = vunpack.c.l.b16 %v2515
        %v2585 = vunpack.c.l.b16 %v2516
        %v2586 = vunpack.c.l.b16 %v2517
        %v2587 = vunpack.c.l.b16 %v2518
        %v2588 = vunpack.c.l.b16 %v2519
        %v2589 = vunpack.c.l.b16 %v2520
        %v2590 = vunpack.c.l.b16 %v2521
        %v2591 = vunpack.c.l.b16 %v2522
        %v2592 = vunpack.c.l.b16 %v2523
        %v2593 = vunpack.c.l.b16 %v2524
        %v2594 = vunpack.c.l.b16 %v2525
        %v2595 = vunpack.c.l.b16 %v2526
        %v2596 = vunpack.c.l.b16 %v2527
        %v2597 = vunpack.c.l.b16 %v2528
        %v2598 = vunpack.c.l.b16 %v2529
        %v2599 = vunpack.c.l.b16 %v2530
        %v2600 = vunpack.c.l.b16 %v2531
        %v2601 = vunpack.c.l.b16 %v2532
        %v2602 = vunpack.c.l.b16 %v2533
        %v2603 = vpack.c.b16 %v2572, %v2571
        %v2604 = vpack.c.b16 %v2574, %v2573
        %v2605 = vpack.c.b16 %v2576, %v2575
        %v2606 = vpack.c.b16 %v2578, %v2577
        %v2607 = vpack.c.b16 %v2580, %v2579
        %v2608 = vpack.c.b16 %v2582, %v2581
        %v2609 = vpack.c.b16 %v2584, %v2583
        %v2610 = vpack.c.b16 %v2586, %v2585
        %v2611 = vpack.c.b16 %v2588, %v2587
        %v2612 = vpack.c.b16 %v2590, %v2589
        %v2613 = vpack.c.b16 %v2592, %v2591
        %v2614 = vpack.c.b16 %v2594, %v2593
        %v2615 = vpack.c.b16 %v2596, %v2595
        %v2616 = vpack.c.b16 %v2598, %v2597
        %v2617 = vpack.c.b16 %v2600, %v2599
        %v2618 = vpack.c.b16 %v2602, %v2601
        %2635 = vmatpush.bf16.msra.mxu0 %v2610
        %2636 = vmatpush.bf16.msra.mxu0 %v2609
        %2637 = vmatpush.bf16.msra.mxu0 %v2608
        %2638 = vmatpush.bf16.msra.mxu0 %v2607
        %2639 = vmatpush.bf16.msra.mxu0 %v2606
        %2640 = vmatpush.bf16.msra.mxu0 %v2605
        %2641 = vmatpush.bf16.msra.mxu0 %v2604
        %2642 = vmatpush.bf16.msra.mxu0 %v2603
        %2643 = vmatmul.bf16.gmra.mxu0 %v2499
        %v2644 = vpop.f32.mrf.mxu0
        %v2645 = vadd.f32 %v2537, %v2644
        %v2646 = vpop.f32.mrf.mxu0
        %v2647 = vadd.f32 %v2537, %v2646
        %2648 = vdwg.mxu0
        %2649 = vmatpush.bf16.msra.mxu0 %v2618
        %2650 = vmatpush.bf16.msra.mxu0 %v2617
        %2651 = vmatpush.bf16.msra.mxu0 %v2616
        %2652 = vmatpush.bf16.msra.mxu0 %v2615
        %2653 = vmatpush.bf16.msra.mxu0 %v2614
        %2654 = vmatpush.bf16.msra.mxu0 %v2613
        %2655 = vmatpush.bf16.msra.mxu0 %v2612
        %2656 = vmatpush.bf16.msra.mxu0 %v2611
        %2657 = vmatmul.bf16.gmra.mxu0 %v2500
        %v2658 = vpop.f32.mrf.mxu0
        %v2659 = vadd.f32 %v2645, %v2658
        %v2660 = vpop.f32.mrf.mxu0
        %v2661 = vadd.f32 %v2647, %v2660
        %2662 = vdwg.mxu0
        %v2663 = vadd.f32 %v2328, %v2659
        %v2664 = vadd.f32 %v2329, %v2661
        %s2665 = scalar_lea.vmem %s18, 1
        %v2666 = vld [vmem:[%s2665] sm:$0x1]
        %s2667 = scalar_lea.vmem %s19, 1
        %v2668 = vld [vmem:[%s2667] sm:$0x1]
        %2669 = vadd.xlane.f32.xlu0 %v2663
        %v2670 = vpop.xlane.xlu0 %2669
        %2671 = vadd.xlane.f32.xlu0 %v2664
        %v2672 = vpop.xlane.xlu0 %2671
        %v2673 = vmul.f32 %v2670, %v790
        %v2674 = vmul.f32 %v2672, %v790
        %v2675 = vsub.f32 %v2663, %v2673
        %v2676 = vsub.f32 %v2664, %v2674
        %v2677 = vmul.f32 %v2675, %v2675
        %v2678 = vmul.f32 %v2676, %v2676
        %2679 = vadd.xlane.f32.xlu0 %v2677
        %v2680 = vpop.xlane.xlu0 %2679
        %2681 = vadd.xlane.f32.xlu0 %v2678
        %v2682 = vpop.xlane.xlu0 %2681
        %v2683 = vmul.f32 %v2680, %v790
        %v2684 = vmul.f32 %v2682, %v790
        %v2685 = vadd.f32 %v2683, 1e-05
        %v2686 = vadd.f32 %v2684, 1e-05
        %v2687 = vrsqrt.pop %v2685
        %v2688 = vmul.f32 %v2687, %v2685
        %v2689 = vmul.f32 %v2688, %v2687
        %v2690 = vmul.f32 0.5, %v2689
        %v2691 = vsub.f32 1.5, %v2690
        %v2692 = vmul.f32 %v2687, %v2691
        %vm2693 = vweird.f32 %v2685
        %vm2694 = vweird.f32 %v2687
        %vm2695 = vmor %vm2693, %vm2694
        %v2696 = vsel %vm2695, %v2687, %v2692
        %v2697 = vrsqrt.pop %v2686
        %v2698 = vmul.f32 %v2697, %v2686
        %v2699 = vmul.f32 %v2698, %v2697
        %v2700 = vmul.f32 0.5, %v2699
        %v2701 = vsub.f32 1.5, %v2700
        %v2702 = vmul.f32 %v2697, %v2701
        %vm2703 = vweird.f32 %v2686
        %vm2704 = vweird.f32 %v2697
        %vm2705 = vmor %vm2703, %vm2704
        %v2706 = vsel %vm2705, %v2697, %v2702
        %v2707 = vmul.f32 %v2675, %v2696
        %v2708 = vmul.f32 %v2676, %v2706
        %v2710 = vperm.slane %v2666, 0
        %v2712 = vmul.f32 %v2707, %v2710
        %v2713 = vmul.f32 %v2708, %v2710
        %v2715 = vperm.slane %v2668, 0
        %v2717 = vadd.f32 %v2712, %v2715
        %v2718 = vadd.f32 %v2713, %v2715
        %v2719 = vld [vmem:[%s20] sm:$0x1]
        %v2720 = vld [vmem:[#allocation2] sm:$0x1]
        %2722 = vset.pattern.permute.xlu0 0
        %2723 = vperm.xlu0 %2722, %v2720
        %v2724 = vpop.permute.xlu0 %2723
        %v2726 = vperm.slane %v2724, 0
        %2727 = vmatpush.xpose.msra.mxu0 0.0
        %2728 = vmatpush.xpose.msra.mxu0 0.0
        %2729 = vmatpush.xpose.msra.mxu0 0.0
        %2730 = vmatpush.xpose.msra.mxu0 0.0
        %2731 = vmatpush.xpose.msra.mxu0 0.0
        %2732 = vmatpush.xpose.msra.mxu0 0.0
        %2733 = vmatpush.xpose.msra.mxu0 0.0
        %2734 = vmatpush.xpose.msra.mxu0 0.0
        %2735 = vmatpush.xpose.msra.mxu0 0.0
        %2736 = vmatpush.xpose.msra.mxu0 0.0
        %2737 = vmatpush.xpose.msra.mxu0 0.0
        %2738 = vmatpush.xpose.msra.mxu0 0.0
        %2739 = vmatpush.xpose.msra.mxu0 0.0
        %2740 = vmatpush.xpose.msra.mxu0 0.0
        %2741 = vmatpush.xpose.msra.mxu0 %v2718
        %2742 = vmatpush.xpose.msra.mxu0 %v2717
        %2743 = vmatmul.f32.gmra.mxu0 %v2719
        %v2744 = vpop.f32.mrf.mxu0
        %v2745 = vadd.f32 %v2726, %v2744
        %2746 = vdwg.mxu0
        %vm2747 = vcmask 122880
        %2748 = vst.msk [vmem:[%s762] sm:$0x1] %vm2747, %v2745
        %p2749 = scmp.lt.s32.totalorder %s38, 1
        %s2750 = scalar_select %p2749, %s38, 1
        %s2751 = scalar_lea.vmem %s22, %s2750
        // Predicated region
        $region125: #{roberta_denoiser_forward.1} parent=107 // pred_check
          %p2752 = pneg %p528
        $region126: #{roberta_denoiser_forward.1} parent=107 // pred_check_branch
          %2754 = sbr.rel (%p2752) target = $region128
        $region127: #{roberta_denoiser_forward.1} parent=107 // pred_region
          _
        $region128: #{roberta_denoiser_forward.1} parent=107 // pred_fallthru
          _
      $region108: #{roberta_denoiser_forward.1} parent=5 // pred_fallthru
        _
      %p2755 = scmp.le.s32.totalorder 2, %s33
      // Predicated region
      $region129: #{roberta_denoiser_forward.1} parent=5 // pred_check
        %p2756 = pneg %p2755
      $region130: #{roberta_denoiser_forward.1} parent=5 // pred_check_branch
        %2758 = sbr.rel (%p2756) target = $region132
      $region131: #{roberta_denoiser_forward.1} parent=5 // pred_region
        %s2759 = ssub.s32 %s33, 2
        // Predicated region
        $region133: #{roberta_denoiser_forward.1} parent=131 // pred_check
          %p2760 = pneg %p534
        $region134: #{roberta_denoiser_forward.1} parent=131 // pred_check_branch
          %2762 = sbr.rel (%p2760) target = $region136
        $region135: #{roberta_denoiser_forward.1} parent=131 // pred_region
          %p2763 = scmp.lt.s32.totalorder %s39, 1
          %s2764 = scalar_select %p2763, %s39, 1
          %s2765 = scalar_lea.vmem %s22, %s2764
        $region136: #{roberta_denoiser_forward.1} parent=131 // pred_fallthru
          _
      $region132: #{roberta_denoiser_forward.1} parent=5 // pred_fallthru
        _
    $region6: #{roberta_denoiser_forward.1} parent=1 // loop_footer
      %s37 = sadd.s32 1, %s33
    $region7: #{roberta_denoiser_forward.1} parent=1 // loop_footer_branch
      %32 = sbr.rel target = $region3
    $region8: #{roberta_denoiser_forward.1} parent=1 // loop_exit
      _
    %2766 = vsyncpa [#allocation4], 1
    %s2767 = scalar_lea.sflag [#allocation4], 1
    %2768 = vsyncpa %s2767, 1
    %2769 = vsyncpa [#allocation6], 1
    %2770 = vsyncpa [#allocation9], 1

</llo_original>
